<compile_context>
chip_gen: v6e
topology: v6e:2x2x1
jax: 0.10.0
libtpu: 0.0.40
codegen_flags: <defaults>
</compile_context>

<pallas_src>
import functools

import jax
import jax.numpy as jnp
from jax.experimental import pallas as pl
from jax.experimental.pallas import tpu as pltpu

LN_EPS = 1e-5  # PyTorch nn.LayerNorm default


def _round_up(n, m):
    return ((n + m - 1) // m) * m


def _vmem_capacity_bytes():
    """Physical VMEM per TensorCore; conservative 64 MiB (v7x) if the query fails."""
    try:
        cap = getattr(pltpu.get_tpu_info(), "vmem_capacity_bytes", None)
        if cap:
            return int(cap)
    except Exception:
        pass
    return 64 * 1024 * 1024


def _layernorm(h, gamma, beta, n_true):
    """PyTorch LayerNorm (biased variance, eps=1e-5) over the last (possibly padded) axis.

    Padded lanes of `h` are exactly zero by construction (zero-padded weight columns / biases),
    so plain sums over the padded width equal sums over the true width -- no iota/mask needed.
    Padded gamma/beta are zero, so padded output lanes stay exactly zero.
    """
    inv_n = 1.0 / float(n_true)
    mean = jnp.sum(h, axis=-1, keepdims=True) * inv_n
    var = jnp.sum(h * h, axis=-1, keepdims=True) * inv_n - mean * mean
    inv = jax.lax.rsqrt(var + LN_EPS)
    return (h - mean) * inv * gamma + beta


# ---------------------------------------------------------------------------
# Fused path: both weights VMEM-resident, batch streamed in tiles.
# ---------------------------------------------------------------------------
def _fused_kernel(x_ref, w1_ref, v1_ref, w2_ref, v2_ref, o_ref, *, h_true, d_true):
    x = x_ref[...].astype(jnp.float32)            # f32 kept for residual add

    # Linear 1 (bf16 MXU operands, f32 accumulation) + LayerNorm 1 + ReLU.
    h = jnp.dot(x.astype(jnp.bfloat16), w1_ref[...], preferred_element_type=jnp.float32)
    v1 = v1_ref[...]
    h = _layernorm(h + v1[0:1, :], v1[1:2, :], v1[2:3, :], h_true)
    hb = jnp.maximum(h, 0.0).astype(jnp.bfloat16)  # fused ReLU + downcast; f32 h dies here
    # Dropout (eval mode) -> identity

    # Linear 2 + LayerNorm 2.
    y = jnp.dot(hb, w2_ref[...], preferred_element_type=jnp.float32)
    v2 = v2_ref[...]
    y = _layernorm(y + v2[0:1, :], v2[1:2, :], v2[2:3, :], d_true)
    # Dropout (eval mode) -> identity

    o_ref[...] = (x + y).astype(o_ref.dtype)


def _fused_call(x_p, w1_p, v1, w2_p, v2, *, TB, Dp, Hp, H, D, vmem_limit, single_buffer):
    Bp = x_p.shape[0]
    resident_kw = {"pipeline_mode": pl.Buffered(1)} if single_buffer else {}
    kernel = functools.partial(_fused_kernel, h_true=H, d_true=D)
    cost = pl.CostEstimate(
        flops=4 * Bp * Dp * Hp,                    # two matmuls, 2*M*N*K each
        transcendentals=2 * Bp,                    # one rsqrt per row per LayerNorm
        bytes_accessed=2 * Bp * Dp * 4 + 2 * Dp * Hp * 2 + 3 * (Hp + Dp) * 4)
    return pl.pallas_call(
        kernel,
        out_shape=jax.ShapeDtypeStruct((Bp, Dp), jnp.float32),
        grid=(Bp // TB,),
        in_specs=[
            pl.BlockSpec((TB, Dp), lambda i: (i, 0)),                 # x: streamed batch tiles
            pl.BlockSpec((Dp, Hp), lambda i: (0, 0), **resident_kw),  # w1: VMEM-resident
            pl.BlockSpec((3, Hp), lambda i: (0, 0), **resident_kw),   # [b1, gamma1, beta1]
            pl.BlockSpec((Hp, Dp), lambda i: (0, 0), **resident_kw),  # w2: VMEM-resident
            pl.BlockSpec((3, Dp), lambda i: (0, 0), **resident_kw),   # [b2, gamma2, beta2]
        ],
        out_specs=pl.BlockSpec((TB, Dp), lambda i: (i, 0)),
        compiler_params=pltpu.CompilerParams(
            dimension_semantics=("parallel",),     # shard batch tiles across TCs on v7x
            vmem_limit_bytes=vmem_limit),
        cost_estimate=cost,
    )(x_p, w1_p, v1, w2_p, v2)


# ---------------------------------------------------------------------------
# Fallback path: weights too large for VMEM -> stream weight tiles (two passes).
# ---------------------------------------------------------------------------
def _linear1_kernel(x_ref, w1_ref, v1_ref, h_ref, *, th):
    """h_tile = x @ w1[:, k_tile] + b1[k_tile] (LayerNorm deferred: it needs the full row)."""
    k = pl.program_id(1)
    off = pl.multiple_of(k * th, 128)
    b1 = v1_ref[0:1, pl.ds(off, th)]
    h_ref[...] = jnp.dot(x_ref[...].astype(jnp.bfloat16), w1_ref[...],
                         preferred_element_type=jnp.float32) + b1


def _linear2_kernel(x_ref, h_ref, v1_ref, w2_ref, v2_ref, o_ref, hn_ref, acc_ref, *,
                    th, h_true, d_true):
    """LN1+ReLU (once per batch tile), K-accumulated matmul-2, LN2, residual add."""
    k = pl.program_id(1)

    @pl.when(k == 0)
    def _():
        v1 = v1_ref[...]
        hn = _layernorm(h_ref[...], v1[1:2, :], v1[2:3, :], h_true)  # bias already in h
        hn_ref[...] = jnp.maximum(hn, 0.0).astype(jnp.bfloat16)
        acc_ref[...] = jnp.zeros_like(acc_ref)

    off = pl.multiple_of(k * th, 128)
    acc_ref[...] += jnp.dot(hn_ref[:, pl.ds(off, th)], w2_ref[...],
                            preferred_element_type=jnp.float32)

    @pl.when(k == pl.num_programs(1) - 1)
    def _():
        x = x_ref[...].astype(jnp.float32)
        v2 = v2_ref[...]
        y = _layernorm(acc_ref[...] + v2[0:1, :], v2[1:2, :], v2[2:3, :], d_true)
        o_ref[...] = (x + y).astype(o_ref.dtype)


def _tiled_call(x_p, w1_p, v1, w2_p, v2, *, TB, TH, Dp, Hp, H, D, vmem_limit):
    Bp = x_p.shape[0]
    nb, nh = Bp // TB, Hp // TH

    # Pass 1: h = x @ w1 + b1, tiled over the hidden (N) dim; w1 streamed tile-by-tile.
    h_full = pl.pallas_call(
        functools.partial(_linear1_kernel, th=TH),
        out_shape=jax.ShapeDtypeStruct((Bp, Hp), jnp.float32),
        grid=(nb, nh),
        in_specs=[
            pl.BlockSpec((TB, Dp), lambda i, k: (i, 0)),
            pl.BlockSpec((Dp, TH), lambda i, k: (0, k)),
            pl.BlockSpec((3, Hp), lambda i, k: (0, 0)),
        ],
        out_specs=pl.BlockSpec((TB, TH), lambda i, k: (i, k)),
        compiler_params=pltpu.CompilerParams(
            dimension_semantics=("parallel", "parallel"),
            vmem_limit_bytes=vmem_limit),
        cost_estimate=pl.CostEstimate(
            flops=2 * Bp * Dp * Hp, transcendentals=0,
            bytes_accessed=Bp * Dp * 4 + Dp * Hp * 2 + Bp * Hp * 4),
    )(x_p, w1_p, v1)

    # Pass 2: LN1 + ReLU (once per batch tile), K-accumulated matmul-2, LN2, skip connection.
    return pl.pallas_call(
        functools.partial(_linear2_kernel, th=TH, h_true=H, d_true=D),
        out_shape=jax.ShapeDtypeStruct((Bp, Dp), jnp.float32),
        grid=(nb, nh),
        in_specs=[
            pl.BlockSpec((TB, Dp), lambda i, k: (i, 0)),   # x (resident per batch tile)
            pl.BlockSpec((TB, Hp), lambda i, k: (i, 0)),   # h (resident per batch tile)
            pl.BlockSpec((3, Hp), lambda i, k: (0, 0)),    # [b1, gamma1, beta1]
            pl.BlockSpec((TH, Dp), lambda i, k: (k, 0)),   # w2 tile streamed over K
            pl.BlockSpec((3, Dp), lambda i, k: (0, 0)),    # [b2, gamma2, beta2]
        ],
        out_specs=pl.BlockSpec((TB, Dp), lambda i, k: (i, 0)),
        scratch_shapes=[pltpu.VMEM((TB, Hp), jnp.bfloat16),   # normalized h
                        pltpu.VMEM((TB, Dp), jnp.float32)],   # f32 accumulator
        compiler_params=pltpu.CompilerParams(
            dimension_semantics=("parallel", "arbitrary"),
            vmem_limit_bytes=vmem_limit),
        cost_estimate=pl.CostEstimate(
            flops=2 * Bp * Hp * Dp, transcendentals=2 * Bp,
            bytes_accessed=Bp * Hp * 4 + 2 * Bp * Dp * 4 + Hp * Dp * 2),
    )(x_p, h_full, v1, w2_p, v2)


# ---------------------------------------------------------------------------
# Wrapper
# ---------------------------------------------------------------------------
def residual_block(x, params, *, batch_tile=512, force_tiled=False):
    """x: (B, D) float32.  params: dict of weights (see init_params)."""
    B, D = x.shape
    H = params["w1"].shape[1]

    Dp = _round_up(D, 128)
    Hp = _round_up(H, 128)

    # ~85% of physical VMEM (queried per generation) leaves headroom for Mosaic scratch.
    budget = int(0.85 * _vmem_capacity_bytes())

    # Batch tile: large (amortize per-grid-step overhead, fill MXU M dim), capped to the padded
    # batch; keep >= 2 tiles for large batches so v7x's two TensorCores both get work.
    tb_cap = _round_up(B, 8)
    TB = min(batch_tile, tb_cap)
    if tb_cap >= 512 and pl.cdiv(tb_cap, TB) < 2:
        TB = _round_up(pl.cdiv(tb_cap, 2), 8)

    def fused_vmem_bytes(tb):
        return (2 * Dp * Hp * 2 * 2            # w1 + w2 bf16 (conservatively assume 2 buffers)
                + 2 * 3 * (Hp + Dp) * 4 * 2    # bias/gamma/beta rows
                + 2 * 2 * tb * Dp * 4          # x-in + out tiles, double-buffered
                + tb * (6 * Hp + 8 * Dp)       # f32/bf16 intermediates (x, h, hb, y)
                + (2 << 20))                   # slack for Mosaic internal scratch

    while fused_vmem_bytes(TB) > budget and TB > 64:
        TB = max(64, _round_up(TB // 2, 8))

    use_tiled = force_tiled or fused_vmem_bytes(TB) > budget

    # Zero padding everywhere: padded weight rows/cols, biases, gamma, beta are zero, so padded
    # lanes of every intermediate stay exactly zero and the maskless LayerNorm stats are exact.
    w1_p = jnp.pad(params["w1"], ((0, Dp - D), (0, Hp - H))).astype(jnp.bfloat16)
    w2_p = jnp.pad(params["w2"], ((0, Hp - H), (0, Dp - D))).astype(jnp.bfloat16)
    v1 = jnp.pad(jnp.stack([params["b1"], params["ln1_gamma"], params["ln1_beta"]]),
                 ((0, 0), (0, Hp - H))).astype(jnp.float32)
    v2 = jnp.pad(jnp.stack([params["b2"], params["ln2_gamma"], params["ln2_beta"]]),
                 ((0, 0), (0, Dp - D))).astype(jnp.float32)

    if not use_tiled:
        Bp = _round_up(B, TB)
        x_p = jnp.pad(x, ((0, Bp - B), (0, Dp - D))).astype(jnp.float32)
        # TODO(synk): optionally stream x/out in bf16 on v5e (HBM-bound for small H); kept f32
        # here to preserve residual-input precision.
        common = dict(TB=TB, Dp=Dp, Hp=Hp, H=H, D=D, vmem_limit=budget)
        try:
            out_p = _fused_call(x_p, w1_p, v1, w2_p, v2, single_buffer=True, **common)
        except Exception:
            # pl.Buffered(1) (single-buffered resident weights) unsupported on this build.
            out_p = _fused_call(x_p, w1_p, v1, w2_p, v2, single_buffer=False, **common)
    else:
        # Weights do not fit VMEM-resident: stream weight tiles instead (two-pass kernels).
        TH = 512 if Hp % 512 == 0 else (256 if Hp % 256 == 0 else 128)

        def tiled_vmem_bytes(tb):
            return (2 * tb * Hp * 4                     # resident h block (f32), double-buffered
                    + tb * Hp * 2 + tb * Dp * 4         # hn / accumulator scratch
                    + 2 * 2 * tb * Dp * 4               # x + out tiles
                    + 2 * 2 * Dp * TH * 2               # streamed w1/w2 tiles
                    + 2 * 3 * (Hp + Dp) * 4 * 2
                    + (2 << 20))

        while tiled_vmem_bytes(TB) > budget and TB > 8:
            TB = max(8, _round_up(TB // 2, 8))
        Bp = _round_up(B, TB)
        x_p = jnp.pad(x, ((0, Bp - B), (0, Dp - D))).astype(jnp.float32)
        # TODO(synk): extreme input_dim would additionally need a K-tiled first matmul; w1 is
        # only tiled along its hidden (output) dim here.
        out_p = _tiled_call(x_p, w1_p, v1, w2_p, v2,
                            TB=TB, TH=TH, Dp=Dp, Hp=Hp, H=H, D=D, vmem_limit=budget)

    return out_p[:B, :D].astype(x.dtype)


def init_params(key, input_dim, hidden_dim):
    """Deterministic init mimicking PyTorch defaults (Linear: U(-1/sqrt(fan_in), ...),
    LayerNorm: gamma=1, beta=0)."""
    k1, k2, k3, k4 = jax.random.split(key, 4)
    lim1 = 1.0 / (input_dim ** 0.5)
    lim2 = 1.0 / (hidden_dim ** 0.5)
    return {
        # Stored as (in, out) so the kernel does x @ w (== x @ W.T in PyTorch terms).
        "w1": jax.random.uniform(k1, (input_dim, hidden_dim), jnp.float32, -lim1, lim1),
        "b1": jax.random.uniform(k2, (hidden_dim,), jnp.float32, -lim1, lim1),
        "ln1_gamma": jnp.ones((hidden_dim,), jnp.float32),
        "ln1_beta": jnp.zeros((hidden_dim,), jnp.float32),
        "w2": jax.random.uniform(k3, (hidden_dim, input_dim), jnp.float32, -lim2, lim2),
        "b2": jax.random.uniform(k4, (input_dim,), jnp.float32, -lim2, lim2),
        "ln2_gamma": jnp.ones((input_dim,), jnp.float32),
        "ln2_beta": jnp.zeros((input_dim,), jnp.float32),
    }


def _reference(x, p):
    """Pure-JAX f32 reference of the PyTorch forward (eval mode)."""
    h = x @ p["w1"] + p["b1"]
    mu = h.mean(-1, keepdims=True)
    v = ((h - mu) ** 2).mean(-1, keepdims=True)
    h = (h - mu) / jnp.sqrt(v + LN_EPS) * p["ln1_gamma"] + p["ln1_beta"]
    h = jnp.maximum(h, 0.0)
    y = h @ p["w2"] + p["b2"]
    mu = y.mean(-1, keepdims=True)
    v = ((y - mu) ** 2).mean(-1, keepdims=True)
    y = (y - mu) / jnp.sqrt(v + LN_EPS) * p["ln2_gamma"] + p["ln2_beta"]
    return x + y


if __name__ == "__main__":
    def run_case(batch, input_dim, hidden_dim, force_tiled=False):
        key = jax.random.PRNGKey(0)
        kx, kp = jax.random.split(key)
        x = jax.random.normal(kx, (batch, input_dim), jnp.float32)
        params = init_params(kp, input_dim, hidden_dim)

        out = jax.block_until_ready(residual_block(x, params, force_tiled=force_tiled))
        ref = _reference(x, params)

        assert out.shape == (batch, input_dim), out.shape
        err = float(jnp.max(jnp.abs(out - ref)))
        # bf16 MXU operands (f32 accumulation) -> slightly looser tolerance than pure f32.
        assert err < 5e-2, err

    # Un-aligned shapes: exercises batch/feature padding + maskless LayerNorm over padded lanes.
    run_case(batch=200, input_dim=48, hidden_dim=96)
    # Lane-aligned shapes: fast path (no padding), single large batch tile.
    run_case(batch=256, input_dim=128, hidden_dim=256)
    # Larger batch: multiple batch tiles on the grid (>= 2 tiles for megacore sharding).
    run_case(batch=640, input_dim=64, hidden_dim=96)
    # Force the weight-streaming fallback (validates the K/N-tiled two-pass path).
    run_case(batch=64, input_dim=48, hidden_dim=300, force_tiled=True)

    print("KERNEL_OK")
</pallas_src>

<mosaic_0001>
module attributes {stable_mosaic.version = 11 : i64} {
  func.func @_fused_kernel(%arg0: i32, %arg1: memref<200x128xf32, #tpu.memory_space<vmem>>, %arg2: memref<128x128xbf16, #tpu.memory_space<vmem>>, %arg3: memref<3x128xf32, #tpu.memory_space<vmem>>, %arg4: memref<128x128xbf16, #tpu.memory_space<vmem>>, %arg5: memref<3x128xf32, #tpu.memory_space<vmem>>, %arg6: memref<200x128xf32, #tpu.memory_space<vmem>>) attributes {dimension_semantics = [#tpu.dimension_semantics<parallel>], iteration_bounds = array<i64: 1>, scalar_prefetch = 0 : i64, scratch_operands = 0 : i64, tpu.core_type = #tpu.core_type<tc>, window_params = [{transform_indices = @transform_0, window_bounds = array<i64: 200, 128>}, {pipeline_mode = #tpu.pipeline_mode<synchronous>, transform_indices = @transform_1, window_bounds = array<i64: 128, 128>}, {pipeline_mode = #tpu.pipeline_mode<synchronous>, transform_indices = @transform_2, window_bounds = array<i64: 3, 128>}, {pipeline_mode = #tpu.pipeline_mode<synchronous>, transform_indices = @transform_3, window_bounds = array<i64: 128, 128>}, {pipeline_mode = #tpu.pipeline_mode<synchronous>, transform_indices = @transform_4, window_bounds = array<i64: 3, 128>}, {transform_indices = @transform_5, window_bounds = array<i64: 200, 128>}]} {
    %c0 = arith.constant 0 : index
    %c0_0 = arith.constant 0 : index
    %0 = vector.load %arg1[%c0, %c0_0] : memref<200x128xf32, #tpu.memory_space<vmem>>, vector<200x128xf32>
    %1 = arith.truncf %0 : vector<200x128xf32> to vector<200x128xbf16>
    %c0_1 = arith.constant 0 : index
    %c0_2 = arith.constant 0 : index
    %2 = vector.load %arg2[%c0_1, %c0_2] : memref<128x128xbf16, #tpu.memory_space<vmem>>, vector<128x128xbf16>
    %cst = arith.constant dense<0.000000e+00> : vector<200x128xf32>
    %3 = tpu.matmul %1, %2, %cst {dimension_numbers = #tpu.dot_dimension_numbers<[1], [0], [0], [1], [0, 0, 1, 1], [], []>} : vector<200x128xbf16>, vector<128x128xbf16>, vector<200x128xf32> -> vector<200x128xf32>
    %c0_3 = arith.constant 0 : index
    %c0_4 = arith.constant 0 : index
    %4 = vector.load %arg3[%c0_3, %c0_4] : memref<3x128xf32, #tpu.memory_space<vmem>>, vector<3x128xf32>
    %5 = vector.extract_strided_slice %4 {offsets = [0, 0], sizes = [1, 128], strides = [1, 1]} : vector<3x128xf32> to vector<1x128xf32>
    %6 = vector.broadcast %5 : vector<1x128xf32> to vector<200x128xf32>
    %7 = arith.addf %3, %6 : vector<200x128xf32>
    %8 = vector.extract_strided_slice %4 {offsets = [1, 0], sizes = [1, 128], strides = [1, 1]} : vector<3x128xf32> to vector<1x128xf32>
    %9 = vector.extract_strided_slice %4 {offsets = [2, 0], sizes = [1, 128], strides = [1, 1]} : vector<3x128xf32> to vector<1x128xf32>
    %cst_5 = arith.constant dense<0.000000e+00> : vector<200xf32>
    %10 = vector.multi_reduction <add>, %7, %cst_5 [1] : vector<200x128xf32> to vector<200xf32>
    %11 = vector.shape_cast %10 : vector<200xf32> to vector<200x1xf32>
    %cst_6 = arith.constant 0.010416667 : f32
    %12 = vector.broadcast %cst_6 : f32 to vector<200x1xf32>
    %13 = arith.mulf %11, %12 : vector<200x1xf32>
    %14 = arith.mulf %7, %7 : vector<200x128xf32>
    %cst_7 = arith.constant dense<0.000000e+00> : vector<200xf32>
    %15 = vector.multi_reduction <add>, %14, %cst_7 [1] : vector<200x128xf32> to vector<200xf32>
    %16 = vector.shape_cast %15 : vector<200xf32> to vector<200x1xf32>
    %cst_8 = arith.constant 0.010416667 : f32
    %17 = vector.broadcast %cst_8 : f32 to vector<200x1xf32>
    %18 = arith.mulf %16, %17 : vector<200x1xf32>
    %19 = arith.mulf %13, %13 : vector<200x1xf32>
    %20 = arith.subf %18, %19 : vector<200x1xf32>
    %cst_9 = arith.constant 9.99999974E-6 : f32
    %21 = vector.broadcast %cst_9 : f32 to vector<200x1xf32>
    %22 = arith.addf %20, %21 : vector<200x1xf32>
    %23 = math.rsqrt %22 : vector<200x1xf32>
    %24 = vector.broadcast %13 : vector<200x1xf32> to vector<200x128xf32>
    %25 = arith.subf %7, %24 : vector<200x128xf32>
    %26 = vector.broadcast %23 : vector<200x1xf32> to vector<200x128xf32>
    %27 = arith.mulf %25, %26 : vector<200x128xf32>
    %28 = vector.broadcast %8 : vector<1x128xf32> to vector<200x128xf32>
    %29 = arith.mulf %27, %28 : vector<200x128xf32>
    %30 = vector.broadcast %9 : vector<1x128xf32> to vector<200x128xf32>
    %31 = arith.addf %29, %30 : vector<200x128xf32>
    %cst_10 = arith.constant 0.000000e+00 : f32
    %32 = vector.broadcast %cst_10 : f32 to vector<200x128xf32>
    %33 = arith.maximumf %31, %32 : vector<200x128xf32>
    %34 = arith.truncf %33 : vector<200x128xf32> to vector<200x128xbf16>
    %c0_11 = arith.constant 0 : index
    %c0_12 = arith.constant 0 : index
    %35 = vector.load %arg4[%c0_11, %c0_12] : memref<128x128xbf16, #tpu.memory_space<vmem>>, vector<128x128xbf16>
    %cst_13 = arith.constant dense<0.000000e+00> : vector<200x128xf32>
    %36 = tpu.matmul %34, %35, %cst_13 {dimension_numbers = #tpu.dot_dimension_numbers<[1], [0], [0], [1], [0, 0, 1, 1], [], []>} : vector<200x128xbf16>, vector<128x128xbf16>, vector<200x128xf32> -> vector<200x128xf32>
    %c0_14 = arith.constant 0 : index
    %c0_15 = arith.constant 0 : index
    %37 = vector.load %arg5[%c0_14, %c0_15] : memref<3x128xf32, #tpu.memory_space<vmem>>, vector<3x128xf32>
    %38 = vector.extract_strided_slice %37 {offsets = [0, 0], sizes = [1, 128], strides = [1, 1]} : vector<3x128xf32> to vector<1x128xf32>
    %39 = vector.broadcast %38 : vector<1x128xf32> to vector<200x128xf32>
    %40 = arith.addf %36, %39 : vector<200x128xf32>
    %41 = vector.extract_strided_slice %37 {offsets = [1, 0], sizes = [1, 128], strides = [1, 1]} : vector<3x128xf32> to vector<1x128xf32>
    %42 = vector.extract_strided_slice %37 {offsets = [2, 0], sizes = [1, 128], strides = [1, 1]} : vector<3x128xf32> to vector<1x128xf32>
    %cst_16 = arith.constant dense<0.000000e+00> : vector<200xf32>
    %43 = vector.multi_reduction <add>, %40, %cst_16 [1] : vector<200x128xf32> to vector<200xf32>
    %44 = vector.shape_cast %43 : vector<200xf32> to vector<200x1xf32>
    %cst_17 = arith.constant 0.020833334 : f32
    %45 = vector.broadcast %cst_17 : f32 to vector<200x1xf32>
    %46 = arith.mulf %44, %45 : vector<200x1xf32>
    %47 = arith.mulf %40, %40 : vector<200x128xf32>
    %cst_18 = arith.constant dense<0.000000e+00> : vector<200xf32>
    %48 = vector.multi_reduction <add>, %47, %cst_18 [1] : vector<200x128xf32> to vector<200xf32>
    %49 = vector.shape_cast %48 : vector<200xf32> to vector<200x1xf32>
    %cst_19 = arith.constant 0.020833334 : f32
    %50 = vector.broadcast %cst_19 : f32 to vector<200x1xf32>
    %51 = arith.mulf %49, %50 : vector<200x1xf32>
    %52 = arith.mulf %46, %46 : vector<200x1xf32>
    %53 = arith.subf %51, %52 : vector<200x1xf32>
    %cst_20 = arith.constant 9.99999974E-6 : f32
    %54 = vector.broadcast %cst_20 : f32 to vector<200x1xf32>
    %55 = arith.addf %53, %54 : vector<200x1xf32>
    %56 = math.rsqrt %55 : vector<200x1xf32>
    %57 = vector.broadcast %46 : vector<200x1xf32> to vector<200x128xf32>
    %58 = arith.subf %40, %57 : vector<200x128xf32>
    %59 = vector.broadcast %56 : vector<200x1xf32> to vector<200x128xf32>
    %60 = arith.mulf %58, %59 : vector<200x128xf32>
    %61 = vector.broadcast %41 : vector<1x128xf32> to vector<200x128xf32>
    %62 = arith.mulf %60, %61 : vector<200x128xf32>
    %63 = vector.broadcast %42 : vector<1x128xf32> to vector<200x128xf32>
    %64 = arith.addf %62, %63 : vector<200x128xf32>
    %65 = arith.addf %0, %64 : vector<200x128xf32>
    %c0_21 = arith.constant 0 : index
    %c0_22 = arith.constant 0 : index
    %66 = vector.load %arg6[%c0_21, %c0_22] : memref<200x128xf32, #tpu.memory_space<vmem>>, vector<200x128xf32>
    tpu.vector_store %arg6[%c0_21, %c0_22], %65 {strides = array<i32>} : memref<200x128xf32, #tpu.memory_space<vmem>>, vector<200x128xf32>,
    return
  }
  func.func @transform_0(%arg0: i32) -> (i32, i32) {
    %c0_i32 = arith.constant 0 : i32
    %c0_i32_0 = arith.constant 0 : i32
    return %arg0, %c0_i32 : i32, i32
  }
  func.func @transform_1(%arg0: i32) -> (i32, i32) {
    %c0_i32 = arith.constant 0 : i32
    %c0_i32_0 = arith.constant 0 : i32
    %c0_i32_1 = arith.constant 0 : i32
    return %c0_i32, %c0_i32_0 : i32, i32
  }
  func.func @transform_2(%arg0: i32) -> (i32, i32) {
    %c0_i32 = arith.constant 0 : i32
    %c0_i32_0 = arith.constant 0 : i32
    %c0_i32_1 = arith.constant 0 : i32
    return %c0_i32, %c0_i32_0 : i32, i32
  }
  func.func @transform_3(%arg0: i32) -> (i32, i32) {
    %c0_i32 = arith.constant 0 : i32
    %c0_i32_0 = arith.constant 0 : i32
    %c0_i32_1 = arith.constant 0 : i32
    return %c0_i32, %c0_i32_0 : i32, i32
  }
  func.func @transform_4(%arg0: i32) -> (i32, i32) {
    %c0_i32 = arith.constant 0 : i32
    %c0_i32_0 = arith.constant 0 : i32
    %c0_i32_1 = arith.constant 0 : i32
    return %c0_i32, %c0_i32_0 : i32, i32
  }
  func.func @transform_5(%arg0: i32) -> (i32, i32) {
    %c0_i32 = arith.constant 0 : i32
    %c0_i32_0 = arith.constant 0 : i32
    return %arg0, %c0_i32 : i32, i32
  }
}

module attributes {stable_mosaic.version = 11 : i64} {
  func.func @_fused_kernel(%arg0: i32, %arg1: memref<200x128xf32, #tpu.memory_space<vmem>>, %arg2: memref<128x128xbf16, #tpu.memory_space<vmem>>, %arg3: memref<3x128xf32, #tpu.memory_space<vmem>>, %arg4: memref<128x128xbf16, #tpu.memory_space<vmem>>, %arg5: memref<3x128xf32, #tpu.memory_space<vmem>>, %arg6: memref<200x128xf32, #tpu.memory_space<vmem>>) attributes {dimension_semantics = [#tpu.dimension_semantics<parallel>], iteration_bounds = array<i64: 1>, scalar_prefetch = 0 : i64, scratch_operands = 0 : i64, tpu.core_type = #tpu.core_type<tc>, window_params = [{transform_indices = @transform_0, window_bounds = array<i64: 200, 128>}, {pipeline_mode = #tpu.pipeline_mode<synchronous>, transform_indices = @transform_1, window_bounds = array<i64: 128, 128>}, {pipeline_mode = #tpu.pipeline_mode<synchronous>, transform_indices = @transform_2, window_bounds = array<i64: 3, 128>}, {pipeline_mode = #tpu.pipeline_mode<synchronous>, transform_indices = @transform_3, window_bounds = array<i64: 128, 128>}, {pipeline_mode = #tpu.pipeline_mode<synchronous>, transform_indices = @transform_4, window_bounds = array<i64: 3, 128>}, {transform_indices = @transform_5, window_bounds = array<i64: 200, 128>}]} {
    %c0 = arith.constant 0 : index
    %c0_0 = arith.constant 0 : index
    %0 = vector.load %arg1[%c0, %c0_0] : memref<200x128xf32, #tpu.memory_space<vmem>>, vector<200x128xf32>
    %1 = arith.truncf %0 : vector<200x128xf32> to vector<200x128xbf16>
    %c0_1 = arith.constant 0 : index
    %c0_2 = arith.constant 0 : index
    %2 = vector.load %arg2[%c0_1, %c0_2] : memref<128x128xbf16, #tpu.memory_space<vmem>>, vector<128x128xbf16>
    %cst = arith.constant dense<0.000000e+00> : vector<200x128xf32>
    %3 = tpu.matmul %1, %2, %cst {dimension_numbers = #tpu.dot_dimension_numbers<[1], [0], [0], [1], [0, 0, 1, 1], [], []>} : vector<200x128xbf16>, vector<128x128xbf16>, vector<200x128xf32> -> vector<200x128xf32>
    %c0_3 = arith.constant 0 : index
    %c0_4 = arith.constant 0 : index
    %4 = vector.load %arg3[%c0_3, %c0_4] : memref<3x128xf32, #tpu.memory_space<vmem>>, vector<3x128xf32>
    %5 = vector.extract_strided_slice %4 {offsets = [0, 0], sizes = [1, 128], strides = [1, 1]} : vector<3x128xf32> to vector<1x128xf32>
    %6 = vector.broadcast %5 : vector<1x128xf32> to vector<200x128xf32>
    %7 = arith.addf %3, %6 : vector<200x128xf32>
    %8 = vector.extract_strided_slice %4 {offsets = [1, 0], sizes = [1, 128], strides = [1, 1]} : vector<3x128xf32> to vector<1x128xf32>
    %9 = vector.extract_strided_slice %4 {offsets = [2, 0], sizes = [1, 128], strides = [1, 1]} : vector<3x128xf32> to vector<1x128xf32>
    %cst_5 = arith.constant dense<0.000000e+00> : vector<200xf32>
    %10 = vector.multi_reduction <add>, %7, %cst_5 [1] : vector<200x128xf32> to vector<200xf32>
    %11 = vector.shape_cast %10 : vector<200xf32> to vector<200x1xf32>
    %cst_6 = arith.constant 0.010416667 : f32
    %12 = vector.broadcast %cst_6 : f32 to vector<200x1xf32>
    %13 = arith.mulf %11, %12 : vector<200x1xf32>
    %14 = arith.mulf %7, %7 : vector<200x128xf32>
    %cst_7 = arith.constant dense<0.000000e+00> : vector<200xf32>
    %15 = vector.multi_reduction <add>, %14, %cst_7 [1] : vector<200x128xf32> to vector<200xf32>
    %16 = vector.shape_cast %15 : vector<200xf32> to vector<200x1xf32>
    %cst_8 = arith.constant 0.010416667 : f32
    %17 = vector.broadcast %cst_8 : f32 to vector<200x1xf32>
    %18 = arith.mulf %16, %17 : vector<200x1xf32>
    %19 = arith.mulf %13, %13 : vector<200x1xf32>
    %20 = arith.subf %18, %19 : vector<200x1xf32>
    %cst_9 = arith.constant 9.99999974E-6 : f32
    %21 = vector.broadcast %cst_9 : f32 to vector<200x1xf32>
    %22 = arith.addf %20, %21 : vector<200x1xf32>
    %23 = math.rsqrt %22 : vector<200x1xf32>
    %24 = vector.broadcast %13 : vector<200x1xf32> to vector<200x128xf32>
    %25 = arith.subf %7, %24 : vector<200x128xf32>
    %26 = vector.broadcast %23 : vector<200x1xf32> to vector<200x128xf32>
    %27 = arith.mulf %25, %26 : vector<200x128xf32>
    %28 = vector.broadcast %8 : vector<1x128xf32> to vector<200x128xf32>
    %29 = arith.mulf %27, %28 : vector<200x128xf32>
    %30 = vector.broadcast %9 : vector<1x128xf32> to vector<200x128xf32>
    %31 = arith.addf %29, %30 : vector<200x128xf32>
    %cst_10 = arith.constant 0.000000e+00 : f32
    %32 = vector.broadcast %cst_10 : f32 to vector<200x128xf32>
    %33 = arith.maximumf %31, %32 : vector<200x128xf32>
    %34 = arith.truncf %33 : vector<200x128xf32> to vector<200x128xbf16>
    %c0_11 = arith.constant 0 : index
    %c0_12 = arith.constant 0 : index
    %35 = vector.load %arg4[%c0_11, %c0_12] : memref<128x128xbf16, #tpu.memory_space<vmem>>, vector<128x128xbf16>
    %cst_13 = arith.constant dense<0.000000e+00> : vector<200x128xf32>
    %36 = tpu.matmul %34, %35, %cst_13 {dimension_numbers = #tpu.dot_dimension_numbers<[1], [0], [0], [1], [0, 0, 1, 1], [], []>} : vector<200x128xbf16>, vector<128x128xbf16>, vector<200x128xf32> -> vector<200x128xf32>
    %c0_14 = arith.constant 0 : index
    %c0_15 = arith.constant 0 : index
    %37 = vector.load %arg5[%c0_14, %c0_15] : memref<3x128xf32, #tpu.memory_space<vmem>>, vector<3x128xf32>
    %38 = vector.extract_strided_slice %37 {offsets = [0, 0], sizes = [1, 128], strides = [1, 1]} : vector<3x128xf32> to vector<1x128xf32>
    %39 = vector.broadcast %38 : vector<1x128xf32> to vector<200x128xf32>
    %40 = arith.addf %36, %39 : vector<200x128xf32>
    %41 = vector.extract_strided_slice %37 {offsets = [1, 0], sizes = [1, 128], strides = [1, 1]} : vector<3x128xf32> to vector<1x128xf32>
    %42 = vector.extract_strided_slice %37 {offsets = [2, 0], sizes = [1, 128], strides = [1, 1]} : vector<3x128xf32> to vector<1x128xf32>
    %cst_16 = arith.constant dense<0.000000e+00> : vector<200xf32>
    %43 = vector.multi_reduction <add>, %40, %cst_16 [1] : vector<200x128xf32> to vector<200xf32>
    %44 = vector.shape_cast %43 : vector<200xf32> to vector<200x1xf32>
    %cst_17 = arith.constant 0.020833334 : f32
    %45 = vector.broadcast %cst_17 : f32 to vector<200x1xf32>
    %46 = arith.mulf %44, %45 : vector<200x1xf32>
    %47 = arith.mulf %40, %40 : vector<200x128xf32>
    %cst_18 = arith.constant dense<0.000000e+00> : vector<200xf32>
    %48 = vector.multi_reduction <add>, %47, %cst_18 [1] : vector<200x128xf32> to vector<200xf32>
    %49 = vector.shape_cast %48 : vector<200xf32> to vector<200x1xf32>
    %cst_19 = arith.constant 0.020833334 : f32
    %50 = vector.broadcast %cst_19 : f32 to vector<200x1xf32>
    %51 = arith.mulf %49, %50 : vector<200x1xf32>
    %52 = arith.mulf %46, %46 : vector<200x1xf32>
    %53 = arith.subf %51, %52 : vector<200x1xf32>
    %cst_20 = arith.constant 9.99999974E-6 : f32
    %54 = vector.broadcast %cst_20 : f32 to vector<200x1xf32>
    %55 = arith.addf %53, %54 : vector<200x1xf32>
    %56 = math.rsqrt %55 : vector<200x1xf32>
    %57 = vector.broadcast %46 : vector<200x1xf32> to vector<200x128xf32>
    %58 = arith.subf %40, %57 : vector<200x128xf32>
    %59 = vector.broadcast %56 : vector<200x1xf32> to vector<200x128xf32>
    %60 = arith.mulf %58, %59 : vector<200x128xf32>
    %61 = vector.broadcast %41 : vector<1x128xf32> to vector<200x128xf32>
    %62 = arith.mulf %60, %61 : vector<200x128xf32>
    %63 = vector.broadcast %42 : vector<1x128xf32> to vector<200x128xf32>
    %64 = arith.addf %62, %63 : vector<200x128xf32>
    %65 = arith.addf %0, %64 : vector<200x128xf32>
    %c0_21 = arith.constant 0 : index
    %c0_22 = arith.constant 0 : index
    %66 = vector.load %arg6[%c0_21, %c0_22] : memref<200x128xf32, #tpu.memory_space<vmem>>, vector<200x128xf32>
    tpu.vector_store %arg6[%c0_21, %c0_22], %65 {strides = array<i32>} : memref<200x128xf32, #tpu.memory_space<vmem>>, vector<200x128xf32>,
    return
  }
  func.func @transform_0(%arg0: i32) -> (i32, i32) {
    %c0_i32 = arith.constant 0 : i32
    %c0_i32_0 = arith.constant 0 : i32
    return %arg0, %c0_i32 : i32, i32
  }
  func.func @transform_1(%arg0: i32) -> (i32, i32) {
    %c0_i32 = arith.constant 0 : i32
    %c0_i32_0 = arith.constant 0 : i32
    %c0_i32_1 = arith.constant 0 : i32
    return %c0_i32, %c0_i32_0 : i32, i32
  }
  func.func @transform_2(%arg0: i32) -> (i32, i32) {
    %c0_i32 = arith.constant 0 : i32
    %c0_i32_0 = arith.constant 0 : i32
    %c0_i32_1 = arith.constant 0 : i32
    return %c0_i32, %c0_i32_0 : i32, i32
  }
  func.func @transform_3(%arg0: i32) -> (i32, i32) {
    %c0_i32 = arith.constant 0 : i32
    %c0_i32_0 = arith.constant 0 : i32
    %c0_i32_1 = arith.constant 0 : i32
    return %c0_i32, %c0_i32_0 : i32, i32
  }
  func.func @transform_4(%arg0: i32) -> (i32, i32) {
    %c0_i32 = arith.constant 0 : i32
    %c0_i32_0 = arith.constant 0 : i32
    %c0_i32_1 = arith.constant 0 : i32
    return %c0_i32, %c0_i32_0 : i32, i32
  }
  func.func @transform_5(%arg0: i32) -> (i32, i32) {
    %c0_i32 = arith.constant 0 : i32
    %c0_i32_0 = arith.constant 0 : i32
    return %arg0, %c0_i32 : i32, i32
  }
}

</mosaic_0001>

<llo_original>
// kernel: tpu_custom_call.1
$region0: #{tpu_custom_call.1}
  #allocation0 [shape = 'u32[]', space=smem, size = 0x4, offset = 0x4, fixed_abs, tag = 'smem constant byte address 0x4 - core index']
  #allocation1 [shape = 'u32[144,128]{1,0:T(1,128)}', space=vmem, size = 0x12000, scoped, tag = 'internal scratch']
  %s0 = inlined_call_operand.hbm [shape: f32[200,128], index: 0, kind: input, shape index: {}]
  %s1 = inlined_call_operand.hbm [shape: bf16[128,128], index: 1, kind: input, shape index: {}]
  %s2 = inlined_call_operand.hbm [shape: f32[3,128], index: 2, kind: input, shape index: {}]
  %s3 = inlined_call_operand.hbm [shape: bf16[128,128], index: 3, kind: input, shape index: {}]
  %s4 = inlined_call_operand.vmem [shape: f32[3,128], index: 4, kind: input, shape index: {}]
  %s5 = inlined_call_operand.hbm [shape: f32[200,128], index: 5, kind: output, shape index: {}]
  %s6 = sld [smem:[#allocation0]]
  $region46: #{tpu_custom_call.1} parent=0
    _
  %s8 = ssub.s32 1, %s6
  %s9 = scalar_select 0, %s8, %s6
  $region1: #{tpu_custom_call.1} parent=0
    #allocation2 [shape = 'u8[102400]{0}', space=vmem, size = 0x19000, scoped, tag = 'input window, operand 0, single buffered']
    #allocation3 [shape = 's32[1]{0}', space=sflag, size = 0x4, scoped, tag = 'scoped memory for tpu_custom_call.1']
    #allocation4 [shape = 's32[1]{0}', space=sflag, size = 0x4, scoped, tag = 'scoped memory for tpu_custom_call.1']
    #allocation5 [shape = 'u8[32768]{0}', space=vmem, size = 0x8000, scoped, tag = 'input window, operand 1, single buffered']
    #allocation6 [shape = 's32[1]{0}', space=sflag, size = 0x4, scoped, tag = 'scoped memory for tpu_custom_call.1']
    #allocation7 [shape = 'u8[2048]{0}', space=vmem, size = 0x800, scoped, tag = 'input window, operand 2, single buffered']
    #allocation8 [shape = 'u8[32768]{0}', space=vmem, size = 0x8000, scoped, tag = 'input window, operand 3, single buffered']
    #allocation9 [shape = 's32[1]{0}', space=sflag, size = 0x4, scoped, tag = 'scoped memory for tpu_custom_call.1']
    #allocation10 [shape = 'u8[102400]{0}', space=vmem, size = 0x19000, scoped, tag = 'output window, operand 0, single buffered']
    %10 = vsyncpa [#allocation3], 0
    %11 = vsyncpa [#allocation6], 0
    %12 = vsyncpa [#allocation9], 0
    %13 = vsyncpa [#allocation4], 0
    // Predicated region
    $region2: #{tpu_custom_call.1} parent=1 // pred_check
      _
    $region3: #{tpu_custom_call.1} parent=1 // pred_check_branch
      %15 = sbr.rel (0) target = $region5
    $region4: #{tpu_custom_call.1} parent=1 // pred_region
      %s17 = ssub.s32 3200, 3200
      %18 = vsyncadd [#allocation3], %s17
      %s19 = sshll.u32 [#allocation2], 4
      %s20 = int_to_ptr.vmem [resolvable:$true] %s19
      %25 = dma.hbm_to_vmem [thread:$0]  %s0, 3200, %s20, [#allocation3], 128, 128, 8
    $region5: #{tpu_custom_call.1} parent=1 // pred_fallthru
      _
    // Predicated region
    $region6: #{tpu_custom_call.1} parent=1 // pred_check
      _
    $region7: #{tpu_custom_call.1} parent=1 // pred_check_branch
      %27 = sbr.rel (0) target = $region9
    $region8: #{tpu_custom_call.1} parent=1 // pred_region
      %s29 = ssub.s32 1024, 1024
      %30 = vsyncadd [#allocation6], %s29
      %s31 = sshll.u32 [#allocation5], 4
      %s32 = int_to_ptr.vmem [resolvable:$true] %s31
      %37 = dma.hbm_to_vmem [thread:$0]  %s1, 1024, %s32, [#allocation6], 64, 64, 4
    $region9: #{tpu_custom_call.1} parent=1 // pred_fallthru
      _
    // Predicated region
    $region10: #{tpu_custom_call.1} parent=1 // pred_check
      _
    $region11: #{tpu_custom_call.1} parent=1 // pred_check_branch
      %39 = sbr.rel (0) target = $region13
    $region12: #{tpu_custom_call.1} parent=1 // pred_region
      %s41 = ssub.s32 64, 64
      %42 = vsyncadd [#allocation6], %s41
      %s44 = sshll.u32 [#allocation7], 4
      %s45 = int_to_ptr.vmem [resolvable:$true] %s44
      %47 = dma.hbm_to_vmem [thread:$0]  %s2, 64, %s45, [#allocation6]
    $region13: #{tpu_custom_call.1} parent=1 // pred_fallthru
      _
    // Predicated region
    $region14: #{tpu_custom_call.1} parent=1 // pred_check
      _
    $region15: #{tpu_custom_call.1} parent=1 // pred_check_branch
      %49 = sbr.rel (0) target = $region17
    $region16: #{tpu_custom_call.1} parent=1 // pred_region
      %s51 = ssub.s32 1024, 1024
      %52 = vsyncadd [#allocation9], %s51
      %s53 = sshll.u32 [#allocation8], 4
      %s54 = int_to_ptr.vmem [resolvable:$true] %s53
      %59 = dma.hbm_to_vmem [thread:$0]  %s3, 1024, %s54, [#allocation9], 64, 64, 4
    $region17: #{tpu_custom_call.1} parent=1 // pred_fallthru
      _
    // Predicated region
    $region18: #{tpu_custom_call.1} parent=1 // pred_check
      _
    $region19: #{tpu_custom_call.1} parent=1 // pred_check_branch
      %61 = sbr.rel (0) target = $region21
    $region20: #{tpu_custom_call.1} parent=1 // pred_region
      _
    $region21: #{tpu_custom_call.1} parent=1 // pred_fallthru
      _
    // Predicated region
    $region22: #{tpu_custom_call.1} parent=1 // pred_check
      _
    $region23: #{tpu_custom_call.1} parent=1 // pred_check_branch
      %63 = sbr.rel (0) target = $region25
    $region24: #{tpu_custom_call.1} parent=1 // pred_region
      %64 = dma.done [#allocation3], 3200
    $region25: #{tpu_custom_call.1} parent=1 // pred_fallthru
      _
    // Predicated region
    $region26: #{tpu_custom_call.1} parent=1 // pred_check
      _
    $region27: #{tpu_custom_call.1} parent=1 // pred_check_branch
      %66 = sbr.rel (0) target = $region29
    $region28: #{tpu_custom_call.1} parent=1 // pred_region
      %67 = dma.done [#allocation6], 1024
    $region29: #{tpu_custom_call.1} parent=1 // pred_fallthru
      _
    // Predicated region
    $region30: #{tpu_custom_call.1} parent=1 // pred_check
      _
    $region31: #{tpu_custom_call.1} parent=1 // pred_check_branch
      %69 = sbr.rel (0) target = $region33
    $region32: #{tpu_custom_call.1} parent=1 // pred_region
      %70 = dma.done [#allocation6], 64
    $region33: #{tpu_custom_call.1} parent=1 // pred_fallthru
      _
    // Predicated region
    $region34: #{tpu_custom_call.1} parent=1 // pred_check
      _
    $region35: #{tpu_custom_call.1} parent=1 // pred_check_branch
      %72 = sbr.rel (0) target = $region37
    $region36: #{tpu_custom_call.1} parent=1 // pred_region
      %73 = dma.done [#allocation9], 1024
    $region37: #{tpu_custom_call.1} parent=1 // pred_fallthru
      _
    %v75 = vld [vmem:[#allocation2] sm:$0xff]
    %v76 = vld [vmem:[#allocation2 + $0x8] sm:$0xff]
    %v77 = vld [vmem:[#allocation2 + $0x10] sm:$0xff]
    %v78 = vld [vmem:[#allocation2 + $0x18] sm:$0xff]
    %v79 = vld [vmem:[#allocation2 + $0x20] sm:$0xff]
    %v80 = vld [vmem:[#allocation2 + $0x28] sm:$0xff]
    %v81 = vld [vmem:[#allocation2 + $0x30] sm:$0xff]
    %v82 = vld [vmem:[#allocation2 + $0x38] sm:$0xff]
    %v83 = vld [vmem:[#allocation2 + $0x40] sm:$0xff]
    %v84 = vld [vmem:[#allocation2 + $0x48] sm:$0xff]
    %v85 = vld [vmem:[#allocation2 + $0x50] sm:$0xff]
    %v86 = vld [vmem:[#allocation2 + $0x58] sm:$0xff]
    %v87 = vld [vmem:[#allocation2 + $0x60] sm:$0xff]
    %v88 = vld [vmem:[#allocation2 + $0x68] sm:$0xff]
    %v89 = vld [vmem:[#allocation2 + $0x70] sm:$0xff]
    %v90 = vld [vmem:[#allocation2 + $0x78] sm:$0xff]
    %v91 = vld [vmem:[#allocation2 + $0x80] sm:$0xff]
    %v92 = vld [vmem:[#allocation2 + $0x88] sm:$0xff]
    %v93 = vld [vmem:[#allocation2 + $0x90] sm:$0xff]
    %v94 = vld [vmem:[#allocation2 + $0x98] sm:$0xff]
    %v95 = vld [vmem:[#allocation2 + $0xa0] sm:$0xff]
    %v96 = vld [vmem:[#allocation2 + $0xa8] sm:$0xff]
    %v97 = vld [vmem:[#allocation2 + $0xb0] sm:$0xff]
    %v98 = vld [vmem:[#allocation2 + $0xb8] sm:$0xff]
    %v99 = vld [vmem:[#allocation2 + $0xc0] sm:$0xff]
    %v100 = vpack.c.bf16 %v76, %v75
    %v101 = vpack.c.bf16 %v78, %v77
    %v102 = vpack.c.bf16 %v80, %v79
    %v103 = vpack.c.bf16 %v82, %v81
    %v104 = vpack.c.bf16 %v84, %v83
    %v105 = vpack.c.bf16 %v86, %v85
    %v106 = vpack.c.bf16 %v88, %v87
    %v107 = vpack.c.bf16 %v90, %v89
    %v108 = vpack.c.bf16 %v92, %v91
    %v109 = vpack.c.bf16 %v94, %v93
    %v110 = vpack.c.bf16 %v96, %v95
    %v111 = vpack.c.bf16 %v98, %v97
    %v112 = vpack.c.bf16 %v99, %v99
    %v113 = vld [vmem:[#allocation5] sm:$0xf]
    %v114 = vld [vmem:[#allocation5 + $0x4] sm:$0xf]
    %v115 = vld [vmem:[#allocation5 + $0x8] sm:$0xf]
    %v116 = vld [vmem:[#allocation5 + $0xc] sm:$0xf]
    %v117 = vld [vmem:[#allocation5 + $0x10] sm:$0xf]
    %v118 = vld [vmem:[#allocation5 + $0x14] sm:$0xf]
    %v119 = vld [vmem:[#allocation5 + $0x18] sm:$0xf]
    %v120 = vld [vmem:[#allocation5 + $0x1c] sm:$0xf]
    %v121 = vld [vmem:[#allocation5 + $0x20] sm:$0xf]
    %v122 = vld [vmem:[#allocation5 + $0x24] sm:$0xf]
    %v123 = vld [vmem:[#allocation5 + $0x28] sm:$0xf]
    %v124 = vld [vmem:[#allocation5 + $0x2c] sm:$0xf]
    %v125 = vld [vmem:[#allocation5 + $0x30] sm:$0xf]
    %v126 = vld [vmem:[#allocation5 + $0x34] sm:$0xf]
    %v127 = vld [vmem:[#allocation5 + $0x38] sm:$0xf]
    %v128 = vld [vmem:[#allocation5 + $0x3c] sm:$0xf]
    %v129 = vld [vmem:[#allocation7] sm:$0x7]
    %v130 = vlaneseq
    %v131 = vshrl.u32 %v130, 7
    %v132 = vsub.s32 0, %v131
    %v133 = vrot.slane %v129, %v132
    %v150 = vunpack.c.l.b16 %v113
    %v151 = vunpack.c.l.b16 %v114
    %v152 = vunpack.c.l.b16 %v115
    %v153 = vunpack.c.l.b16 %v116
    %v154 = vunpack.c.l.b16 %v117
    %v155 = vunpack.c.l.b16 %v118
    %v156 = vunpack.c.l.b16 %v119
    %v157 = vunpack.c.l.b16 %v120
    %v158 = vunpack.c.l.b16 %v121
    %v159 = vunpack.c.l.b16 %v122
    %v160 = vunpack.c.l.b16 %v123
    %v161 = vunpack.c.l.b16 %v124
    %v162 = vunpack.c.l.b16 %v125
    %v163 = vunpack.c.l.b16 %v126
    %v164 = vunpack.c.l.b16 %v127
    %v165 = vunpack.c.l.b16 %v128
    %v166 = vpack.c.b16 %v151, %v150
    %v167 = vpack.c.b16 %v153, %v152
    %v168 = vpack.c.b16 %v155, %v154
    %v169 = vpack.c.b16 %v157, %v156
    %v170 = vpack.c.b16 %v159, %v158
    %v171 = vpack.c.b16 %v161, %v160
    %v172 = vpack.c.b16 %v163, %v162
    %v173 = vpack.c.b16 %v165, %v164
    %182 = vmatprep.subr.bf16.mxu0 0
    %183 = vmatpush1.bf16.msra.mxu0 %v173
    %184 = vmatprep.subr.bf16.mxu0 0
    %185 = vmatpush1.bf16.msra.mxu0 %v172
    %186 = vmatprep.subr.bf16.mxu0 0
    %187 = vmatpush1.bf16.msra.mxu0 %v171
    %188 = vmatprep.subr.bf16.mxu0 0
    %189 = vmatpush1.bf16.msra.mxu0 %v170
    %190 = vmatprep.subr.bf16.mxu0 0
    %191 = vmatpush1.bf16.msra.mxu0 %v169
    %192 = vmatprep.subr.bf16.mxu0 0
    %193 = vmatpush1.bf16.msra.mxu0 %v168
    %194 = vmatprep.subr.bf16.mxu0 0
    %195 = vmatpush1.bf16.msra.mxu0 %v167
    %196 = vmatprep.subr.bf16.mxu0 0
    %197 = vmatpush1.bf16.msra.mxu0 %v166
    %198 = vmatprep.subr.bf16.mxu0 0
    %199 = vmatpush2.bf16.msra.mxu0 0
    %200 = vmatprep.subr.bf16.mxu0 0
    %201 = vmatpush2.bf16.msra.mxu0 0
    %202 = vmatprep.subr.bf16.mxu0 0
    %203 = vmatpush2.bf16.msra.mxu0 0
    %204 = vmatprep.subr.bf16.mxu0 0
    %205 = vmatpush2.bf16.msra.mxu0 0
    %206 = vmatprep.subr.bf16.mxu0 0
    %207 = vmatpush2.bf16.msra.mxu0 0
    %208 = vmatprep.subr.bf16.mxu0 0
    %209 = vmatpush2.bf16.msra.mxu0 0
    %210 = vmatprep.subr.bf16.mxu0 0
    %211 = vmatpush2.bf16.msra.mxu0 0
    %212 = vmatprep.subr.bf16.mxu0 0
    %213 = vmatpush2.bf16.msra.mxu0 0
    %214 = vmatprep.mubr.bf16.mxu0 0
    %215 = vmatmul.mubr.bf16.gmra.mxu0 %v100
    %v216 = vpop.f32.mrf.mxu0
    %v217 = vadd.f32 %v133, %v216
    %v218 = vpop.f32.mrf.mxu0
    %v219 = vpop.f32.mrf.mxu0
    %v220 = vadd.f32 %v133, %v219
    %v221 = vpop.f32.mrf.mxu0
    %222 = vmatprep.mubr.bf16.mxu0 0
    %223 = vmatmul.mubr.bf16.gmra.mxu0 %v101
    %v224 = vpop.f32.mrf.mxu0
    %v225 = vadd.f32 %v133, %v224
    %v226 = vpop.f32.mrf.mxu0
    %v227 = vpop.f32.mrf.mxu0
    %v228 = vadd.f32 %v133, %v227
    %v229 = vpop.f32.mrf.mxu0
    %230 = vmatprep.mubr.bf16.mxu0 0
    %231 = vmatmul.mubr.bf16.gmra.mxu0 %v102
    %v232 = vpop.f32.mrf.mxu0
    %v233 = vadd.f32 %v133, %v232
    %v234 = vpop.f32.mrf.mxu0
    %v235 = vpop.f32.mrf.mxu0
    %v236 = vadd.f32 %v133, %v235
    %v237 = vpop.f32.mrf.mxu0
    %238 = vmatprep.mubr.bf16.mxu0 0
    %239 = vmatmul.mubr.bf16.gmra.mxu0 %v103
    %v240 = vpop.f32.mrf.mxu0
    %v241 = vadd.f32 %v133, %v240
    %v242 = vpop.f32.mrf.mxu0
    %v243 = vpop.f32.mrf.mxu0
    %v244 = vadd.f32 %v133, %v243
    %v245 = vpop.f32.mrf.mxu0
    %246 = vmatprep.mubr.bf16.mxu0 0
    %247 = vmatmul.mubr.bf16.gmra.mxu0 %v104
    %v248 = vpop.f32.mrf.mxu0
    %v249 = vadd.f32 %v133, %v248
    %v250 = vpop.f32.mrf.mxu0
    %v251 = vpop.f32.mrf.mxu0
    %v252 = vadd.f32 %v133, %v251
    %v253 = vpop.f32.mrf.mxu0
    %254 = vmatprep.mubr.bf16.mxu0 0
    %255 = vmatmul.mubr.bf16.gmra.mxu0 %v105
    %v256 = vpop.f32.mrf.mxu0
    %v257 = vadd.f32 %v133, %v256
    %v258 = vpop.f32.mrf.mxu0
    %v259 = vpop.f32.mrf.mxu0
    %v260 = vadd.f32 %v133, %v259
    %v261 = vpop.f32.mrf.mxu0
    %262 = vmatprep.mubr.bf16.mxu0 0
    %263 = vmatmul.mubr.bf16.gmra.mxu0 %v106
    %v264 = vpop.f32.mrf.mxu0
    %v265 = vadd.f32 %v133, %v264
    %v266 = vpop.f32.mrf.mxu0
    %v267 = vpop.f32.mrf.mxu0
    %v268 = vadd.f32 %v133, %v267
    %v269 = vpop.f32.mrf.mxu0
    %270 = vmatprep.mubr.bf16.mxu0 0
    %271 = vmatmul.mubr.bf16.gmra.mxu0 %v107
    %v272 = vpop.f32.mrf.mxu0
    %v273 = vadd.f32 %v133, %v272
    %v274 = vpop.f32.mrf.mxu0
    %v275 = vpop.f32.mrf.mxu0
    %v276 = vadd.f32 %v133, %v275
    %v277 = vpop.f32.mrf.mxu0
    %278 = vmatprep.mubr.bf16.mxu0 0
    %279 = vmatmul.mubr.bf16.gmra.mxu0 %v108
    %v280 = vpop.f32.mrf.mxu0
    %v281 = vadd.f32 %v133, %v280
    %v282 = vpop.f32.mrf.mxu0
    %v283 = vpop.f32.mrf.mxu0
    %v284 = vadd.f32 %v133, %v283
    %v285 = vpop.f32.mrf.mxu0
    %286 = vmatprep.mubr.bf16.mxu0 0
    %287 = vmatmul.mubr.bf16.gmra.mxu0 %v109
    %v288 = vpop.f32.mrf.mxu0
    %v289 = vadd.f32 %v133, %v288
    %v290 = vpop.f32.mrf.mxu0
    %v291 = vpop.f32.mrf.mxu0
    %v292 = vadd.f32 %v133, %v291
    %v293 = vpop.f32.mrf.mxu0
    %294 = vmatprep.mubr.bf16.mxu0 0
    %295 = vmatmul.mubr.bf16.gmra.mxu0 %v110
    %v296 = vpop.f32.mrf.mxu0
    %v297 = vadd.f32 %v133, %v296
    %v298 = vpop.f32.mrf.mxu0
    %v299 = vpop.f32.mrf.mxu0
    %v300 = vadd.f32 %v133, %v299
    %v301 = vpop.f32.mrf.mxu0
    %302 = vmatprep.mubr.bf16.mxu0 0
    %303 = vmatmul.mubr.bf16.gmra.mxu0 %v111
    %v304 = vpop.f32.mrf.mxu0
    %v305 = vadd.f32 %v133, %v304
    %v306 = vpop.f32.mrf.mxu0
    %v307 = vpop.f32.mrf.mxu0
    %v308 = vadd.f32 %v133, %v307
    %v309 = vpop.f32.mrf.mxu0
    %310 = vmatprep.mubr.bf16.mxu0 0
    %311 = vmatmul.mubr.bf16.gmra.mxu0 %v112
    %v312 = vpop.f32.mrf.mxu0
    %v313 = vadd.f32 %v133, %v312
    %v314 = vpop.f32.mrf.mxu0
    %v315 = vpop.f32.mrf.mxu0
    %v316 = vpop.f32.mrf.mxu0
    %317 = vdwg.mxu0
    %318 = vadd.xlane.f32.xlu0 %v217
    %v319 = vpop.xlane.xlu0 %318
    %320 = vadd.xlane.f32.xlu0 %v220
    %v321 = vpop.xlane.xlu0 %320
    %322 = vadd.xlane.f32.xlu0 %v225
    %v323 = vpop.xlane.xlu0 %322
    %324 = vadd.xlane.f32.xlu0 %v228
    %v325 = vpop.xlane.xlu0 %324
    %326 = vadd.xlane.f32.xlu0 %v233
    %v327 = vpop.xlane.xlu0 %326
    %328 = vadd.xlane.f32.xlu0 %v236
    %v329 = vpop.xlane.xlu0 %328
    %330 = vadd.xlane.f32.xlu0 %v241
    %v331 = vpop.xlane.xlu0 %330
    %332 = vadd.xlane.f32.xlu0 %v244
    %v333 = vpop.xlane.xlu0 %332
    %334 = vadd.xlane.f32.xlu0 %v249
    %v335 = vpop.xlane.xlu0 %334
    %336 = vadd.xlane.f32.xlu0 %v252
    %v337 = vpop.xlane.xlu0 %336
    %338 = vadd.xlane.f32.xlu0 %v257
    %v339 = vpop.xlane.xlu0 %338
    %340 = vadd.xlane.f32.xlu0 %v260
    %v341 = vpop.xlane.xlu0 %340
    %342 = vadd.xlane.f32.xlu0 %v265
    %v343 = vpop.xlane.xlu0 %342
    %344 = vadd.xlane.f32.xlu0 %v268
    %v345 = vpop.xlane.xlu0 %344
    %346 = vadd.xlane.f32.xlu0 %v273
    %v347 = vpop.xlane.xlu0 %346
    %348 = vadd.xlane.f32.xlu0 %v276
    %v349 = vpop.xlane.xlu0 %348
    %350 = vadd.xlane.f32.xlu0 %v281
    %v351 = vpop.xlane.xlu0 %350
    %352 = vadd.xlane.f32.xlu0 %v284
    %v353 = vpop.xlane.xlu0 %352
    %354 = vadd.xlane.f32.xlu0 %v289
    %v355 = vpop.xlane.xlu0 %354
    %356 = vadd.xlane.f32.xlu0 %v292
    %v357 = vpop.xlane.xlu0 %356
    %358 = vadd.xlane.f32.xlu0 %v297
    %v359 = vpop.xlane.xlu0 %358
    %360 = vadd.xlane.f32.xlu0 %v300
    %v361 = vpop.xlane.xlu0 %360
    %362 = vadd.xlane.f32.xlu0 %v305
    %v363 = vpop.xlane.xlu0 %362
    %364 = vadd.xlane.f32.xlu0 %v308
    %v365 = vpop.xlane.xlu0 %364
    %366 = vadd.xlane.f32.xlu0 %v313
    %v367 = vpop.xlane.xlu0 %366
    %v368 = vmul.f32 %v319, 0.010416667
    %v369 = vmul.f32 %v321, 0.010416667
    %v370 = vmul.f32 %v323, 0.010416667
    %v371 = vmul.f32 %v325, 0.010416667
    %v372 = vmul.f32 %v327, 0.010416667
    %v373 = vmul.f32 %v329, 0.010416667
    %v374 = vmul.f32 %v331, 0.010416667
    %v375 = vmul.f32 %v333, 0.010416667
    %v376 = vmul.f32 %v335, 0.010416667
    %v377 = vmul.f32 %v337, 0.010416667
    %v378 = vmul.f32 %v339, 0.010416667
    %v379 = vmul.f32 %v341, 0.010416667
    %v380 = vmul.f32 %v343, 0.010416667
    %v381 = vmul.f32 %v345, 0.010416667
    %v382 = vmul.f32 %v347, 0.010416667
    %v383 = vmul.f32 %v349, 0.010416667
    %v384 = vmul.f32 %v351, 0.010416667
    %v385 = vmul.f32 %v353, 0.010416667
    %v386 = vmul.f32 %v355, 0.010416667
    %v387 = vmul.f32 %v357, 0.010416667
    %v388 = vmul.f32 %v359, 0.010416667
    %v389 = vmul.f32 %v361, 0.010416667
    %v390 = vmul.f32 %v363, 0.010416667
    %v391 = vmul.f32 %v365, 0.010416667
    %v392 = vmul.f32 %v367, 0.010416667
    %v393 = vmul.f32 %v217, %v217
    %v394 = vmul.f32 %v220, %v220
    %v395 = vmul.f32 %v225, %v225
    %v396 = vmul.f32 %v228, %v228
    %v397 = vmul.f32 %v233, %v233
    %v398 = vmul.f32 %v236, %v236
    %v399 = vmul.f32 %v241, %v241
    %v400 = vmul.f32 %v244, %v244
    %v401 = vmul.f32 %v249, %v249
    %v402 = vmul.f32 %v252, %v252
    %v403 = vmul.f32 %v257, %v257
    %v404 = vmul.f32 %v260, %v260
    %v405 = vmul.f32 %v265, %v265
    %v406 = vmul.f32 %v268, %v268
    %v407 = vmul.f32 %v273, %v273
    %v408 = vmul.f32 %v276, %v276
    %v409 = vmul.f32 %v281, %v281
    %v410 = vmul.f32 %v284, %v284
    %v411 = vmul.f32 %v289, %v289
    %v412 = vmul.f32 %v292, %v292
    %v413 = vmul.f32 %v297, %v297
    %v414 = vmul.f32 %v300, %v300
    %v415 = vmul.f32 %v305, %v305
    %v416 = vmul.f32 %v308, %v308
    %v417 = vmul.f32 %v313, %v313
    %418 = vadd.xlane.f32.xlu0 %v393
    %v419 = vpop.xlane.xlu0 %418
    %420 = vadd.xlane.f32.xlu0 %v394
    %v421 = vpop.xlane.xlu0 %420
    %422 = vadd.xlane.f32.xlu0 %v395
    %v423 = vpop.xlane.xlu0 %422
    %424 = vadd.xlane.f32.xlu0 %v396
    %v425 = vpop.xlane.xlu0 %424
    %426 = vadd.xlane.f32.xlu0 %v397
    %v427 = vpop.xlane.xlu0 %426
    %428 = vadd.xlane.f32.xlu0 %v398
    %v429 = vpop.xlane.xlu0 %428
    %430 = vadd.xlane.f32.xlu0 %v399
    %v431 = vpop.xlane.xlu0 %430
    %432 = vadd.xlane.f32.xlu0 %v400
    %v433 = vpop.xlane.xlu0 %432
    %434 = vadd.xlane.f32.xlu0 %v401
    %v435 = vpop.xlane.xlu0 %434
    %436 = vadd.xlane.f32.xlu0 %v402
    %v437 = vpop.xlane.xlu0 %436
    %438 = vadd.xlane.f32.xlu0 %v403
    %v439 = vpop.xlane.xlu0 %438
    %440 = vadd.xlane.f32.xlu0 %v404
    %v441 = vpop.xlane.xlu0 %440
    %442 = vadd.xlane.f32.xlu0 %v405
    %v443 = vpop.xlane.xlu0 %442
    %444 = vadd.xlane.f32.xlu0 %v406
    %v445 = vpop.xlane.xlu0 %444
    %446 = vadd.xlane.f32.xlu0 %v407
    %v447 = vpop.xlane.xlu0 %446
    %448 = vadd.xlane.f32.xlu0 %v408
    %v449 = vpop.xlane.xlu0 %448
    %450 = vadd.xlane.f32.xlu0 %v409
    %v451 = vpop.xlane.xlu0 %450
    %452 = vadd.xlane.f32.xlu0 %v410
    %v453 = vpop.xlane.xlu0 %452
    %454 = vadd.xlane.f32.xlu0 %v411
    %v455 = vpop.xlane.xlu0 %454
    %456 = vadd.xlane.f32.xlu0 %v412
    %v457 = vpop.xlane.xlu0 %456
    %458 = vadd.xlane.f32.xlu0 %v413
    %v459 = vpop.xlane.xlu0 %458
    %460 = vadd.xlane.f32.xlu0 %v414
    %v461 = vpop.xlane.xlu0 %460
    %462 = vadd.xlane.f32.xlu0 %v415
    %v463 = vpop.xlane.xlu0 %462
    %464 = vadd.xlane.f32.xlu0 %v416
    %v465 = vpop.xlane.xlu0 %464
    %466 = vadd.xlane.f32.xlu0 %v417
    %v467 = vpop.xlane.xlu0 %466
    %v468 = vmul.f32 %v419, 0.010416667
    %v469 = vmul.f32 %v421, 0.010416667
    %v470 = vmul.f32 %v423, 0.010416667
    %v471 = vmul.f32 %v425, 0.010416667
    %v472 = vmul.f32 %v427, 0.010416667
    %v473 = vmul.f32 %v429, 0.010416667
    %v474 = vmul.f32 %v431, 0.010416667
    %v475 = vmul.f32 %v433, 0.010416667
    %v476 = vmul.f32 %v435, 0.010416667
    %v477 = vmul.f32 %v437, 0.010416667
    %v478 = vmul.f32 %v439, 0.010416667
    %v479 = vmul.f32 %v441, 0.010416667
    %v480 = vmul.f32 %v443, 0.010416667
    %v481 = vmul.f32 %v445, 0.010416667
    %v482 = vmul.f32 %v447, 0.010416667
    %v483 = vmul.f32 %v449, 0.010416667
    %v484 = vmul.f32 %v451, 0.010416667
    %v485 = vmul.f32 %v453, 0.010416667
    %v486 = vmul.f32 %v455, 0.010416667
    %v487 = vmul.f32 %v457, 0.010416667
    %v488 = vmul.f32 %v459, 0.010416667
    %v489 = vmul.f32 %v461, 0.010416667
    %v490 = vmul.f32 %v463, 0.010416667
    %v491 = vmul.f32 %v465, 0.010416667
    %v492 = vmul.f32 %v467, 0.010416667
    %v493 = vmul.f32 %v368, %v368
    %v494 = vmul.f32 %v369, %v369
    %v495 = vmul.f32 %v370, %v370
    %v496 = vmul.f32 %v371, %v371
    %v497 = vmul.f32 %v372, %v372
    %v498 = vmul.f32 %v373, %v373
    %v499 = vmul.f32 %v374, %v374
    %v500 = vmul.f32 %v375, %v375
    %v501 = vmul.f32 %v376, %v376
    %v502 = vmul.f32 %v377, %v377
    %v503 = vmul.f32 %v378, %v378
    %v504 = vmul.f32 %v379, %v379
    %v505 = vmul.f32 %v380, %v380
    %v506 = vmul.f32 %v381, %v381
    %v507 = vmul.f32 %v382, %v382
    %v508 = vmul.f32 %v383, %v383
    %v509 = vmul.f32 %v384, %v384
    %v510 = vmul.f32 %v385, %v385
    %v511 = vmul.f32 %v386, %v386
    %v512 = vmul.f32 %v387, %v387
    %v513 = vmul.f32 %v388, %v388
    %v514 = vmul.f32 %v389, %v389
    %v515 = vmul.f32 %v390, %v390
    %v516 = vmul.f32 %v391, %v391
    %v517 = vmul.f32 %v392, %v392
    %v518 = vsub.f32 %v468, %v493
    %v519 = vsub.f32 %v469, %v494
    %v520 = vsub.f32 %v470, %v495
    %v521 = vsub.f32 %v471, %v496
    %v522 = vsub.f32 %v472, %v497
    %v523 = vsub.f32 %v473, %v498
    %v524 = vsub.f32 %v474, %v499
    %v525 = vsub.f32 %v475, %v500
    %v526 = vsub.f32 %v476, %v501
    %v527 = vsub.f32 %v477, %v502
    %v528 = vsub.f32 %v478, %v503
    %v529 = vsub.f32 %v479, %v504
    %v530 = vsub.f32 %v480, %v505
    %v531 = vsub.f32 %v481, %v506
    %v532 = vsub.f32 %v482, %v507
    %v533 = vsub.f32 %v483, %v508
    %v534 = vsub.f32 %v484, %v509
    %v535 = vsub.f32 %v485, %v510
    %v536 = vsub.f32 %v486, %v511
    %v537 = vsub.f32 %v487, %v512
    %v538 = vsub.f32 %v488, %v513
    %v539 = vsub.f32 %v489, %v514
    %v540 = vsub.f32 %v490, %v515
    %v541 = vsub.f32 %v491, %v516
    %v542 = vsub.f32 %v492, %v517
    %v543 = vadd.f32 %v518, 1e-05
    %v544 = vadd.f32 %v519, 1e-05
    %v545 = vadd.f32 %v520, 1e-05
    %v546 = vadd.f32 %v521, 1e-05
    %v547 = vadd.f32 %v522, 1e-05
    %v548 = vadd.f32 %v523, 1e-05
    %v549 = vadd.f32 %v524, 1e-05
    %v550 = vadd.f32 %v525, 1e-05
    %v551 = vadd.f32 %v526, 1e-05
    %v552 = vadd.f32 %v527, 1e-05
    %v553 = vadd.f32 %v528, 1e-05
    %v554 = vadd.f32 %v529, 1e-05
    %v555 = vadd.f32 %v530, 1e-05
    %v556 = vadd.f32 %v531, 1e-05
    %v557 = vadd.f32 %v532, 1e-05
    %v558 = vadd.f32 %v533, 1e-05
    %v559 = vadd.f32 %v534, 1e-05
    %v560 = vadd.f32 %v535, 1e-05
    %v561 = vadd.f32 %v536, 1e-05
    %v562 = vadd.f32 %v537, 1e-05
    %v563 = vadd.f32 %v538, 1e-05
    %v564 = vadd.f32 %v539, 1e-05
    %v565 = vadd.f32 %v540, 1e-05
    %v566 = vadd.f32 %v541, 1e-05
    %v567 = vadd.f32 %v542, 1e-05
    %v568 = vrsqrt.pop %v543
    %v569 = vrsqrt.pop %v544
    %v570 = vrsqrt.pop %v545
    %v571 = vrsqrt.pop %v546
    %v572 = vrsqrt.pop %v547
    %v573 = vrsqrt.pop %v548
    %v574 = vrsqrt.pop %v549
    %v575 = vrsqrt.pop %v550
    %v576 = vrsqrt.pop %v551
    %v577 = vrsqrt.pop %v552
    %v578 = vrsqrt.pop %v553
    %v579 = vrsqrt.pop %v554
    %v580 = vrsqrt.pop %v555
    %v581 = vrsqrt.pop %v556
    %v582 = vrsqrt.pop %v557
    %v583 = vrsqrt.pop %v558
    %v584 = vrsqrt.pop %v559
    %v585 = vrsqrt.pop %v560
    %v586 = vrsqrt.pop %v561
    %v587 = vrsqrt.pop %v562
    %v588 = vrsqrt.pop %v563
    %v589 = vrsqrt.pop %v564
    %v590 = vrsqrt.pop %v565
    %v591 = vrsqrt.pop %v566
    %v592 = vrsqrt.pop %v567
    %v593 = vsub.f32 %v217, %v368
    %v594 = vsub.f32 %v220, %v369
    %v595 = vsub.f32 %v225, %v370
    %v596 = vsub.f32 %v228, %v371
    %v597 = vsub.f32 %v233, %v372
    %v598 = vsub.f32 %v236, %v373
    %v599 = vsub.f32 %v241, %v374
    %v600 = vsub.f32 %v244, %v375
    %v601 = vsub.f32 %v249, %v376
    %v602 = vsub.f32 %v252, %v377
    %v603 = vsub.f32 %v257, %v378
    %v604 = vsub.f32 %v260, %v379
    %v605 = vsub.f32 %v265, %v380
    %v606 = vsub.f32 %v268, %v381
    %v607 = vsub.f32 %v273, %v382
    %v608 = vsub.f32 %v276, %v383
    %v609 = vsub.f32 %v281, %v384
    %v610 = vsub.f32 %v284, %v385
    %v611 = vsub.f32 %v289, %v386
    %v612 = vsub.f32 %v292, %v387
    %v613 = vsub.f32 %v297, %v388
    %v614 = vsub.f32 %v300, %v389
    %v615 = vsub.f32 %v305, %v390
    %v616 = vsub.f32 %v308, %v391
    %v617 = vsub.f32 %v313, %v392
    %v618 = vmul.f32 %v593, %v568
    %v619 = vmul.f32 %v594, %v569
    %v620 = vmul.f32 %v595, %v570
    %v621 = vmul.f32 %v596, %v571
    %v622 = vmul.f32 %v597, %v572
    %v623 = vmul.f32 %v598, %v573
    %v624 = vmul.f32 %v599, %v574
    %v625 = vmul.f32 %v600, %v575
    %v626 = vmul.f32 %v601, %v576
    %v627 = vmul.f32 %v602, %v577
    %v628 = vmul.f32 %v603, %v578
    %v629 = vmul.f32 %v604, %v579
    %v630 = vmul.f32 %v605, %v580
    %v631 = vmul.f32 %v606, %v581
    %v632 = vmul.f32 %v607, %v582
    %v633 = vmul.f32 %v608, %v583
    %v634 = vmul.f32 %v609, %v584
    %v635 = vmul.f32 %v610, %v585
    %v636 = vmul.f32 %v611, %v586
    %v637 = vmul.f32 %v612, %v587
    %v638 = vmul.f32 %v613, %v588
    %v639 = vmul.f32 %v614, %v589
    %v640 = vmul.f32 %v615, %v590
    %v641 = vmul.f32 %v616, %v591
    %v642 = vmul.f32 %v617, %v592
    %v643 = vlaneseq
    %v644 = vshrl.u32 %v643, 7
    %v645 = vsub.s32 1, %v644
    %v646 = vrot.slane %v129, %v645
    %v647 = vmul.f32 %v618, %v646
    %v648 = vmul.f32 %v619, %v646
    %v649 = vmul.f32 %v620, %v646
    %v650 = vmul.f32 %v621, %v646
    %v651 = vmul.f32 %v622, %v646
    %v652 = vmul.f32 %v623, %v646
    %v653 = vmul.f32 %v624, %v646
    %v654 = vmul.f32 %v625, %v646
    %v655 = vmul.f32 %v626, %v646
    %v656 = vmul.f32 %v627, %v646
    %v657 = vmul.f32 %v628, %v646
    %v658 = vmul.f32 %v629, %v646
    %v659 = vmul.f32 %v630, %v646
    %v660 = vmul.f32 %v631, %v646
    %v661 = vmul.f32 %v632, %v646
    %v662 = vmul.f32 %v633, %v646
    %v663 = vmul.f32 %v634, %v646
    %v664 = vmul.f32 %v635, %v646
    %v665 = vmul.f32 %v636, %v646
    %v666 = vmul.f32 %v637, %v646
    %v667 = vmul.f32 %v638, %v646
    %v668 = vmul.f32 %v639, %v646
    %v669 = vmul.f32 %v640, %v646
    %v670 = vmul.f32 %v641, %v646
    %v671 = vmul.f32 %v642, %v646
    %v672 = vlaneseq
    %v673 = vshrl.u32 %v672, 7
    %v674 = vsub.s32 2, %v673
    %v675 = vrot.slane %v129, %v674
    %v676 = vadd.f32 %v647, %v675
    %v677 = vadd.f32 %v648, %v675
    %v678 = vadd.f32 %v649, %v675
    %v679 = vadd.f32 %v650, %v675
    %v680 = vadd.f32 %v651, %v675
    %v681 = vadd.f32 %v652, %v675
    %v682 = vadd.f32 %v653, %v675
    %v683 = vadd.f32 %v654, %v675
    %v684 = vadd.f32 %v655, %v675
    %v685 = vadd.f32 %v656, %v675
    %v686 = vadd.f32 %v657, %v675
    %v687 = vadd.f32 %v658, %v675
    %v688 = vadd.f32 %v659, %v675
    %v689 = vadd.f32 %v660, %v675
    %v690 = vadd.f32 %v661, %v675
    %v691 = vadd.f32 %v662, %v675
    %v692 = vadd.f32 %v663, %v675
    %v693 = vadd.f32 %v664, %v675
    %v694 = vadd.f32 %v665, %v675
    %v695 = vadd.f32 %v666, %v675
    %v696 = vadd.f32 %v667, %v675
    %v697 = vadd.f32 %v668, %v675
    %v698 = vadd.f32 %v669, %v675
    %v699 = vadd.f32 %v670, %v675
    %v700 = vadd.f32 %v671, %v675
    %v701 = vmax.f32 %v676, 0.0
    %v702 = vmax.f32 %v677, 0.0
    %v703 = vmax.f32 %v678, 0.0
    %v704 = vmax.f32 %v679, 0.0
    %v705 = vmax.f32 %v680, 0.0
    %v706 = vmax.f32 %v681, 0.0
    %v707 = vmax.f32 %v682, 0.0
    %v708 = vmax.f32 %v683, 0.0
    %v709 = vmax.f32 %v684, 0.0
    %v710 = vmax.f32 %v685, 0.0
    %v711 = vmax.f32 %v686, 0.0
    %v712 = vmax.f32 %v687, 0.0
    %v713 = vmax.f32 %v688, 0.0
    %v714 = vmax.f32 %v689, 0.0
    %v715 = vmax.f32 %v690, 0.0
    %v716 = vmax.f32 %v691, 0.0
    %v717 = vmax.f32 %v692, 0.0
    %v718 = vmax.f32 %v693, 0.0
    %v719 = vmax.f32 %v694, 0.0
    %v720 = vmax.f32 %v695, 0.0
    %v721 = vmax.f32 %v696, 0.0
    %v722 = vmax.f32 %v697, 0.0
    %v723 = vmax.f32 %v698, 0.0
    %v724 = vmax.f32 %v699, 0.0
    %v725 = vmax.f32 %v700, 0.0
    %v726 = vpack.c.bf16 %v702, %v701
    %v727 = vpack.c.bf16 %v704, %v703
    %v728 = vpack.c.bf16 %v706, %v705
    %v729 = vpack.c.bf16 %v708, %v707
    %v730 = vpack.c.bf16 %v710, %v709
    %v731 = vpack.c.bf16 %v712, %v711
    %v732 = vpack.c.bf16 %v714, %v713
    %v733 = vpack.c.bf16 %v716, %v715
    %v734 = vpack.c.bf16 %v718, %v717
    %v735 = vpack.c.bf16 %v720, %v719
    %v736 = vpack.c.bf16 %v722, %v721
    %v737 = vpack.c.bf16 %v724, %v723
    %v738 = vpack.c.bf16 %v725, %v725
    %v739 = vld [vmem:[#allocation8] sm:$0xf]
    %v740 = vld [vmem:[#allocation8 + $0x4] sm:$0xf]
    %v741 = vld [vmem:[#allocation8 + $0x8] sm:$0xf]
    %v742 = vld [vmem:[#allocation8 + $0xc] sm:$0xf]
    %v743 = vld [vmem:[#allocation8 + $0x10] sm:$0xf]
    %v744 = vld [vmem:[#allocation8 + $0x14] sm:$0xf]
    %v745 = vld [vmem:[#allocation8 + $0x18] sm:$0xf]
    %v746 = vld [vmem:[#allocation8 + $0x1c] sm:$0xf]
    %v747 = vld [vmem:[#allocation8 + $0x20] sm:$0xf]
    %v748 = vld [vmem:[#allocation8 + $0x24] sm:$0xf]
    %v749 = vld [vmem:[#allocation8 + $0x28] sm:$0xf]
    %v750 = vld [vmem:[#allocation8 + $0x2c] sm:$0xf]
    %v751 = vld [vmem:[#allocation8 + $0x30] sm:$0xf]
    %v752 = vld [vmem:[#allocation8 + $0x34] sm:$0xf]
    %v753 = vld [vmem:[#allocation8 + $0x38] sm:$0xf]
    %v754 = vld [vmem:[#allocation8 + $0x3c] sm:$0xf]
    %v755 = vld [vmem:[%s4] sm:$0x7]
    %v756 = vlaneseq
    %v757 = vshrl.u32 %v756, 7
    %v758 = vsub.s32 0, %v757
    %v759 = vrot.slane %v755, %v758
    %v776 = vunpack.c.l.b16 %v739
    %v777 = vunpack.c.l.b16 %v740
    %v778 = vunpack.c.l.b16 %v741
    %v779 = vunpack.c.l.b16 %v742
    %v780 = vunpack.c.l.b16 %v743
    %v781 = vunpack.c.l.b16 %v744
    %v782 = vunpack.c.l.b16 %v745
    %v783 = vunpack.c.l.b16 %v746
    %v784 = vunpack.c.l.b16 %v747
    %v785 = vunpack.c.l.b16 %v748
    %v786 = vunpack.c.l.b16 %v749
    %v787 = vunpack.c.l.b16 %v750
    %v788 = vunpack.c.l.b16 %v751
    %v789 = vunpack.c.l.b16 %v752
    %v790 = vunpack.c.l.b16 %v753
    %v791 = vunpack.c.l.b16 %v754
    %v792 = vpack.c.b16 %v777, %v776
    %v793 = vpack.c.b16 %v779, %v778
    %v794 = vpack.c.b16 %v781, %v780
    %v795 = vpack.c.b16 %v783, %v782
    %v796 = vpack.c.b16 %v785, %v784
    %v797 = vpack.c.b16 %v787, %v786
    %v798 = vpack.c.b16 %v789, %v788
    %v799 = vpack.c.b16 %v791, %v790
    %808 = vmatprep.subr.bf16.mxu0 0
    %809 = vmatpush1.bf16.msra.mxu0 %v799
    %810 = vmatprep.subr.bf16.mxu0 0
    %811 = vmatpush1.bf16.msra.mxu0 %v798
    %812 = vmatprep.subr.bf16.mxu0 0
    %813 = vmatpush1.bf16.msra.mxu0 %v797
    %814 = vmatprep.subr.bf16.mxu0 0
    %815 = vmatpush1.bf16.msra.mxu0 %v796
    %816 = vmatprep.subr.bf16.mxu0 0
    %817 = vmatpush1.bf16.msra.mxu0 %v795
    %818 = vmatprep.subr.bf16.mxu0 0
    %819 = vmatpush1.bf16.msra.mxu0 %v794
    %820 = vmatprep.subr.bf16.mxu0 0
    %821 = vmatpush1.bf16.msra.mxu0 %v793
    %822 = vmatprep.subr.bf16.mxu0 0
    %823 = vmatpush1.bf16.msra.mxu0 %v792
    %824 = vmatprep.subr.bf16.mxu0 0
    %825 = vmatpush2.bf16.msra.mxu0 0
    %826 = vmatprep.subr.bf16.mxu0 0
    %827 = vmatpush2.bf16.msra.mxu0 0
    %828 = vmatprep.subr.bf16.mxu0 0
    %829 = vmatpush2.bf16.msra.mxu0 0
    %830 = vmatprep.subr.bf16.mxu0 0
    %831 = vmatpush2.bf16.msra.mxu0 0
    %832 = vmatprep.subr.bf16.mxu0 0
    %833 = vmatpush2.bf16.msra.mxu0 0
    %834 = vmatprep.subr.bf16.mxu0 0
    %835 = vmatpush2.bf16.msra.mxu0 0
    %836 = vmatprep.subr.bf16.mxu0 0
    %837 = vmatpush2.bf16.msra.mxu0 0
    %838 = vmatprep.subr.bf16.mxu0 0
    %839 = vmatpush2.bf16.msra.mxu0 0
    %840 = vmatprep.mubr.bf16.mxu0 0
    %841 = vmatmul.mubr.bf16.gmra.mxu0 %v726
    %v842 = vpop.f32.mrf.mxu0
    %v843 = vadd.f32 %v759, %v842
    %v844 = vpop.f32.mrf.mxu0
    %v845 = vpop.f32.mrf.mxu0
    %v846 = vadd.f32 %v759, %v845
    %v847 = vpop.f32.mrf.mxu0
    %848 = vmatprep.mubr.bf16.mxu0 0
    %849 = vmatmul.mubr.bf16.gmra.mxu0 %v727
    %v850 = vpop.f32.mrf.mxu0
    %v851 = vadd.f32 %v759, %v850
    %v852 = vpop.f32.mrf.mxu0
    %v853 = vpop.f32.mrf.mxu0
    %v854 = vadd.f32 %v759, %v853
    %v855 = vpop.f32.mrf.mxu0
    %856 = vmatprep.mubr.bf16.mxu0 0
    %857 = vmatmul.mubr.bf16.gmra.mxu0 %v728
    %v858 = vpop.f32.mrf.mxu0
    %v859 = vadd.f32 %v759, %v858
    %v860 = vpop.f32.mrf.mxu0
    %v861 = vpop.f32.mrf.mxu0
    %v862 = vadd.f32 %v759, %v861
    %v863 = vpop.f32.mrf.mxu0
    %864 = vmatprep.mubr.bf16.mxu0 0
    %865 = vmatmul.mubr.bf16.gmra.mxu0 %v729
    %v866 = vpop.f32.mrf.mxu0
    %v867 = vadd.f32 %v759, %v866
    %v868 = vpop.f32.mrf.mxu0
    %v869 = vpop.f32.mrf.mxu0
    %v870 = vadd.f32 %v759, %v869
    %v871 = vpop.f32.mrf.mxu0
    %872 = vmatprep.mubr.bf16.mxu0 0
    %873 = vmatmul.mubr.bf16.gmra.mxu0 %v730
    %v874 = vpop.f32.mrf.mxu0
    %v875 = vadd.f32 %v759, %v874
    %v876 = vpop.f32.mrf.mxu0
    %v877 = vpop.f32.mrf.mxu0
    %v878 = vadd.f32 %v759, %v877
    %v879 = vpop.f32.mrf.mxu0
    %880 = vmatprep.mubr.bf16.mxu0 0
    %881 = vmatmul.mubr.bf16.gmra.mxu0 %v731
    %v882 = vpop.f32.mrf.mxu0
    %v883 = vadd.f32 %v759, %v882
    %v884 = vpop.f32.mrf.mxu0
    %v885 = vpop.f32.mrf.mxu0
    %v886 = vadd.f32 %v759, %v885
    %v887 = vpop.f32.mrf.mxu0
    %888 = vmatprep.mubr.bf16.mxu0 0
    %889 = vmatmul.mubr.bf16.gmra.mxu0 %v732
    %v890 = vpop.f32.mrf.mxu0
    %v891 = vadd.f32 %v759, %v890
    %v892 = vpop.f32.mrf.mxu0
    %v893 = vpop.f32.mrf.mxu0
    %v894 = vadd.f32 %v759, %v893
    %v895 = vpop.f32.mrf.mxu0
    %896 = vmatprep.mubr.bf16.mxu0 0
    %897 = vmatmul.mubr.bf16.gmra.mxu0 %v733
    %v898 = vpop.f32.mrf.mxu0
    %v899 = vadd.f32 %v759, %v898
    %v900 = vpop.f32.mrf.mxu0
    %v901 = vpop.f32.mrf.mxu0
    %v902 = vadd.f32 %v759, %v901
    %v903 = vpop.f32.mrf.mxu0
    %904 = vmatprep.mubr.bf16.mxu0 0
    %905 = vmatmul.mubr.bf16.gmra.mxu0 %v734
    %v906 = vpop.f32.mrf.mxu0
    %v907 = vadd.f32 %v759, %v906
    %v908 = vpop.f32.mrf.mxu0
    %v909 = vpop.f32.mrf.mxu0
    %v910 = vadd.f32 %v759, %v909
    %v911 = vpop.f32.mrf.mxu0
    %912 = vmatprep.mubr.bf16.mxu0 0
    %913 = vmatmul.mubr.bf16.gmra.mxu0 %v735
    %v914 = vpop.f32.mrf.mxu0
    %v915 = vadd.f32 %v759, %v914
    %v916 = vpop.f32.mrf.mxu0
    %v917 = vpop.f32.mrf.mxu0
    %v918 = vadd.f32 %v759, %v917
    %v919 = vpop.f32.mrf.mxu0
    %920 = vmatprep.mubr.bf16.mxu0 0
    %921 = vmatmul.mubr.bf16.gmra.mxu0 %v736
    %v922 = vpop.f32.mrf.mxu0
    %v923 = vadd.f32 %v759, %v922
    %v924 = vpop.f32.mrf.mxu0
    %v925 = vpop.f32.mrf.mxu0
    %v926 = vadd.f32 %v759, %v925
    %v927 = vpop.f32.mrf.mxu0
    %928 = vmatprep.mubr.bf16.mxu0 0
    %929 = vmatmul.mubr.bf16.gmra.mxu0 %v737
    %v930 = vpop.f32.mrf.mxu0
    %v931 = vadd.f32 %v759, %v930
    %v932 = vpop.f32.mrf.mxu0
    %v933 = vpop.f32.mrf.mxu0
    %v934 = vadd.f32 %v759, %v933
    %v935 = vpop.f32.mrf.mxu0
    %936 = vmatprep.mubr.bf16.mxu0 0
    %937 = vmatmul.mubr.bf16.gmra.mxu0 %v738
    %v938 = vpop.f32.mrf.mxu0
    %v939 = vadd.f32 %v759, %v938
    %v940 = vpop.f32.mrf.mxu0
    %v941 = vpop.f32.mrf.mxu0
    %v942 = vpop.f32.mrf.mxu0
    %943 = vdwg.mxu0
    %944 = vadd.xlane.f32.xlu0 %v843
    %v945 = vpop.xlane.xlu0 %944
    %946 = vadd.xlane.f32.xlu0 %v846
    %v947 = vpop.xlane.xlu0 %946
    %948 = vadd.xlane.f32.xlu0 %v851
    %v949 = vpop.xlane.xlu0 %948
    %950 = vadd.xlane.f32.xlu0 %v854
    %v951 = vpop.xlane.xlu0 %950
    %952 = vadd.xlane.f32.xlu0 %v859
    %v953 = vpop.xlane.xlu0 %952
    %954 = vadd.xlane.f32.xlu0 %v862
    %v955 = vpop.xlane.xlu0 %954
    %956 = vadd.xlane.f32.xlu0 %v867
    %v957 = vpop.xlane.xlu0 %956
    %958 = vadd.xlane.f32.xlu0 %v870
    %v959 = vpop.xlane.xlu0 %958
    %960 = vadd.xlane.f32.xlu0 %v875
    %v961 = vpop.xlane.xlu0 %960
    %962 = vadd.xlane.f32.xlu0 %v878
    %v963 = vpop.xlane.xlu0 %962
    %964 = vadd.xlane.f32.xlu0 %v883
    %v965 = vpop.xlane.xlu0 %964
    %966 = vadd.xlane.f32.xlu0 %v886
    %v967 = vpop.xlane.xlu0 %966
    %968 = vadd.xlane.f32.xlu0 %v891
    %v969 = vpop.xlane.xlu0 %968
    %970 = vadd.xlane.f32.xlu0 %v894
    %v971 = vpop.xlane.xlu0 %970
    %972 = vadd.xlane.f32.xlu0 %v899
    %v973 = vpop.xlane.xlu0 %972
    %974 = vadd.xlane.f32.xlu0 %v902
    %v975 = vpop.xlane.xlu0 %974
    %976 = vadd.xlane.f32.xlu0 %v907
    %v977 = vpop.xlane.xlu0 %976
    %978 = vadd.xlane.f32.xlu0 %v910
    %v979 = vpop.xlane.xlu0 %978
    %980 = vadd.xlane.f32.xlu0 %v915
    %v981 = vpop.xlane.xlu0 %980
    %982 = vadd.xlane.f32.xlu0 %v918
    %v983 = vpop.xlane.xlu0 %982
    %984 = vadd.xlane.f32.xlu0 %v923
    %v985 = vpop.xlane.xlu0 %984
    %986 = vadd.xlane.f32.xlu0 %v926
    %v987 = vpop.xlane.xlu0 %986
    %988 = vadd.xlane.f32.xlu0 %v931
    %v989 = vpop.xlane.xlu0 %988
    %990 = vadd.xlane.f32.xlu0 %v934
    %v991 = vpop.xlane.xlu0 %990
    %992 = vadd.xlane.f32.xlu0 %v939
    %v993 = vpop.xlane.xlu0 %992
    %v994 = vmul.f32 %v945, 0.020833334
    %v995 = vmul.f32 %v947, 0.020833334
    %v996 = vmul.f32 %v949, 0.020833334
    %v997 = vmul.f32 %v951, 0.020833334
    %v998 = vmul.f32 %v953, 0.020833334
    %v999 = vmul.f32 %v955, 0.020833334
    %v1000 = vmul.f32 %v957, 0.020833334
    %v1001 = vmul.f32 %v959, 0.020833334
    %v1002 = vmul.f32 %v961, 0.020833334
    %v1003 = vmul.f32 %v963, 0.020833334
    %v1004 = vmul.f32 %v965, 0.020833334
    %v1005 = vmul.f32 %v967, 0.020833334
    %v1006 = vmul.f32 %v969, 0.020833334
    %v1007 = vmul.f32 %v971, 0.020833334
    %v1008 = vmul.f32 %v973, 0.020833334
    %v1009 = vmul.f32 %v975, 0.020833334
    %v1010 = vmul.f32 %v977, 0.020833334
    %v1011 = vmul.f32 %v979, 0.020833334
    %v1012 = vmul.f32 %v981, 0.020833334
    %v1013 = vmul.f32 %v983, 0.020833334
    %v1014 = vmul.f32 %v985, 0.020833334
    %v1015 = vmul.f32 %v987, 0.020833334
    %v1016 = vmul.f32 %v989, 0.020833334
    %v1017 = vmul.f32 %v991, 0.020833334
    %v1018 = vmul.f32 %v993, 0.020833334
    %v1019 = vmul.f32 %v843, %v843
    %v1020 = vmul.f32 %v846, %v846
    %v1021 = vmul.f32 %v851, %v851
    %v1022 = vmul.f32 %v854, %v854
    %v1023 = vmul.f32 %v859, %v859
    %v1024 = vmul.f32 %v862, %v862
    %v1025 = vmul.f32 %v867, %v867
    %v1026 = vmul.f32 %v870, %v870
    %v1027 = vmul.f32 %v875, %v875
    %v1028 = vmul.f32 %v878, %v878
    %v1029 = vmul.f32 %v883, %v883
    %v1030 = vmul.f32 %v886, %v886
    %v1031 = vmul.f32 %v891, %v891
    %v1032 = vmul.f32 %v894, %v894
    %v1033 = vmul.f32 %v899, %v899
    %v1034 = vmul.f32 %v902, %v902
    %v1035 = vmul.f32 %v907, %v907
    %v1036 = vmul.f32 %v910, %v910
    %v1037 = vmul.f32 %v915, %v915
    %v1038 = vmul.f32 %v918, %v918
    %v1039 = vmul.f32 %v923, %v923
    %v1040 = vmul.f32 %v926, %v926
    %v1041 = vmul.f32 %v931, %v931
    %v1042 = vmul.f32 %v934, %v934
    %v1043 = vmul.f32 %v939, %v939
    %1044 = vadd.xlane.f32.xlu0 %v1019
    %v1045 = vpop.xlane.xlu0 %1044
    %1046 = vadd.xlane.f32.xlu0 %v1020
    %v1047 = vpop.xlane.xlu0 %1046
    %1048 = vadd.xlane.f32.xlu0 %v1021
    %v1049 = vpop.xlane.xlu0 %1048
    %1050 = vadd.xlane.f32.xlu0 %v1022
    %v1051 = vpop.xlane.xlu0 %1050
    %1052 = vadd.xlane.f32.xlu0 %v1023
    %v1053 = vpop.xlane.xlu0 %1052
    %1054 = vadd.xlane.f32.xlu0 %v1024
    %v1055 = vpop.xlane.xlu0 %1054
    %1056 = vadd.xlane.f32.xlu0 %v1025
    %v1057 = vpop.xlane.xlu0 %1056
    %1058 = vadd.xlane.f32.xlu0 %v1026
    %v1059 = vpop.xlane.xlu0 %1058
    %1060 = vadd.xlane.f32.xlu0 %v1027
    %v1061 = vpop.xlane.xlu0 %1060
    %1062 = vadd.xlane.f32.xlu0 %v1028
    %v1063 = vpop.xlane.xlu0 %1062
    %1064 = vadd.xlane.f32.xlu0 %v1029
    %v1065 = vpop.xlane.xlu0 %1064
    %1066 = vadd.xlane.f32.xlu0 %v1030
    %v1067 = vpop.xlane.xlu0 %1066
    %1068 = vadd.xlane.f32.xlu0 %v1031
    %v1069 = vpop.xlane.xlu0 %1068
    %1070 = vadd.xlane.f32.xlu0 %v1032
    %v1071 = vpop.xlane.xlu0 %1070
    %1072 = vadd.xlane.f32.xlu0 %v1033
    %v1073 = vpop.xlane.xlu0 %1072
    %1074 = vadd.xlane.f32.xlu0 %v1034
    %v1075 = vpop.xlane.xlu0 %1074
    %1076 = vadd.xlane.f32.xlu0 %v1035
    %v1077 = vpop.xlane.xlu0 %1076
    %1078 = vadd.xlane.f32.xlu0 %v1036
    %v1079 = vpop.xlane.xlu0 %1078
    %1080 = vadd.xlane.f32.xlu0 %v1037
    %v1081 = vpop.xlane.xlu0 %1080
    %1082 = vadd.xlane.f32.xlu0 %v1038
    %v1083 = vpop.xlane.xlu0 %1082
    %1084 = vadd.xlane.f32.xlu0 %v1039
    %v1085 = vpop.xlane.xlu0 %1084
    %1086 = vadd.xlane.f32.xlu0 %v1040
    %v1087 = vpop.xlane.xlu0 %1086
    %1088 = vadd.xlane.f32.xlu0 %v1041
    %v1089 = vpop.xlane.xlu0 %1088
    %1090 = vadd.xlane.f32.xlu0 %v1042
    %v1091 = vpop.xlane.xlu0 %1090
    %1092 = vadd.xlane.f32.xlu0 %v1043
    %v1093 = vpop.xlane.xlu0 %1092
    %v1094 = vmul.f32 %v1045, 0.020833334
    %v1095 = vmul.f32 %v1047, 0.020833334
    %v1096 = vmul.f32 %v1049, 0.020833334
    %v1097 = vmul.f32 %v1051, 0.020833334
    %v1098 = vmul.f32 %v1053, 0.020833334
    %v1099 = vmul.f32 %v1055, 0.020833334
    %v1100 = vmul.f32 %v1057, 0.020833334
    %v1101 = vmul.f32 %v1059, 0.020833334
    %v1102 = vmul.f32 %v1061, 0.020833334
    %v1103 = vmul.f32 %v1063, 0.020833334
    %v1104 = vmul.f32 %v1065, 0.020833334
    %v1105 = vmul.f32 %v1067, 0.020833334
    %v1106 = vmul.f32 %v1069, 0.020833334
    %v1107 = vmul.f32 %v1071, 0.020833334
    %v1108 = vmul.f32 %v1073, 0.020833334
    %v1109 = vmul.f32 %v1075, 0.020833334
    %v1110 = vmul.f32 %v1077, 0.020833334
    %v1111 = vmul.f32 %v1079, 0.020833334
    %v1112 = vmul.f32 %v1081, 0.020833334
    %v1113 = vmul.f32 %v1083, 0.020833334
    %v1114 = vmul.f32 %v1085, 0.020833334
    %v1115 = vmul.f32 %v1087, 0.020833334
    %v1116 = vmul.f32 %v1089, 0.020833334
    %v1117 = vmul.f32 %v1091, 0.020833334
    %v1118 = vmul.f32 %v1093, 0.020833334
    %v1119 = vmul.f32 %v994, %v994
    %v1120 = vmul.f32 %v995, %v995
    %v1121 = vmul.f32 %v996, %v996
    %v1122 = vmul.f32 %v997, %v997
    %v1123 = vmul.f32 %v998, %v998
    %v1124 = vmul.f32 %v999, %v999
    %v1125 = vmul.f32 %v1000, %v1000
    %v1126 = vmul.f32 %v1001, %v1001
    %v1127 = vmul.f32 %v1002, %v1002
    %v1128 = vmul.f32 %v1003, %v1003
    %v1129 = vmul.f32 %v1004, %v1004
    %v1130 = vmul.f32 %v1005, %v1005
    %v1131 = vmul.f32 %v1006, %v1006
    %v1132 = vmul.f32 %v1007, %v1007
    %v1133 = vmul.f32 %v1008, %v1008
    %v1134 = vmul.f32 %v1009, %v1009
    %v1135 = vmul.f32 %v1010, %v1010
    %v1136 = vmul.f32 %v1011, %v1011
    %v1137 = vmul.f32 %v1012, %v1012
    %v1138 = vmul.f32 %v1013, %v1013
    %v1139 = vmul.f32 %v1014, %v1014
    %v1140 = vmul.f32 %v1015, %v1015
    %v1141 = vmul.f32 %v1016, %v1016
    %v1142 = vmul.f32 %v1017, %v1017
    %v1143 = vmul.f32 %v1018, %v1018
    %v1144 = vsub.f32 %v1094, %v1119
    %v1145 = vsub.f32 %v1095, %v1120
    %v1146 = vsub.f32 %v1096, %v1121
    %v1147 = vsub.f32 %v1097, %v1122
    %v1148 = vsub.f32 %v1098, %v1123
    %v1149 = vsub.f32 %v1099, %v1124
    %v1150 = vsub.f32 %v1100, %v1125
    %v1151 = vsub.f32 %v1101, %v1126
    %v1152 = vsub.f32 %v1102, %v1127
    %v1153 = vsub.f32 %v1103, %v1128
    %v1154 = vsub.f32 %v1104, %v1129
    %v1155 = vsub.f32 %v1105, %v1130
    %v1156 = vsub.f32 %v1106, %v1131
    %v1157 = vsub.f32 %v1107, %v1132
    %v1158 = vsub.f32 %v1108, %v1133
    %v1159 = vsub.f32 %v1109, %v1134
    %v1160 = vsub.f32 %v1110, %v1135
    %v1161 = vsub.f32 %v1111, %v1136
    %v1162 = vsub.f32 %v1112, %v1137
    %v1163 = vsub.f32 %v1113, %v1138
    %v1164 = vsub.f32 %v1114, %v1139
    %v1165 = vsub.f32 %v1115, %v1140
    %v1166 = vsub.f32 %v1116, %v1141
    %v1167 = vsub.f32 %v1117, %v1142
    %v1168 = vsub.f32 %v1118, %v1143
    %v1169 = vadd.f32 %v1144, 1e-05
    %v1170 = vadd.f32 %v1145, 1e-05
    %v1171 = vadd.f32 %v1146, 1e-05
    %v1172 = vadd.f32 %v1147, 1e-05
    %v1173 = vadd.f32 %v1148, 1e-05
    %v1174 = vadd.f32 %v1149, 1e-05
    %v1175 = vadd.f32 %v1150, 1e-05
    %v1176 = vadd.f32 %v1151, 1e-05
    %v1177 = vadd.f32 %v1152, 1e-05
    %v1178 = vadd.f32 %v1153, 1e-05
    %v1179 = vadd.f32 %v1154, 1e-05
    %v1180 = vadd.f32 %v1155, 1e-05
    %v1181 = vadd.f32 %v1156, 1e-05
    %v1182 = vadd.f32 %v1157, 1e-05
    %v1183 = vadd.f32 %v1158, 1e-05
    %v1184 = vadd.f32 %v1159, 1e-05
    %v1185 = vadd.f32 %v1160, 1e-05
    %v1186 = vadd.f32 %v1161, 1e-05
    %v1187 = vadd.f32 %v1162, 1e-05
    %v1188 = vadd.f32 %v1163, 1e-05
    %v1189 = vadd.f32 %v1164, 1e-05
    %v1190 = vadd.f32 %v1165, 1e-05
    %v1191 = vadd.f32 %v1166, 1e-05
    %v1192 = vadd.f32 %v1167, 1e-05
    %v1193 = vadd.f32 %v1168, 1e-05
    %v1194 = vrsqrt.pop %v1169
    %v1195 = vrsqrt.pop %v1170
    %v1196 = vrsqrt.pop %v1171
    %v1197 = vrsqrt.pop %v1172
    %v1198 = vrsqrt.pop %v1173
    %v1199 = vrsqrt.pop %v1174
    %v1200 = vrsqrt.pop %v1175
    %v1201 = vrsqrt.pop %v1176
    %v1202 = vrsqrt.pop %v1177
    %v1203 = vrsqrt.pop %v1178
    %v1204 = vrsqrt.pop %v1179
    %v1205 = vrsqrt.pop %v1180
    %v1206 = vrsqrt.pop %v1181
    %v1207 = vrsqrt.pop %v1182
    %v1208 = vrsqrt.pop %v1183
    %v1209 = vrsqrt.pop %v1184
    %v1210 = vrsqrt.pop %v1185
    %v1211 = vrsqrt.pop %v1186
    %v1212 = vrsqrt.pop %v1187
    %v1213 = vrsqrt.pop %v1188
    %v1214 = vrsqrt.pop %v1189
    %v1215 = vrsqrt.pop %v1190
    %v1216 = vrsqrt.pop %v1191
    %v1217 = vrsqrt.pop %v1192
    %v1218 = vrsqrt.pop %v1193
    %v1219 = vsub.f32 %v843, %v994
    %v1220 = vsub.f32 %v846, %v995
    %v1221 = vsub.f32 %v851, %v996
    %v1222 = vsub.f32 %v854, %v997
    %v1223 = vsub.f32 %v859, %v998
    %v1224 = vsub.f32 %v862, %v999
    %v1225 = vsub.f32 %v867, %v1000
    %v1226 = vsub.f32 %v870, %v1001
    %v1227 = vsub.f32 %v875, %v1002
    %v1228 = vsub.f32 %v878, %v1003
    %v1229 = vsub.f32 %v883, %v1004
    %v1230 = vsub.f32 %v886, %v1005
    %v1231 = vsub.f32 %v891, %v1006
    %v1232 = vsub.f32 %v894, %v1007
    %v1233 = vsub.f32 %v899, %v1008
    %v1234 = vsub.f32 %v902, %v1009
    %v1235 = vsub.f32 %v907, %v1010
    %v1236 = vsub.f32 %v910, %v1011
    %v1237 = vsub.f32 %v915, %v1012
    %v1238 = vsub.f32 %v918, %v1013
    %v1239 = vsub.f32 %v923, %v1014
    %v1240 = vsub.f32 %v926, %v1015
    %v1241 = vsub.f32 %v931, %v1016
    %v1242 = vsub.f32 %v934, %v1017
    %v1243 = vsub.f32 %v939, %v1018
    %v1244 = vmul.f32 %v1219, %v1194
    %v1245 = vmul.f32 %v1220, %v1195
    %v1246 = vmul.f32 %v1221, %v1196
    %v1247 = vmul.f32 %v1222, %v1197
    %v1248 = vmul.f32 %v1223, %v1198
    %v1249 = vmul.f32 %v1224, %v1199
    %v1250 = vmul.f32 %v1225, %v1200
    %v1251 = vmul.f32 %v1226, %v1201
    %v1252 = vmul.f32 %v1227, %v1202
    %v1253 = vmul.f32 %v1228, %v1203
    %v1254 = vmul.f32 %v1229, %v1204
    %v1255 = vmul.f32 %v1230, %v1205
    %v1256 = vmul.f32 %v1231, %v1206
    %v1257 = vmul.f32 %v1232, %v1207
    %v1258 = vmul.f32 %v1233, %v1208
    %v1259 = vmul.f32 %v1234, %v1209
    %v1260 = vmul.f32 %v1235, %v1210
    %v1261 = vmul.f32 %v1236, %v1211
    %v1262 = vmul.f32 %v1237, %v1212
    %v1263 = vmul.f32 %v1238, %v1213
    %v1264 = vmul.f32 %v1239, %v1214
    %v1265 = vmul.f32 %v1240, %v1215
    %v1266 = vmul.f32 %v1241, %v1216
    %v1267 = vmul.f32 %v1242, %v1217
    %v1268 = vmul.f32 %v1243, %v1218
    %v1269 = vlaneseq
    %v1270 = vshrl.u32 %v1269, 7
    %v1271 = vsub.s32 1, %v1270
    %v1272 = vrot.slane %v755, %v1271
    %v1273 = vmul.f32 %v1244, %v1272
    %v1274 = vmul.f32 %v1245, %v1272
    %v1275 = vmul.f32 %v1246, %v1272
    %v1276 = vmul.f32 %v1247, %v1272
    %v1277 = vmul.f32 %v1248, %v1272
    %v1278 = vmul.f32 %v1249, %v1272
    %v1279 = vmul.f32 %v1250, %v1272
    %v1280 = vmul.f32 %v1251, %v1272
    %v1281 = vmul.f32 %v1252, %v1272
    %v1282 = vmul.f32 %v1253, %v1272
    %v1283 = vmul.f32 %v1254, %v1272
    %v1284 = vmul.f32 %v1255, %v1272
    %v1285 = vmul.f32 %v1256, %v1272
    %v1286 = vmul.f32 %v1257, %v1272
    %v1287 = vmul.f32 %v1258, %v1272
    %v1288 = vmul.f32 %v1259, %v1272
    %v1289 = vmul.f32 %v1260, %v1272
    %v1290 = vmul.f32 %v1261, %v1272
    %v1291 = vmul.f32 %v1262, %v1272
    %v1292 = vmul.f32 %v1263, %v1272
    %v1293 = vmul.f32 %v1264, %v1272
    %v1294 = vmul.f32 %v1265, %v1272
    %v1295 = vmul.f32 %v1266, %v1272
    %v1296 = vmul.f32 %v1267, %v1272
    %v1297 = vmul.f32 %v1268, %v1272
    %v1298 = vlaneseq
    %v1299 = vshrl.u32 %v1298, 7
    %v1300 = vsub.s32 2, %v1299
    %v1301 = vrot.slane %v755, %v1300
    %v1302 = vadd.f32 %v1273, %v1301
    %v1303 = vadd.f32 %v1274, %v1301
    %v1304 = vadd.f32 %v1275, %v1301
    %v1305 = vadd.f32 %v1276, %v1301
    %v1306 = vadd.f32 %v1277, %v1301
    %v1307 = vadd.f32 %v1278, %v1301
    %v1308 = vadd.f32 %v1279, %v1301
    %v1309 = vadd.f32 %v1280, %v1301
    %v1310 = vadd.f32 %v1281, %v1301
    %v1311 = vadd.f32 %v1282, %v1301
    %v1312 = vadd.f32 %v1283, %v1301
    %v1313 = vadd.f32 %v1284, %v1301
    %v1314 = vadd.f32 %v1285, %v1301
    %v1315 = vadd.f32 %v1286, %v1301
    %v1316 = vadd.f32 %v1287, %v1301
    %v1317 = vadd.f32 %v1288, %v1301
    %v1318 = vadd.f32 %v1289, %v1301
    %v1319 = vadd.f32 %v1290, %v1301
    %v1320 = vadd.f32 %v1291, %v1301
    %v1321 = vadd.f32 %v1292, %v1301
    %v1322 = vadd.f32 %v1293, %v1301
    %v1323 = vadd.f32 %v1294, %v1301
    %v1324 = vadd.f32 %v1295, %v1301
    %v1325 = vadd.f32 %v1296, %v1301
    %v1326 = vadd.f32 %v1297, %v1301
    %v1327 = vadd.f32 %v75, %v1302
    %v1328 = vadd.f32 %v76, %v1303
    %v1329 = vadd.f32 %v77, %v1304
    %v1330 = vadd.f32 %v78, %v1305
    %v1331 = vadd.f32 %v79, %v1306
    %v1332 = vadd.f32 %v80, %v1307
    %v1333 = vadd.f32 %v81, %v1308
    %v1334 = vadd.f32 %v82, %v1309
    %v1335 = vadd.f32 %v83, %v1310
    %v1336 = vadd.f32 %v84, %v1311
    %v1337 = vadd.f32 %v85, %v1312
    %v1338 = vadd.f32 %v86, %v1313
    %v1339 = vadd.f32 %v87, %v1314
    %v1340 = vadd.f32 %v88, %v1315
    %v1341 = vadd.f32 %v89, %v1316
    %v1342 = vadd.f32 %v90, %v1317
    %v1343 = vadd.f32 %v91, %v1318
    %v1344 = vadd.f32 %v92, %v1319
    %v1345 = vadd.f32 %v93, %v1320
    %v1346 = vadd.f32 %v94, %v1321
    %v1347 = vadd.f32 %v95, %v1322
    %v1348 = vadd.f32 %v96, %v1323
    %v1349 = vadd.f32 %v97, %v1324
    %v1350 = vadd.f32 %v98, %v1325
    %v1351 = vadd.f32 %v99, %v1326
    %1352 = vst [vmem:[#allocation10] sm:$0xff] %v1327
    %1353 = vst [vmem:[#allocation10 + $0x8] sm:$0xff] %v1328
    %1354 = vst [vmem:[#allocation10 + $0x10] sm:$0xff] %v1329
    %1355 = vst [vmem:[#allocation10 + $0x18] sm:$0xff] %v1330
    %1356 = vst [vmem:[#allocation10 + $0x20] sm:$0xff] %v1331
    %1357 = vst [vmem:[#allocation10 + $0x28] sm:$0xff] %v1332
    %1358 = vst [vmem:[#allocation10 + $0x30] sm:$0xff] %v1333
    %1359 = vst [vmem:[#allocation10 + $0x38] sm:$0xff] %v1334
    %1360 = vst [vmem:[#allocation10 + $0x40] sm:$0xff] %v1335
    %1361 = vst [vmem:[#allocation10 + $0x48] sm:$0xff] %v1336
    %1362 = vst [vmem:[#allocation10 + $0x50] sm:$0xff] %v1337
    %1363 = vst [vmem:[#allocation10 + $0x58] sm:$0xff] %v1338
    %1364 = vst [vmem:[#allocation10 + $0x60] sm:$0xff] %v1339
    %1365 = vst [vmem:[#allocation10 + $0x68] sm:$0xff] %v1340
    %1366 = vst [vmem:[#allocation10 + $0x70] sm:$0xff] %v1341
    %1367 = vst [vmem:[#allocation10 + $0x78] sm:$0xff] %v1342
    %1368 = vst [vmem:[#allocation10 + $0x80] sm:$0xff] %v1343
    %1369 = vst [vmem:[#allocation10 + $0x88] sm:$0xff] %v1344
    %1370 = vst [vmem:[#allocation10 + $0x90] sm:$0xff] %v1345
    %1371 = vst [vmem:[#allocation10 + $0x98] sm:$0xff] %v1346
    %1372 = vst [vmem:[#allocation10 + $0xa0] sm:$0xff] %v1347
    %1373 = vst [vmem:[#allocation10 + $0xa8] sm:$0xff] %v1348
    %1374 = vst [vmem:[#allocation10 + $0xb0] sm:$0xff] %v1349
    %1375 = vst [vmem:[#allocation10 + $0xb8] sm:$0xff] %v1350
    %1376 = vst [vmem:[#allocation10 + $0xc0] sm:$0xff] %v1351
    // Predicated region
    $region38: #{tpu_custom_call.1} parent=1 // pred_check
      _
    $region39: #{tpu_custom_call.1} parent=1 // pred_check_branch
      %1378 = sbr.rel (0) target = $region41
    $region40: #{tpu_custom_call.1} parent=1 // pred_region
      %s1380 = ssub.s32 3200, 3200
      %1381 = vsyncadd [#allocation4], %s1380
      %s1382 = sshll.u32 [#allocation10], 4
      %s1383 = int_to_ptr.vmem [resolvable:$true] %s1382
      %1388 = dma.vmem_to_hbm [thread:$0]  %s1383, 3200, %s5, [#allocation4], 128, 128, 8
    $region41: #{tpu_custom_call.1} parent=1 // pred_fallthru
      _
    // Predicated region
    $region42: #{tpu_custom_call.1} parent=1 // pred_check
      _
    $region43: #{tpu_custom_call.1} parent=1 // pred_check_branch
      %1390 = sbr.rel (0) target = $region45
    $region44: #{tpu_custom_call.1} parent=1 // pred_region
      %1391 = dma.done [#allocation4], 3200
    $region45: #{tpu_custom_call.1} parent=1 // pred_fallthru
      _
    %1392 = vsyncpa [#allocation3], 1
    %1393 = vsyncpa [#allocation6], 1
    %1394 = vsyncpa [#allocation9], 1
    %1395 = vsyncpa [#allocation4], 1

// kernel: tpu_custom_call.1
$region0: #{tpu_custom_call.1}
  #allocation0 [shape = 'u32[]', space=smem, size = 0x4, offset = 0x4, fixed_abs, tag = 'smem constant byte address 0x4 - core index']
  #allocation1 [shape = 'u32[144,128]{1,0:T(1,128)}', space=vmem, size = 0x12000, scoped, tag = 'internal scratch']
  %s0 = inlined_call_operand.hbm [shape: f32[200,128], index: 0, kind: input, shape index: {}]
  %s1 = inlined_call_operand.hbm [shape: bf16[128,128], index: 1, kind: input, shape index: {}]
  %s2 = inlined_call_operand.hbm [shape: f32[3,128], index: 2, kind: input, shape index: {}]
  %s3 = inlined_call_operand.hbm [shape: bf16[128,128], index: 3, kind: input, shape index: {}]
  %s4 = inlined_call_operand.vmem [shape: f32[3,128], index: 4, kind: input, shape index: {}]
  %s5 = inlined_call_operand.hbm [shape: f32[200,128], index: 5, kind: output, shape index: {}]
  %s6 = sld [smem:[#allocation0]]
  $region46: #{tpu_custom_call.1} parent=0
    _
  %s8 = ssub.s32 1, %s6
  %s9 = scalar_select 0, %s8, %s6
  $region1: #{tpu_custom_call.1} parent=0
    #allocation2 [shape = 'u8[102400]{0}', space=vmem, size = 0x19000, scoped, tag = 'input window, operand 0, single buffered']
    #allocation3 [shape = 's32[1]{0}', space=sflag, size = 0x4, scoped, tag = 'scoped memory for tpu_custom_call.1']
    #allocation4 [shape = 's32[1]{0}', space=sflag, size = 0x4, scoped, tag = 'scoped memory for tpu_custom_call.1']
    #allocation5 [shape = 'u8[32768]{0}', space=vmem, size = 0x8000, scoped, tag = 'input window, operand 1, single buffered']
    #allocation6 [shape = 's32[1]{0}', space=sflag, size = 0x4, scoped, tag = 'scoped memory for tpu_custom_call.1']
    #allocation7 [shape = 'u8[2048]{0}', space=vmem, size = 0x800, scoped, tag = 'input window, operand 2, single buffered']
    #allocation8 [shape = 'u8[32768]{0}', space=vmem, size = 0x8000, scoped, tag = 'input window, operand 3, single buffered']
    #allocation9 [shape = 's32[1]{0}', space=sflag, size = 0x4, scoped, tag = 'scoped memory for tpu_custom_call.1']
    #allocation10 [shape = 'u8[102400]{0}', space=vmem, size = 0x19000, scoped, tag = 'output window, operand 0, single buffered']
    %10 = vsyncpa [#allocation3], 0
    %11 = vsyncpa [#allocation6], 0
    %12 = vsyncpa [#allocation9], 0
    %13 = vsyncpa [#allocation4], 0
    // Predicated region
    $region2: #{tpu_custom_call.1} parent=1 // pred_check
      _
    $region3: #{tpu_custom_call.1} parent=1 // pred_check_branch
      %15 = sbr.rel (0) target = $region5
    $region4: #{tpu_custom_call.1} parent=1 // pred_region
      %s17 = ssub.s32 3200, 3200
      %18 = vsyncadd [#allocation3], %s17
      %s19 = sshll.u32 [#allocation2], 4
      %s20 = int_to_ptr.vmem [resolvable:$true] %s19
      %25 = dma.hbm_to_vmem [thread:$0]  %s0, 3200, %s20, [#allocation3], 128, 128, 8
    $region5: #{tpu_custom_call.1} parent=1 // pred_fallthru
      _
    // Predicated region
    $region6: #{tpu_custom_call.1} parent=1 // pred_check
      _
    $region7: #{tpu_custom_call.1} parent=1 // pred_check_branch
      %27 = sbr.rel (0) target = $region9
    $region8: #{tpu_custom_call.1} parent=1 // pred_region
      %s29 = ssub.s32 1024, 1024
      %30 = vsyncadd [#allocation6], %s29
      %s31 = sshll.u32 [#allocation5], 4
      %s32 = int_to_ptr.vmem [resolvable:$true] %s31
      %37 = dma.hbm_to_vmem [thread:$0]  %s1, 1024, %s32, [#allocation6], 64, 64, 4
    $region9: #{tpu_custom_call.1} parent=1 // pred_fallthru
      _
    // Predicated region
    $region10: #{tpu_custom_call.1} parent=1 // pred_check
      _
    $region11: #{tpu_custom_call.1} parent=1 // pred_check_branch
      %39 = sbr.rel (0) target = $region13
    $region12: #{tpu_custom_call.1} parent=1 // pred_region
      %s41 = ssub.s32 64, 64
      %42 = vsyncadd [#allocation6], %s41
      %s44 = sshll.u32 [#allocation7], 4
      %s45 = int_to_ptr.vmem [resolvable:$true] %s44
      %47 = dma.hbm_to_vmem [thread:$0]  %s2, 64, %s45, [#allocation6]
    $region13: #{tpu_custom_call.1} parent=1 // pred_fallthru
      _
    // Predicated region
    $region14: #{tpu_custom_call.1} parent=1 // pred_check
      _
    $region15: #{tpu_custom_call.1} parent=1 // pred_check_branch
      %49 = sbr.rel (0) target = $region17
    $region16: #{tpu_custom_call.1} parent=1 // pred_region
      %s51 = ssub.s32 1024, 1024
      %52 = vsyncadd [#allocation9], %s51
      %s53 = sshll.u32 [#allocation8], 4
      %s54 = int_to_ptr.vmem [resolvable:$true] %s53
      %59 = dma.hbm_to_vmem [thread:$0]  %s3, 1024, %s54, [#allocation9], 64, 64, 4
    $region17: #{tpu_custom_call.1} parent=1 // pred_fallthru
      _
    // Predicated region
    $region18: #{tpu_custom_call.1} parent=1 // pred_check
      _
    $region19: #{tpu_custom_call.1} parent=1 // pred_check_branch
      %61 = sbr.rel (0) target = $region21
    $region20: #{tpu_custom_call.1} parent=1 // pred_region
      _
    $region21: #{tpu_custom_call.1} parent=1 // pred_fallthru
      _
    // Predicated region
    $region22: #{tpu_custom_call.1} parent=1 // pred_check
      _
    $region23: #{tpu_custom_call.1} parent=1 // pred_check_branch
      %63 = sbr.rel (0) target = $region25
    $region24: #{tpu_custom_call.1} parent=1 // pred_region
      %64 = dma.done [#allocation3], 3200
    $region25: #{tpu_custom_call.1} parent=1 // pred_fallthru
      _
    // Predicated region
    $region26: #{tpu_custom_call.1} parent=1 // pred_check
      _
    $region27: #{tpu_custom_call.1} parent=1 // pred_check_branch
      %66 = sbr.rel (0) target = $region29
    $region28: #{tpu_custom_call.1} parent=1 // pred_region
      %67 = dma.done [#allocation6], 1024
    $region29: #{tpu_custom_call.1} parent=1 // pred_fallthru
      _
    // Predicated region
    $region30: #{tpu_custom_call.1} parent=1 // pred_check
      _
    $region31: #{tpu_custom_call.1} parent=1 // pred_check_branch
      %69 = sbr.rel (0) target = $region33
    $region32: #{tpu_custom_call.1} parent=1 // pred_region
      %70 = dma.done [#allocation6], 64
    $region33: #{tpu_custom_call.1} parent=1 // pred_fallthru
      _
    // Predicated region
    $region34: #{tpu_custom_call.1} parent=1 // pred_check
      _
    $region35: #{tpu_custom_call.1} parent=1 // pred_check_branch
      %72 = sbr.rel (0) target = $region37
    $region36: #{tpu_custom_call.1} parent=1 // pred_region
      %73 = dma.done [#allocation9], 1024
    $region37: #{tpu_custom_call.1} parent=1 // pred_fallthru
      _
    %v75 = vld [vmem:[#allocation2] sm:$0xff]
    %v76 = vld [vmem:[#allocation2 + $0x8] sm:$0xff]
    %v77 = vld [vmem:[#allocation2 + $0x10] sm:$0xff]
    %v78 = vld [vmem:[#allocation2 + $0x18] sm:$0xff]
    %v79 = vld [vmem:[#allocation2 + $0x20] sm:$0xff]
    %v80 = vld [vmem:[#allocation2 + $0x28] sm:$0xff]
    %v81 = vld [vmem:[#allocation2 + $0x30] sm:$0xff]
    %v82 = vld [vmem:[#allocation2 + $0x38] sm:$0xff]
    %v83 = vld [vmem:[#allocation2 + $0x40] sm:$0xff]
    %v84 = vld [vmem:[#allocation2 + $0x48] sm:$0xff]
    %v85 = vld [vmem:[#allocation2 + $0x50] sm:$0xff]
    %v86 = vld [vmem:[#allocation2 + $0x58] sm:$0xff]
    %v87 = vld [vmem:[#allocation2 + $0x60] sm:$0xff]
    %v88 = vld [vmem:[#allocation2 + $0x68] sm:$0xff]
    %v89 = vld [vmem:[#allocation2 + $0x70] sm:$0xff]
    %v90 = vld [vmem:[#allocation2 + $0x78] sm:$0xff]
    %v91 = vld [vmem:[#allocation2 + $0x80] sm:$0xff]
    %v92 = vld [vmem:[#allocation2 + $0x88] sm:$0xff]
    %v93 = vld [vmem:[#allocation2 + $0x90] sm:$0xff]
    %v94 = vld [vmem:[#allocation2 + $0x98] sm:$0xff]
    %v95 = vld [vmem:[#allocation2 + $0xa0] sm:$0xff]
    %v96 = vld [vmem:[#allocation2 + $0xa8] sm:$0xff]
    %v97 = vld [vmem:[#allocation2 + $0xb0] sm:$0xff]
    %v98 = vld [vmem:[#allocation2 + $0xb8] sm:$0xff]
    %v99 = vld [vmem:[#allocation2 + $0xc0] sm:$0xff]
    %v100 = vpack.c.bf16 %v76, %v75
    %v101 = vpack.c.bf16 %v78, %v77
    %v102 = vpack.c.bf16 %v80, %v79
    %v103 = vpack.c.bf16 %v82, %v81
    %v104 = vpack.c.bf16 %v84, %v83
    %v105 = vpack.c.bf16 %v86, %v85
    %v106 = vpack.c.bf16 %v88, %v87
    %v107 = vpack.c.bf16 %v90, %v89
    %v108 = vpack.c.bf16 %v92, %v91
    %v109 = vpack.c.bf16 %v94, %v93
    %v110 = vpack.c.bf16 %v96, %v95
    %v111 = vpack.c.bf16 %v98, %v97
    %v112 = vpack.c.bf16 %v99, %v99
    %v113 = vld [vmem:[#allocation5] sm:$0xf]
    %v114 = vld [vmem:[#allocation5 + $0x4] sm:$0xf]
    %v115 = vld [vmem:[#allocation5 + $0x8] sm:$0xf]
    %v116 = vld [vmem:[#allocation5 + $0xc] sm:$0xf]
    %v117 = vld [vmem:[#allocation5 + $0x10] sm:$0xf]
    %v118 = vld [vmem:[#allocation5 + $0x14] sm:$0xf]
    %v119 = vld [vmem:[#allocation5 + $0x18] sm:$0xf]
    %v120 = vld [vmem:[#allocation5 + $0x1c] sm:$0xf]
    %v121 = vld [vmem:[#allocation5 + $0x20] sm:$0xf]
    %v122 = vld [vmem:[#allocation5 + $0x24] sm:$0xf]
    %v123 = vld [vmem:[#allocation5 + $0x28] sm:$0xf]
    %v124 = vld [vmem:[#allocation5 + $0x2c] sm:$0xf]
    %v125 = vld [vmem:[#allocation5 + $0x30] sm:$0xf]
    %v126 = vld [vmem:[#allocation5 + $0x34] sm:$0xf]
    %v127 = vld [vmem:[#allocation5 + $0x38] sm:$0xf]
    %v128 = vld [vmem:[#allocation5 + $0x3c] sm:$0xf]
    %v129 = vld [vmem:[#allocation7] sm:$0x7]
    %v130 = vlaneseq
    %v131 = vshrl.u32 %v130, 7
    %v132 = vsub.s32 0, %v131
    %v133 = vrot.slane %v129, %v132
    %v150 = vunpack.c.l.b16 %v113
    %v151 = vunpack.c.l.b16 %v114
    %v152 = vunpack.c.l.b16 %v115
    %v153 = vunpack.c.l.b16 %v116
    %v154 = vunpack.c.l.b16 %v117
    %v155 = vunpack.c.l.b16 %v118
    %v156 = vunpack.c.l.b16 %v119
    %v157 = vunpack.c.l.b16 %v120
    %v158 = vunpack.c.l.b16 %v121
    %v159 = vunpack.c.l.b16 %v122
    %v160 = vunpack.c.l.b16 %v123
    %v161 = vunpack.c.l.b16 %v124
    %v162 = vunpack.c.l.b16 %v125
    %v163 = vunpack.c.l.b16 %v126
    %v164 = vunpack.c.l.b16 %v127
    %v165 = vunpack.c.l.b16 %v128
    %v166 = vpack.c.b16 %v151, %v150
    %v167 = vpack.c.b16 %v153, %v152
    %v168 = vpack.c.b16 %v155, %v154
    %v169 = vpack.c.b16 %v157, %v156
    %v170 = vpack.c.b16 %v159, %v158
    %v171 = vpack.c.b16 %v161, %v160
    %v172 = vpack.c.b16 %v163, %v162
    %v173 = vpack.c.b16 %v165, %v164
    %182 = vmatprep.subr.bf16.mxu0 0
    %183 = vmatpush1.bf16.msra.mxu0 %v173
    %184 = vmatprep.subr.bf16.mxu0 0
    %185 = vmatpush1.bf16.msra.mxu0 %v172
    %186 = vmatprep.subr.bf16.mxu0 0
    %187 = vmatpush1.bf16.msra.mxu0 %v171
    %188 = vmatprep.subr.bf16.mxu0 0
    %189 = vmatpush1.bf16.msra.mxu0 %v170
    %190 = vmatprep.subr.bf16.mxu0 0
    %191 = vmatpush1.bf16.msra.mxu0 %v169
    %192 = vmatprep.subr.bf16.mxu0 0
    %193 = vmatpush1.bf16.msra.mxu0 %v168
    %194 = vmatprep.subr.bf16.mxu0 0
    %195 = vmatpush1.bf16.msra.mxu0 %v167
    %196 = vmatprep.subr.bf16.mxu0 0
    %197 = vmatpush1.bf16.msra.mxu0 %v166
    %198 = vmatprep.subr.bf16.mxu0 0
    %199 = vmatpush2.bf16.msra.mxu0 0
    %200 = vmatprep.subr.bf16.mxu0 0
    %201 = vmatpush2.bf16.msra.mxu0 0
    %202 = vmatprep.subr.bf16.mxu0 0
    %203 = vmatpush2.bf16.msra.mxu0 0
    %204 = vmatprep.subr.bf16.mxu0 0
    %205 = vmatpush2.bf16.msra.mxu0 0
    %206 = vmatprep.subr.bf16.mxu0 0
    %207 = vmatpush2.bf16.msra.mxu0 0
    %208 = vmatprep.subr.bf16.mxu0 0
    %209 = vmatpush2.bf16.msra.mxu0 0
    %210 = vmatprep.subr.bf16.mxu0 0
    %211 = vmatpush2.bf16.msra.mxu0 0
    %212 = vmatprep.subr.bf16.mxu0 0
    %213 = vmatpush2.bf16.msra.mxu0 0
    %214 = vmatprep.mubr.bf16.mxu0 0
    %215 = vmatmul.mubr.bf16.gmra.mxu0 %v100
    %v216 = vpop.f32.mrf.mxu0
    %v217 = vadd.f32 %v133, %v216
    %v218 = vpop.f32.mrf.mxu0
    %v219 = vpop.f32.mrf.mxu0
    %v220 = vadd.f32 %v133, %v219
    %v221 = vpop.f32.mrf.mxu0
    %222 = vmatprep.mubr.bf16.mxu0 0
    %223 = vmatmul.mubr.bf16.gmra.mxu0 %v101
    %v224 = vpop.f32.mrf.mxu0
    %v225 = vadd.f32 %v133, %v224
    %v226 = vpop.f32.mrf.mxu0
    %v227 = vpop.f32.mrf.mxu0
    %v228 = vadd.f32 %v133, %v227
    %v229 = vpop.f32.mrf.mxu0
    %230 = vmatprep.mubr.bf16.mxu0 0
    %231 = vmatmul.mubr.bf16.gmra.mxu0 %v102
    %v232 = vpop.f32.mrf.mxu0
    %v233 = vadd.f32 %v133, %v232
    %v234 = vpop.f32.mrf.mxu0
    %v235 = vpop.f32.mrf.mxu0
    %v236 = vadd.f32 %v133, %v235
    %v237 = vpop.f32.mrf.mxu0
    %238 = vmatprep.mubr.bf16.mxu0 0
    %239 = vmatmul.mubr.bf16.gmra.mxu0 %v103
    %v240 = vpop.f32.mrf.mxu0
    %v241 = vadd.f32 %v133, %v240
    %v242 = vpop.f32.mrf.mxu0
    %v243 = vpop.f32.mrf.mxu0
    %v244 = vadd.f32 %v133, %v243
    %v245 = vpop.f32.mrf.mxu0
    %246 = vmatprep.mubr.bf16.mxu0 0
    %247 = vmatmul.mubr.bf16.gmra.mxu0 %v104
    %v248 = vpop.f32.mrf.mxu0
    %v249 = vadd.f32 %v133, %v248
    %v250 = vpop.f32.mrf.mxu0
    %v251 = vpop.f32.mrf.mxu0
    %v252 = vadd.f32 %v133, %v251
    %v253 = vpop.f32.mrf.mxu0
    %254 = vmatprep.mubr.bf16.mxu0 0
    %255 = vmatmul.mubr.bf16.gmra.mxu0 %v105
    %v256 = vpop.f32.mrf.mxu0
    %v257 = vadd.f32 %v133, %v256
    %v258 = vpop.f32.mrf.mxu0
    %v259 = vpop.f32.mrf.mxu0
    %v260 = vadd.f32 %v133, %v259
    %v261 = vpop.f32.mrf.mxu0
    %262 = vmatprep.mubr.bf16.mxu0 0
    %263 = vmatmul.mubr.bf16.gmra.mxu0 %v106
    %v264 = vpop.f32.mrf.mxu0
    %v265 = vadd.f32 %v133, %v264
    %v266 = vpop.f32.mrf.mxu0
    %v267 = vpop.f32.mrf.mxu0
    %v268 = vadd.f32 %v133, %v267
    %v269 = vpop.f32.mrf.mxu0
    %270 = vmatprep.mubr.bf16.mxu0 0
    %271 = vmatmul.mubr.bf16.gmra.mxu0 %v107
    %v272 = vpop.f32.mrf.mxu0
    %v273 = vadd.f32 %v133, %v272
    %v274 = vpop.f32.mrf.mxu0
    %v275 = vpop.f32.mrf.mxu0
    %v276 = vadd.f32 %v133, %v275
    %v277 = vpop.f32.mrf.mxu0
    %278 = vmatprep.mubr.bf16.mxu0 0
    %279 = vmatmul.mubr.bf16.gmra.mxu0 %v108
    %v280 = vpop.f32.mrf.mxu0
    %v281 = vadd.f32 %v133, %v280
    %v282 = vpop.f32.mrf.mxu0
    %v283 = vpop.f32.mrf.mxu0
    %v284 = vadd.f32 %v133, %v283
    %v285 = vpop.f32.mrf.mxu0
    %286 = vmatprep.mubr.bf16.mxu0 0
    %287 = vmatmul.mubr.bf16.gmra.mxu0 %v109
    %v288 = vpop.f32.mrf.mxu0
    %v289 = vadd.f32 %v133, %v288
    %v290 = vpop.f32.mrf.mxu0
    %v291 = vpop.f32.mrf.mxu0
    %v292 = vadd.f32 %v133, %v291
    %v293 = vpop.f32.mrf.mxu0
    %294 = vmatprep.mubr.bf16.mxu0 0
    %295 = vmatmul.mubr.bf16.gmra.mxu0 %v110
    %v296 = vpop.f32.mrf.mxu0
    %v297 = vadd.f32 %v133, %v296
    %v298 = vpop.f32.mrf.mxu0
    %v299 = vpop.f32.mrf.mxu0
    %v300 = vadd.f32 %v133, %v299
    %v301 = vpop.f32.mrf.mxu0
    %302 = vmatprep.mubr.bf16.mxu0 0
    %303 = vmatmul.mubr.bf16.gmra.mxu0 %v111
    %v304 = vpop.f32.mrf.mxu0
    %v305 = vadd.f32 %v133, %v304
    %v306 = vpop.f32.mrf.mxu0
    %v307 = vpop.f32.mrf.mxu0
    %v308 = vadd.f32 %v133, %v307
    %v309 = vpop.f32.mrf.mxu0
    %310 = vmatprep.mubr.bf16.mxu0 0
    %311 = vmatmul.mubr.bf16.gmra.mxu0 %v112
    %v312 = vpop.f32.mrf.mxu0
    %v313 = vadd.f32 %v133, %v312
    %v314 = vpop.f32.mrf.mxu0
    %v315 = vpop.f32.mrf.mxu0
    %v316 = vpop.f32.mrf.mxu0
    %317 = vdwg.mxu0
    %318 = vadd.xlane.f32.xlu0 %v217
    %v319 = vpop.xlane.xlu0 %318
    %320 = vadd.xlane.f32.xlu0 %v220
    %v321 = vpop.xlane.xlu0 %320
    %322 = vadd.xlane.f32.xlu0 %v225
    %v323 = vpop.xlane.xlu0 %322
    %324 = vadd.xlane.f32.xlu0 %v228
    %v325 = vpop.xlane.xlu0 %324
    %326 = vadd.xlane.f32.xlu0 %v233
    %v327 = vpop.xlane.xlu0 %326
    %328 = vadd.xlane.f32.xlu0 %v236
    %v329 = vpop.xlane.xlu0 %328
    %330 = vadd.xlane.f32.xlu0 %v241
    %v331 = vpop.xlane.xlu0 %330
    %332 = vadd.xlane.f32.xlu0 %v244
    %v333 = vpop.xlane.xlu0 %332
    %334 = vadd.xlane.f32.xlu0 %v249
    %v335 = vpop.xlane.xlu0 %334
    %336 = vadd.xlane.f32.xlu0 %v252
    %v337 = vpop.xlane.xlu0 %336
    %338 = vadd.xlane.f32.xlu0 %v257
    %v339 = vpop.xlane.xlu0 %338
    %340 = vadd.xlane.f32.xlu0 %v260
    %v341 = vpop.xlane.xlu0 %340
    %342 = vadd.xlane.f32.xlu0 %v265
    %v343 = vpop.xlane.xlu0 %342
    %344 = vadd.xlane.f32.xlu0 %v268
    %v345 = vpop.xlane.xlu0 %344
    %346 = vadd.xlane.f32.xlu0 %v273
    %v347 = vpop.xlane.xlu0 %346
    %348 = vadd.xlane.f32.xlu0 %v276
    %v349 = vpop.xlane.xlu0 %348
    %350 = vadd.xlane.f32.xlu0 %v281
    %v351 = vpop.xlane.xlu0 %350
    %352 = vadd.xlane.f32.xlu0 %v284
    %v353 = vpop.xlane.xlu0 %352
    %354 = vadd.xlane.f32.xlu0 %v289
    %v355 = vpop.xlane.xlu0 %354
    %356 = vadd.xlane.f32.xlu0 %v292
    %v357 = vpop.xlane.xlu0 %356
    %358 = vadd.xlane.f32.xlu0 %v297
    %v359 = vpop.xlane.xlu0 %358
    %360 = vadd.xlane.f32.xlu0 %v300
    %v361 = vpop.xlane.xlu0 %360
    %362 = vadd.xlane.f32.xlu0 %v305
    %v363 = vpop.xlane.xlu0 %362
    %364 = vadd.xlane.f32.xlu0 %v308
    %v365 = vpop.xlane.xlu0 %364
    %366 = vadd.xlane.f32.xlu0 %v313
    %v367 = vpop.xlane.xlu0 %366
    %v368 = vmul.f32 %v319, 0.010416667
    %v369 = vmul.f32 %v321, 0.010416667
    %v370 = vmul.f32 %v323, 0.010416667
    %v371 = vmul.f32 %v325, 0.010416667
    %v372 = vmul.f32 %v327, 0.010416667
    %v373 = vmul.f32 %v329, 0.010416667
    %v374 = vmul.f32 %v331, 0.010416667
    %v375 = vmul.f32 %v333, 0.010416667
    %v376 = vmul.f32 %v335, 0.010416667
    %v377 = vmul.f32 %v337, 0.010416667
    %v378 = vmul.f32 %v339, 0.010416667
    %v379 = vmul.f32 %v341, 0.010416667
    %v380 = vmul.f32 %v343, 0.010416667
    %v381 = vmul.f32 %v345, 0.010416667
    %v382 = vmul.f32 %v347, 0.010416667
    %v383 = vmul.f32 %v349, 0.010416667
    %v384 = vmul.f32 %v351, 0.010416667
    %v385 = vmul.f32 %v353, 0.010416667
    %v386 = vmul.f32 %v355, 0.010416667
    %v387 = vmul.f32 %v357, 0.010416667
    %v388 = vmul.f32 %v359, 0.010416667
    %v389 = vmul.f32 %v361, 0.010416667
    %v390 = vmul.f32 %v363, 0.010416667
    %v391 = vmul.f32 %v365, 0.010416667
    %v392 = vmul.f32 %v367, 0.010416667
    %v393 = vmul.f32 %v217, %v217
    %v394 = vmul.f32 %v220, %v220
    %v395 = vmul.f32 %v225, %v225
    %v396 = vmul.f32 %v228, %v228
    %v397 = vmul.f32 %v233, %v233
    %v398 = vmul.f32 %v236, %v236
    %v399 = vmul.f32 %v241, %v241
    %v400 = vmul.f32 %v244, %v244
    %v401 = vmul.f32 %v249, %v249
    %v402 = vmul.f32 %v252, %v252
    %v403 = vmul.f32 %v257, %v257
    %v404 = vmul.f32 %v260, %v260
    %v405 = vmul.f32 %v265, %v265
    %v406 = vmul.f32 %v268, %v268
    %v407 = vmul.f32 %v273, %v273
    %v408 = vmul.f32 %v276, %v276
    %v409 = vmul.f32 %v281, %v281
    %v410 = vmul.f32 %v284, %v284
    %v411 = vmul.f32 %v289, %v289
    %v412 = vmul.f32 %v292, %v292
    %v413 = vmul.f32 %v297, %v297
    %v414 = vmul.f32 %v300, %v300
    %v415 = vmul.f32 %v305, %v305
    %v416 = vmul.f32 %v308, %v308
    %v417 = vmul.f32 %v313, %v313
    %418 = vadd.xlane.f32.xlu0 %v393
    %v419 = vpop.xlane.xlu0 %418
    %420 = vadd.xlane.f32.xlu0 %v394
    %v421 = vpop.xlane.xlu0 %420
    %422 = vadd.xlane.f32.xlu0 %v395
    %v423 = vpop.xlane.xlu0 %422
    %424 = vadd.xlane.f32.xlu0 %v396
    %v425 = vpop.xlane.xlu0 %424
    %426 = vadd.xlane.f32.xlu0 %v397
    %v427 = vpop.xlane.xlu0 %426
    %428 = vadd.xlane.f32.xlu0 %v398
    %v429 = vpop.xlane.xlu0 %428
    %430 = vadd.xlane.f32.xlu0 %v399
    %v431 = vpop.xlane.xlu0 %430
    %432 = vadd.xlane.f32.xlu0 %v400
    %v433 = vpop.xlane.xlu0 %432
    %434 = vadd.xlane.f32.xlu0 %v401
    %v435 = vpop.xlane.xlu0 %434
    %436 = vadd.xlane.f32.xlu0 %v402
    %v437 = vpop.xlane.xlu0 %436
    %438 = vadd.xlane.f32.xlu0 %v403
    %v439 = vpop.xlane.xlu0 %438
    %440 = vadd.xlane.f32.xlu0 %v404
    %v441 = vpop.xlane.xlu0 %440
    %442 = vadd.xlane.f32.xlu0 %v405
    %v443 = vpop.xlane.xlu0 %442
    %444 = vadd.xlane.f32.xlu0 %v406
    %v445 = vpop.xlane.xlu0 %444
    %446 = vadd.xlane.f32.xlu0 %v407
    %v447 = vpop.xlane.xlu0 %446
    %448 = vadd.xlane.f32.xlu0 %v408
    %v449 = vpop.xlane.xlu0 %448
    %450 = vadd.xlane.f32.xlu0 %v409
    %v451 = vpop.xlane.xlu0 %450
    %452 = vadd.xlane.f32.xlu0 %v410
    %v453 = vpop.xlane.xlu0 %452
    %454 = vadd.xlane.f32.xlu0 %v411
    %v455 = vpop.xlane.xlu0 %454
    %456 = vadd.xlane.f32.xlu0 %v412
    %v457 = vpop.xlane.xlu0 %456
    %458 = vadd.xlane.f32.xlu0 %v413
    %v459 = vpop.xlane.xlu0 %458
    %460 = vadd.xlane.f32.xlu0 %v414
    %v461 = vpop.xlane.xlu0 %460
    %462 = vadd.xlane.f32.xlu0 %v415
    %v463 = vpop.xlane.xlu0 %462
    %464 = vadd.xlane.f32.xlu0 %v416
    %v465 = vpop.xlane.xlu0 %464
    %466 = vadd.xlane.f32.xlu0 %v417
    %v467 = vpop.xlane.xlu0 %466
    %v468 = vmul.f32 %v419, 0.010416667
    %v469 = vmul.f32 %v421, 0.010416667
    %v470 = vmul.f32 %v423, 0.010416667
    %v471 = vmul.f32 %v425, 0.010416667
    %v472 = vmul.f32 %v427, 0.010416667
    %v473 = vmul.f32 %v429, 0.010416667
    %v474 = vmul.f32 %v431, 0.010416667
    %v475 = vmul.f32 %v433, 0.010416667
    %v476 = vmul.f32 %v435, 0.010416667
    %v477 = vmul.f32 %v437, 0.010416667
    %v478 = vmul.f32 %v439, 0.010416667
    %v479 = vmul.f32 %v441, 0.010416667
    %v480 = vmul.f32 %v443, 0.010416667
    %v481 = vmul.f32 %v445, 0.010416667
    %v482 = vmul.f32 %v447, 0.010416667
    %v483 = vmul.f32 %v449, 0.010416667
    %v484 = vmul.f32 %v451, 0.010416667
    %v485 = vmul.f32 %v453, 0.010416667
    %v486 = vmul.f32 %v455, 0.010416667
    %v487 = vmul.f32 %v457, 0.010416667
    %v488 = vmul.f32 %v459, 0.010416667
    %v489 = vmul.f32 %v461, 0.010416667
    %v490 = vmul.f32 %v463, 0.010416667
    %v491 = vmul.f32 %v465, 0.010416667
    %v492 = vmul.f32 %v467, 0.010416667
    %v493 = vmul.f32 %v368, %v368
    %v494 = vmul.f32 %v369, %v369
    %v495 = vmul.f32 %v370, %v370
    %v496 = vmul.f32 %v371, %v371
    %v497 = vmul.f32 %v372, %v372
    %v498 = vmul.f32 %v373, %v373
    %v499 = vmul.f32 %v374, %v374
    %v500 = vmul.f32 %v375, %v375
    %v501 = vmul.f32 %v376, %v376
    %v502 = vmul.f32 %v377, %v377
    %v503 = vmul.f32 %v378, %v378
    %v504 = vmul.f32 %v379, %v379
    %v505 = vmul.f32 %v380, %v380
    %v506 = vmul.f32 %v381, %v381
    %v507 = vmul.f32 %v382, %v382
    %v508 = vmul.f32 %v383, %v383
    %v509 = vmul.f32 %v384, %v384
    %v510 = vmul.f32 %v385, %v385
    %v511 = vmul.f32 %v386, %v386
    %v512 = vmul.f32 %v387, %v387
    %v513 = vmul.f32 %v388, %v388
    %v514 = vmul.f32 %v389, %v389
    %v515 = vmul.f32 %v390, %v390
    %v516 = vmul.f32 %v391, %v391
    %v517 = vmul.f32 %v392, %v392
    %v518 = vsub.f32 %v468, %v493
    %v519 = vsub.f32 %v469, %v494
    %v520 = vsub.f32 %v470, %v495
    %v521 = vsub.f32 %v471, %v496
    %v522 = vsub.f32 %v472, %v497
    %v523 = vsub.f32 %v473, %v498
    %v524 = vsub.f32 %v474, %v499
    %v525 = vsub.f32 %v475, %v500
    %v526 = vsub.f32 %v476, %v501
    %v527 = vsub.f32 %v477, %v502
    %v528 = vsub.f32 %v478, %v503
    %v529 = vsub.f32 %v479, %v504
    %v530 = vsub.f32 %v480, %v505
    %v531 = vsub.f32 %v481, %v506
    %v532 = vsub.f32 %v482, %v507
    %v533 = vsub.f32 %v483, %v508
    %v534 = vsub.f32 %v484, %v509
    %v535 = vsub.f32 %v485, %v510
    %v536 = vsub.f32 %v486, %v511
    %v537 = vsub.f32 %v487, %v512
    %v538 = vsub.f32 %v488, %v513
    %v539 = vsub.f32 %v489, %v514
    %v540 = vsub.f32 %v490, %v515
    %v541 = vsub.f32 %v491, %v516
    %v542 = vsub.f32 %v492, %v517
    %v543 = vadd.f32 %v518, 1e-05
    %v544 = vadd.f32 %v519, 1e-05
    %v545 = vadd.f32 %v520, 1e-05
    %v546 = vadd.f32 %v521, 1e-05
    %v547 = vadd.f32 %v522, 1e-05
    %v548 = vadd.f32 %v523, 1e-05
    %v549 = vadd.f32 %v524, 1e-05
    %v550 = vadd.f32 %v525, 1e-05
    %v551 = vadd.f32 %v526, 1e-05
    %v552 = vadd.f32 %v527, 1e-05
    %v553 = vadd.f32 %v528, 1e-05
    %v554 = vadd.f32 %v529, 1e-05
    %v555 = vadd.f32 %v530, 1e-05
    %v556 = vadd.f32 %v531, 1e-05
    %v557 = vadd.f32 %v532, 1e-05
    %v558 = vadd.f32 %v533, 1e-05
    %v559 = vadd.f32 %v534, 1e-05
    %v560 = vadd.f32 %v535, 1e-05
    %v561 = vadd.f32 %v536, 1e-05
    %v562 = vadd.f32 %v537, 1e-05
    %v563 = vadd.f32 %v538, 1e-05
    %v564 = vadd.f32 %v539, 1e-05
    %v565 = vadd.f32 %v540, 1e-05
    %v566 = vadd.f32 %v541, 1e-05
    %v567 = vadd.f32 %v542, 1e-05
    %v568 = vrsqrt.pop %v543
    %v569 = vrsqrt.pop %v544
    %v570 = vrsqrt.pop %v545
    %v571 = vrsqrt.pop %v546
    %v572 = vrsqrt.pop %v547
    %v573 = vrsqrt.pop %v548
    %v574 = vrsqrt.pop %v549
    %v575 = vrsqrt.pop %v550
    %v576 = vrsqrt.pop %v551
    %v577 = vrsqrt.pop %v552
    %v578 = vrsqrt.pop %v553
    %v579 = vrsqrt.pop %v554
    %v580 = vrsqrt.pop %v555
    %v581 = vrsqrt.pop %v556
    %v582 = vrsqrt.pop %v557
    %v583 = vrsqrt.pop %v558
    %v584 = vrsqrt.pop %v559
    %v585 = vrsqrt.pop %v560
    %v586 = vrsqrt.pop %v561
    %v587 = vrsqrt.pop %v562
    %v588 = vrsqrt.pop %v563
    %v589 = vrsqrt.pop %v564
    %v590 = vrsqrt.pop %v565
    %v591 = vrsqrt.pop %v566
    %v592 = vrsqrt.pop %v567
    %v593 = vsub.f32 %v217, %v368
    %v594 = vsub.f32 %v220, %v369
    %v595 = vsub.f32 %v225, %v370
    %v596 = vsub.f32 %v228, %v371
    %v597 = vsub.f32 %v233, %v372
    %v598 = vsub.f32 %v236, %v373
    %v599 = vsub.f32 %v241, %v374
    %v600 = vsub.f32 %v244, %v375
    %v601 = vsub.f32 %v249, %v376
    %v602 = vsub.f32 %v252, %v377
    %v603 = vsub.f32 %v257, %v378
    %v604 = vsub.f32 %v260, %v379
    %v605 = vsub.f32 %v265, %v380
    %v606 = vsub.f32 %v268, %v381
    %v607 = vsub.f32 %v273, %v382
    %v608 = vsub.f32 %v276, %v383
    %v609 = vsub.f32 %v281, %v384
    %v610 = vsub.f32 %v284, %v385
    %v611 = vsub.f32 %v289, %v386
    %v612 = vsub.f32 %v292, %v387
    %v613 = vsub.f32 %v297, %v388
    %v614 = vsub.f32 %v300, %v389
    %v615 = vsub.f32 %v305, %v390
    %v616 = vsub.f32 %v308, %v391
    %v617 = vsub.f32 %v313, %v392
    %v618 = vmul.f32 %v593, %v568
    %v619 = vmul.f32 %v594, %v569
    %v620 = vmul.f32 %v595, %v570
    %v621 = vmul.f32 %v596, %v571
    %v622 = vmul.f32 %v597, %v572
    %v623 = vmul.f32 %v598, %v573
    %v624 = vmul.f32 %v599, %v574
    %v625 = vmul.f32 %v600, %v575
    %v626 = vmul.f32 %v601, %v576
    %v627 = vmul.f32 %v602, %v577
    %v628 = vmul.f32 %v603, %v578
    %v629 = vmul.f32 %v604, %v579
    %v630 = vmul.f32 %v605, %v580
    %v631 = vmul.f32 %v606, %v581
    %v632 = vmul.f32 %v607, %v582
    %v633 = vmul.f32 %v608, %v583
    %v634 = vmul.f32 %v609, %v584
    %v635 = vmul.f32 %v610, %v585
    %v636 = vmul.f32 %v611, %v586
    %v637 = vmul.f32 %v612, %v587
    %v638 = vmul.f32 %v613, %v588
    %v639 = vmul.f32 %v614, %v589
    %v640 = vmul.f32 %v615, %v590
    %v641 = vmul.f32 %v616, %v591
    %v642 = vmul.f32 %v617, %v592
    %v643 = vlaneseq
    %v644 = vshrl.u32 %v643, 7
    %v645 = vsub.s32 1, %v644
    %v646 = vrot.slane %v129, %v645
    %v647 = vmul.f32 %v618, %v646
    %v648 = vmul.f32 %v619, %v646
    %v649 = vmul.f32 %v620, %v646
    %v650 = vmul.f32 %v621, %v646
    %v651 = vmul.f32 %v622, %v646
    %v652 = vmul.f32 %v623, %v646
    %v653 = vmul.f32 %v624, %v646
    %v654 = vmul.f32 %v625, %v646
    %v655 = vmul.f32 %v626, %v646
    %v656 = vmul.f32 %v627, %v646
    %v657 = vmul.f32 %v628, %v646
    %v658 = vmul.f32 %v629, %v646
    %v659 = vmul.f32 %v630, %v646
    %v660 = vmul.f32 %v631, %v646
    %v661 = vmul.f32 %v632, %v646
    %v662 = vmul.f32 %v633, %v646
    %v663 = vmul.f32 %v634, %v646
    %v664 = vmul.f32 %v635, %v646
    %v665 = vmul.f32 %v636, %v646
    %v666 = vmul.f32 %v637, %v646
    %v667 = vmul.f32 %v638, %v646
    %v668 = vmul.f32 %v639, %v646
    %v669 = vmul.f32 %v640, %v646
    %v670 = vmul.f32 %v641, %v646
    %v671 = vmul.f32 %v642, %v646
    %v672 = vlaneseq
    %v673 = vshrl.u32 %v672, 7
    %v674 = vsub.s32 2, %v673
    %v675 = vrot.slane %v129, %v674
    %v676 = vadd.f32 %v647, %v675
    %v677 = vadd.f32 %v648, %v675
    %v678 = vadd.f32 %v649, %v675
    %v679 = vadd.f32 %v650, %v675
    %v680 = vadd.f32 %v651, %v675
    %v681 = vadd.f32 %v652, %v675
    %v682 = vadd.f32 %v653, %v675
    %v683 = vadd.f32 %v654, %v675
    %v684 = vadd.f32 %v655, %v675
    %v685 = vadd.f32 %v656, %v675
    %v686 = vadd.f32 %v657, %v675
    %v687 = vadd.f32 %v658, %v675
    %v688 = vadd.f32 %v659, %v675
    %v689 = vadd.f32 %v660, %v675
    %v690 = vadd.f32 %v661, %v675
    %v691 = vadd.f32 %v662, %v675
    %v692 = vadd.f32 %v663, %v675
    %v693 = vadd.f32 %v664, %v675
    %v694 = vadd.f32 %v665, %v675
    %v695 = vadd.f32 %v666, %v675
    %v696 = vadd.f32 %v667, %v675
    %v697 = vadd.f32 %v668, %v675
    %v698 = vadd.f32 %v669, %v675
    %v699 = vadd.f32 %v670, %v675
    %v700 = vadd.f32 %v671, %v675
    %v701 = vmax.f32 %v676, 0.0
    %v702 = vmax.f32 %v677, 0.0
    %v703 = vmax.f32 %v678, 0.0
    %v704 = vmax.f32 %v679, 0.0
    %v705 = vmax.f32 %v680, 0.0
    %v706 = vmax.f32 %v681, 0.0
    %v707 = vmax.f32 %v682, 0.0
    %v708 = vmax.f32 %v683, 0.0
    %v709 = vmax.f32 %v684, 0.0
    %v710 = vmax.f32 %v685, 0.0
    %v711 = vmax.f32 %v686, 0.0
    %v712 = vmax.f32 %v687, 0.0
    %v713 = vmax.f32 %v688, 0.0
    %v714 = vmax.f32 %v689, 0.0
    %v715 = vmax.f32 %v690, 0.0
    %v716 = vmax.f32 %v691, 0.0
    %v717 = vmax.f32 %v692, 0.0
    %v718 = vmax.f32 %v693, 0.0
    %v719 = vmax.f32 %v694, 0.0
    %v720 = vmax.f32 %v695, 0.0
    %v721 = vmax.f32 %v696, 0.0
    %v722 = vmax.f32 %v697, 0.0
    %v723 = vmax.f32 %v698, 0.0
    %v724 = vmax.f32 %v699, 0.0
    %v725 = vmax.f32 %v700, 0.0
    %v726 = vpack.c.bf16 %v702, %v701
    %v727 = vpack.c.bf16 %v704, %v703
    %v728 = vpack.c.bf16 %v706, %v705
    %v729 = vpack.c.bf16 %v708, %v707
    %v730 = vpack.c.bf16 %v710, %v709
    %v731 = vpack.c.bf16 %v712, %v711
    %v732 = vpack.c.bf16 %v714, %v713
    %v733 = vpack.c.bf16 %v716, %v715
    %v734 = vpack.c.bf16 %v718, %v717
    %v735 = vpack.c.bf16 %v720, %v719
    %v736 = vpack.c.bf16 %v722, %v721
    %v737 = vpack.c.bf16 %v724, %v723
    %v738 = vpack.c.bf16 %v725, %v725
    %v739 = vld [vmem:[#allocation8] sm:$0xf]
    %v740 = vld [vmem:[#allocation8 + $0x4] sm:$0xf]
    %v741 = vld [vmem:[#allocation8 + $0x8] sm:$0xf]
    %v742 = vld [vmem:[#allocation8 + $0xc] sm:$0xf]
    %v743 = vld [vmem:[#allocation8 + $0x10] sm:$0xf]
    %v744 = vld [vmem:[#allocation8 + $0x14] sm:$0xf]
    %v745 = vld [vmem:[#allocation8 + $0x18] sm:$0xf]
    %v746 = vld [vmem:[#allocation8 + $0x1c] sm:$0xf]
    %v747 = vld [vmem:[#allocation8 + $0x20] sm:$0xf]
    %v748 = vld [vmem:[#allocation8 + $0x24] sm:$0xf]
    %v749 = vld [vmem:[#allocation8 + $0x28] sm:$0xf]
    %v750 = vld [vmem:[#allocation8 + $0x2c] sm:$0xf]
    %v751 = vld [vmem:[#allocation8 + $0x30] sm:$0xf]
    %v752 = vld [vmem:[#allocation8 + $0x34] sm:$0xf]
    %v753 = vld [vmem:[#allocation8 + $0x38] sm:$0xf]
    %v754 = vld [vmem:[#allocation8 + $0x3c] sm:$0xf]
    %v755 = vld [vmem:[%s4] sm:$0x7]
    %v756 = vlaneseq
    %v757 = vshrl.u32 %v756, 7
    %v758 = vsub.s32 0, %v757
    %v759 = vrot.slane %v755, %v758
    %v776 = vunpack.c.l.b16 %v739
    %v777 = vunpack.c.l.b16 %v740
    %v778 = vunpack.c.l.b16 %v741
    %v779 = vunpack.c.l.b16 %v742
    %v780 = vunpack.c.l.b16 %v743
    %v781 = vunpack.c.l.b16 %v744
    %v782 = vunpack.c.l.b16 %v745
    %v783 = vunpack.c.l.b16 %v746
    %v784 = vunpack.c.l.b16 %v747
    %v785 = vunpack.c.l.b16 %v748
    %v786 = vunpack.c.l.b16 %v749
    %v787 = vunpack.c.l.b16 %v750
    %v788 = vunpack.c.l.b16 %v751
    %v789 = vunpack.c.l.b16 %v752
    %v790 = vunpack.c.l.b16 %v753
    %v791 = vunpack.c.l.b16 %v754
    %v792 = vpack.c.b16 %v777, %v776
    %v793 = vpack.c.b16 %v779, %v778
    %v794 = vpack.c.b16 %v781, %v780
    %v795 = vpack.c.b16 %v783, %v782
    %v796 = vpack.c.b16 %v785, %v784
    %v797 = vpack.c.b16 %v787, %v786
    %v798 = vpack.c.b16 %v789, %v788
    %v799 = vpack.c.b16 %v791, %v790
    %808 = vmatprep.subr.bf16.mxu0 0
    %809 = vmatpush1.bf16.msra.mxu0 %v799
    %810 = vmatprep.subr.bf16.mxu0 0
    %811 = vmatpush1.bf16.msra.mxu0 %v798
    %812 = vmatprep.subr.bf16.mxu0 0
    %813 = vmatpush1.bf16.msra.mxu0 %v797
    %814 = vmatprep.subr.bf16.mxu0 0
    %815 = vmatpush1.bf16.msra.mxu0 %v796
    %816 = vmatprep.subr.bf16.mxu0 0
    %817 = vmatpush1.bf16.msra.mxu0 %v795
    %818 = vmatprep.subr.bf16.mxu0 0
    %819 = vmatpush1.bf16.msra.mxu0 %v794
    %820 = vmatprep.subr.bf16.mxu0 0
    %821 = vmatpush1.bf16.msra.mxu0 %v793
    %822 = vmatprep.subr.bf16.mxu0 0
    %823 = vmatpush1.bf16.msra.mxu0 %v792
    %824 = vmatprep.subr.bf16.mxu0 0
    %825 = vmatpush2.bf16.msra.mxu0 0
    %826 = vmatprep.subr.bf16.mxu0 0
    %827 = vmatpush2.bf16.msra.mxu0 0
    %828 = vmatprep.subr.bf16.mxu0 0
    %829 = vmatpush2.bf16.msra.mxu0 0
    %830 = vmatprep.subr.bf16.mxu0 0
    %831 = vmatpush2.bf16.msra.mxu0 0
    %832 = vmatprep.subr.bf16.mxu0 0
    %833 = vmatpush2.bf16.msra.mxu0 0
    %834 = vmatprep.subr.bf16.mxu0 0
    %835 = vmatpush2.bf16.msra.mxu0 0
    %836 = vmatprep.subr.bf16.mxu0 0
    %837 = vmatpush2.bf16.msra.mxu0 0
    %838 = vmatprep.subr.bf16.mxu0 0
    %839 = vmatpush2.bf16.msra.mxu0 0
    %840 = vmatprep.mubr.bf16.mxu0 0
    %841 = vmatmul.mubr.bf16.gmra.mxu0 %v726
    %v842 = vpop.f32.mrf.mxu0
    %v843 = vadd.f32 %v759, %v842
    %v844 = vpop.f32.mrf.mxu0
    %v845 = vpop.f32.mrf.mxu0
    %v846 = vadd.f32 %v759, %v845
    %v847 = vpop.f32.mrf.mxu0
    %848 = vmatprep.mubr.bf16.mxu0 0
    %849 = vmatmul.mubr.bf16.gmra.mxu0 %v727
    %v850 = vpop.f32.mrf.mxu0
    %v851 = vadd.f32 %v759, %v850
    %v852 = vpop.f32.mrf.mxu0
    %v853 = vpop.f32.mrf.mxu0
    %v854 = vadd.f32 %v759, %v853
    %v855 = vpop.f32.mrf.mxu0
    %856 = vmatprep.mubr.bf16.mxu0 0
    %857 = vmatmul.mubr.bf16.gmra.mxu0 %v728
    %v858 = vpop.f32.mrf.mxu0
    %v859 = vadd.f32 %v759, %v858
    %v860 = vpop.f32.mrf.mxu0
    %v861 = vpop.f32.mrf.mxu0
    %v862 = vadd.f32 %v759, %v861
    %v863 = vpop.f32.mrf.mxu0
    %864 = vmatprep.mubr.bf16.mxu0 0
    %865 = vmatmul.mubr.bf16.gmra.mxu0 %v729
    %v866 = vpop.f32.mrf.mxu0
    %v867 = vadd.f32 %v759, %v866
    %v868 = vpop.f32.mrf.mxu0
    %v869 = vpop.f32.mrf.mxu0
    %v870 = vadd.f32 %v759, %v869
    %v871 = vpop.f32.mrf.mxu0
    %872 = vmatprep.mubr.bf16.mxu0 0
    %873 = vmatmul.mubr.bf16.gmra.mxu0 %v730
    %v874 = vpop.f32.mrf.mxu0
    %v875 = vadd.f32 %v759, %v874
    %v876 = vpop.f32.mrf.mxu0
    %v877 = vpop.f32.mrf.mxu0
    %v878 = vadd.f32 %v759, %v877
    %v879 = vpop.f32.mrf.mxu0
    %880 = vmatprep.mubr.bf16.mxu0 0
    %881 = vmatmul.mubr.bf16.gmra.mxu0 %v731
    %v882 = vpop.f32.mrf.mxu0
    %v883 = vadd.f32 %v759, %v882
    %v884 = vpop.f32.mrf.mxu0
    %v885 = vpop.f32.mrf.mxu0
    %v886 = vadd.f32 %v759, %v885
    %v887 = vpop.f32.mrf.mxu0
    %888 = vmatprep.mubr.bf16.mxu0 0
    %889 = vmatmul.mubr.bf16.gmra.mxu0 %v732
    %v890 = vpop.f32.mrf.mxu0
    %v891 = vadd.f32 %v759, %v890
    %v892 = vpop.f32.mrf.mxu0
    %v893 = vpop.f32.mrf.mxu0
    %v894 = vadd.f32 %v759, %v893
    %v895 = vpop.f32.mrf.mxu0
    %896 = vmatprep.mubr.bf16.mxu0 0
    %897 = vmatmul.mubr.bf16.gmra.mxu0 %v733
    %v898 = vpop.f32.mrf.mxu0
    %v899 = vadd.f32 %v759, %v898
    %v900 = vpop.f32.mrf.mxu0
    %v901 = vpop.f32.mrf.mxu0
    %v902 = vadd.f32 %v759, %v901
    %v903 = vpop.f32.mrf.mxu0
    %904 = vmatprep.mubr.bf16.mxu0 0
    %905 = vmatmul.mubr.bf16.gmra.mxu0 %v734
    %v906 = vpop.f32.mrf.mxu0
    %v907 = vadd.f32 %v759, %v906
    %v908 = vpop.f32.mrf.mxu0
    %v909 = vpop.f32.mrf.mxu0
    %v910 = vadd.f32 %v759, %v909
    %v911 = vpop.f32.mrf.mxu0
    %912 = vmatprep.mubr.bf16.mxu0 0
    %913 = vmatmul.mubr.bf16.gmra.mxu0 %v735
    %v914 = vpop.f32.mrf.mxu0
    %v915 = vadd.f32 %v759, %v914
    %v916 = vpop.f32.mrf.mxu0
    %v917 = vpop.f32.mrf.mxu0
    %v918 = vadd.f32 %v759, %v917
    %v919 = vpop.f32.mrf.mxu0
    %920 = vmatprep.mubr.bf16.mxu0 0
    %921 = vmatmul.mubr.bf16.gmra.mxu0 %v736
    %v922 = vpop.f32.mrf.mxu0
    %v923 = vadd.f32 %v759, %v922
    %v924 = vpop.f32.mrf.mxu0
    %v925 = vpop.f32.mrf.mxu0
    %v926 = vadd.f32 %v759, %v925
    %v927 = vpop.f32.mrf.mxu0
    %928 = vmatprep.mubr.bf16.mxu0 0
    %929 = vmatmul.mubr.bf16.gmra.mxu0 %v737
    %v930 = vpop.f32.mrf.mxu0
    %v931 = vadd.f32 %v759, %v930
    %v932 = vpop.f32.mrf.mxu0
    %v933 = vpop.f32.mrf.mxu0
    %v934 = vadd.f32 %v759, %v933
    %v935 = vpop.f32.mrf.mxu0
    %936 = vmatprep.mubr.bf16.mxu0 0
    %937 = vmatmul.mubr.bf16.gmra.mxu0 %v738
    %v938 = vpop.f32.mrf.mxu0
    %v939 = vadd.f32 %v759, %v938
    %v940 = vpop.f32.mrf.mxu0
    %v941 = vpop.f32.mrf.mxu0
    %v942 = vpop.f32.mrf.mxu0
    %943 = vdwg.mxu0
    %944 = vadd.xlane.f32.xlu0 %v843
    %v945 = vpop.xlane.xlu0 %944
    %946 = vadd.xlane.f32.xlu0 %v846
    %v947 = vpop.xlane.xlu0 %946
    %948 = vadd.xlane.f32.xlu0 %v851
    %v949 = vpop.xlane.xlu0 %948
    %950 = vadd.xlane.f32.xlu0 %v854
    %v951 = vpop.xlane.xlu0 %950
    %952 = vadd.xlane.f32.xlu0 %v859
    %v953 = vpop.xlane.xlu0 %952
    %954 = vadd.xlane.f32.xlu0 %v862
    %v955 = vpop.xlane.xlu0 %954
    %956 = vadd.xlane.f32.xlu0 %v867
    %v957 = vpop.xlane.xlu0 %956
    %958 = vadd.xlane.f32.xlu0 %v870
    %v959 = vpop.xlane.xlu0 %958
    %960 = vadd.xlane.f32.xlu0 %v875
    %v961 = vpop.xlane.xlu0 %960
    %962 = vadd.xlane.f32.xlu0 %v878
    %v963 = vpop.xlane.xlu0 %962
    %964 = vadd.xlane.f32.xlu0 %v883
    %v965 = vpop.xlane.xlu0 %964
    %966 = vadd.xlane.f32.xlu0 %v886
    %v967 = vpop.xlane.xlu0 %966
    %968 = vadd.xlane.f32.xlu0 %v891
    %v969 = vpop.xlane.xlu0 %968
    %970 = vadd.xlane.f32.xlu0 %v894
    %v971 = vpop.xlane.xlu0 %970
    %972 = vadd.xlane.f32.xlu0 %v899
    %v973 = vpop.xlane.xlu0 %972
    %974 = vadd.xlane.f32.xlu0 %v902
    %v975 = vpop.xlane.xlu0 %974
    %976 = vadd.xlane.f32.xlu0 %v907
    %v977 = vpop.xlane.xlu0 %976
    %978 = vadd.xlane.f32.xlu0 %v910
    %v979 = vpop.xlane.xlu0 %978
    %980 = vadd.xlane.f32.xlu0 %v915
    %v981 = vpop.xlane.xlu0 %980
    %982 = vadd.xlane.f32.xlu0 %v918
    %v983 = vpop.xlane.xlu0 %982
    %984 = vadd.xlane.f32.xlu0 %v923
    %v985 = vpop.xlane.xlu0 %984
    %986 = vadd.xlane.f32.xlu0 %v926
    %v987 = vpop.xlane.xlu0 %986
    %988 = vadd.xlane.f32.xlu0 %v931
    %v989 = vpop.xlane.xlu0 %988
    %990 = vadd.xlane.f32.xlu0 %v934
    %v991 = vpop.xlane.xlu0 %990
    %992 = vadd.xlane.f32.xlu0 %v939
    %v993 = vpop.xlane.xlu0 %992
    %v994 = vmul.f32 %v945, 0.020833334
    %v995 = vmul.f32 %v947, 0.020833334
    %v996 = vmul.f32 %v949, 0.020833334
    %v997 = vmul.f32 %v951, 0.020833334
    %v998 = vmul.f32 %v953, 0.020833334
    %v999 = vmul.f32 %v955, 0.020833334
    %v1000 = vmul.f32 %v957, 0.020833334
    %v1001 = vmul.f32 %v959, 0.020833334
    %v1002 = vmul.f32 %v961, 0.020833334
    %v1003 = vmul.f32 %v963, 0.020833334
    %v1004 = vmul.f32 %v965, 0.020833334
    %v1005 = vmul.f32 %v967, 0.020833334
    %v1006 = vmul.f32 %v969, 0.020833334
    %v1007 = vmul.f32 %v971, 0.020833334
    %v1008 = vmul.f32 %v973, 0.020833334
    %v1009 = vmul.f32 %v975, 0.020833334
    %v1010 = vmul.f32 %v977, 0.020833334
    %v1011 = vmul.f32 %v979, 0.020833334
    %v1012 = vmul.f32 %v981, 0.020833334
    %v1013 = vmul.f32 %v983, 0.020833334
    %v1014 = vmul.f32 %v985, 0.020833334
    %v1015 = vmul.f32 %v987, 0.020833334
    %v1016 = vmul.f32 %v989, 0.020833334
    %v1017 = vmul.f32 %v991, 0.020833334
    %v1018 = vmul.f32 %v993, 0.020833334
    %v1019 = vmul.f32 %v843, %v843
    %v1020 = vmul.f32 %v846, %v846
    %v1021 = vmul.f32 %v851, %v851
    %v1022 = vmul.f32 %v854, %v854
    %v1023 = vmul.f32 %v859, %v859
    %v1024 = vmul.f32 %v862, %v862
    %v1025 = vmul.f32 %v867, %v867
    %v1026 = vmul.f32 %v870, %v870
    %v1027 = vmul.f32 %v875, %v875
    %v1028 = vmul.f32 %v878, %v878
    %v1029 = vmul.f32 %v883, %v883
    %v1030 = vmul.f32 %v886, %v886
    %v1031 = vmul.f32 %v891, %v891
    %v1032 = vmul.f32 %v894, %v894
    %v1033 = vmul.f32 %v899, %v899
    %v1034 = vmul.f32 %v902, %v902
    %v1035 = vmul.f32 %v907, %v907
    %v1036 = vmul.f32 %v910, %v910
    %v1037 = vmul.f32 %v915, %v915
    %v1038 = vmul.f32 %v918, %v918
    %v1039 = vmul.f32 %v923, %v923
    %v1040 = vmul.f32 %v926, %v926
    %v1041 = vmul.f32 %v931, %v931
    %v1042 = vmul.f32 %v934, %v934
    %v1043 = vmul.f32 %v939, %v939
    %1044 = vadd.xlane.f32.xlu0 %v1019
    %v1045 = vpop.xlane.xlu0 %1044
    %1046 = vadd.xlane.f32.xlu0 %v1020
    %v1047 = vpop.xlane.xlu0 %1046
    %1048 = vadd.xlane.f32.xlu0 %v1021
    %v1049 = vpop.xlane.xlu0 %1048
    %1050 = vadd.xlane.f32.xlu0 %v1022
    %v1051 = vpop.xlane.xlu0 %1050
    %1052 = vadd.xlane.f32.xlu0 %v1023
    %v1053 = vpop.xlane.xlu0 %1052
    %1054 = vadd.xlane.f32.xlu0 %v1024
    %v1055 = vpop.xlane.xlu0 %1054
    %1056 = vadd.xlane.f32.xlu0 %v1025
    %v1057 = vpop.xlane.xlu0 %1056
    %1058 = vadd.xlane.f32.xlu0 %v1026
    %v1059 = vpop.xlane.xlu0 %1058
    %1060 = vadd.xlane.f32.xlu0 %v1027
    %v1061 = vpop.xlane.xlu0 %1060
    %1062 = vadd.xlane.f32.xlu0 %v1028
    %v1063 = vpop.xlane.xlu0 %1062
    %1064 = vadd.xlane.f32.xlu0 %v1029
    %v1065 = vpop.xlane.xlu0 %1064
    %1066 = vadd.xlane.f32.xlu0 %v1030
    %v1067 = vpop.xlane.xlu0 %1066
    %1068 = vadd.xlane.f32.xlu0 %v1031
    %v1069 = vpop.xlane.xlu0 %1068
    %1070 = vadd.xlane.f32.xlu0 %v1032
    %v1071 = vpop.xlane.xlu0 %1070
    %1072 = vadd.xlane.f32.xlu0 %v1033
    %v1073 = vpop.xlane.xlu0 %1072
    %1074 = vadd.xlane.f32.xlu0 %v1034
    %v1075 = vpop.xlane.xlu0 %1074
    %1076 = vadd.xlane.f32.xlu0 %v1035
    %v1077 = vpop.xlane.xlu0 %1076
    %1078 = vadd.xlane.f32.xlu0 %v1036
    %v1079 = vpop.xlane.xlu0 %1078
    %1080 = vadd.xlane.f32.xlu0 %v1037
    %v1081 = vpop.xlane.xlu0 %1080
    %1082 = vadd.xlane.f32.xlu0 %v1038
    %v1083 = vpop.xlane.xlu0 %1082
    %1084 = vadd.xlane.f32.xlu0 %v1039
    %v1085 = vpop.xlane.xlu0 %1084
    %1086 = vadd.xlane.f32.xlu0 %v1040
    %v1087 = vpop.xlane.xlu0 %1086
    %1088 = vadd.xlane.f32.xlu0 %v1041
    %v1089 = vpop.xlane.xlu0 %1088
    %1090 = vadd.xlane.f32.xlu0 %v1042
    %v1091 = vpop.xlane.xlu0 %1090
    %1092 = vadd.xlane.f32.xlu0 %v1043
    %v1093 = vpop.xlane.xlu0 %1092
    %v1094 = vmul.f32 %v1045, 0.020833334
    %v1095 = vmul.f32 %v1047, 0.020833334
    %v1096 = vmul.f32 %v1049, 0.020833334
    %v1097 = vmul.f32 %v1051, 0.020833334
    %v1098 = vmul.f32 %v1053, 0.020833334
    %v1099 = vmul.f32 %v1055, 0.020833334
    %v1100 = vmul.f32 %v1057, 0.020833334
    %v1101 = vmul.f32 %v1059, 0.020833334
    %v1102 = vmul.f32 %v1061, 0.020833334
    %v1103 = vmul.f32 %v1063, 0.020833334
    %v1104 = vmul.f32 %v1065, 0.020833334
    %v1105 = vmul.f32 %v1067, 0.020833334
    %v1106 = vmul.f32 %v1069, 0.020833334
    %v1107 = vmul.f32 %v1071, 0.020833334
    %v1108 = vmul.f32 %v1073, 0.020833334
    %v1109 = vmul.f32 %v1075, 0.020833334
    %v1110 = vmul.f32 %v1077, 0.020833334
    %v1111 = vmul.f32 %v1079, 0.020833334
    %v1112 = vmul.f32 %v1081, 0.020833334
    %v1113 = vmul.f32 %v1083, 0.020833334
    %v1114 = vmul.f32 %v1085, 0.020833334
    %v1115 = vmul.f32 %v1087, 0.020833334
    %v1116 = vmul.f32 %v1089, 0.020833334
    %v1117 = vmul.f32 %v1091, 0.020833334
    %v1118 = vmul.f32 %v1093, 0.020833334
    %v1119 = vmul.f32 %v994, %v994
    %v1120 = vmul.f32 %v995, %v995
    %v1121 = vmul.f32 %v996, %v996
    %v1122 = vmul.f32 %v997, %v997
    %v1123 = vmul.f32 %v998, %v998
    %v1124 = vmul.f32 %v999, %v999
    %v1125 = vmul.f32 %v1000, %v1000
    %v1126 = vmul.f32 %v1001, %v1001
    %v1127 = vmul.f32 %v1002, %v1002
    %v1128 = vmul.f32 %v1003, %v1003
    %v1129 = vmul.f32 %v1004, %v1004
    %v1130 = vmul.f32 %v1005, %v1005
    %v1131 = vmul.f32 %v1006, %v1006
    %v1132 = vmul.f32 %v1007, %v1007
    %v1133 = vmul.f32 %v1008, %v1008
    %v1134 = vmul.f32 %v1009, %v1009
    %v1135 = vmul.f32 %v1010, %v1010
    %v1136 = vmul.f32 %v1011, %v1011
    %v1137 = vmul.f32 %v1012, %v1012
    %v1138 = vmul.f32 %v1013, %v1013
    %v1139 = vmul.f32 %v1014, %v1014
    %v1140 = vmul.f32 %v1015, %v1015
    %v1141 = vmul.f32 %v1016, %v1016
    %v1142 = vmul.f32 %v1017, %v1017
    %v1143 = vmul.f32 %v1018, %v1018
    %v1144 = vsub.f32 %v1094, %v1119
    %v1145 = vsub.f32 %v1095, %v1120
    %v1146 = vsub.f32 %v1096, %v1121
    %v1147 = vsub.f32 %v1097, %v1122
    %v1148 = vsub.f32 %v1098, %v1123
    %v1149 = vsub.f32 %v1099, %v1124
    %v1150 = vsub.f32 %v1100, %v1125
    %v1151 = vsub.f32 %v1101, %v1126
    %v1152 = vsub.f32 %v1102, %v1127
    %v1153 = vsub.f32 %v1103, %v1128
    %v1154 = vsub.f32 %v1104, %v1129
    %v1155 = vsub.f32 %v1105, %v1130
    %v1156 = vsub.f32 %v1106, %v1131
    %v1157 = vsub.f32 %v1107, %v1132
    %v1158 = vsub.f32 %v1108, %v1133
    %v1159 = vsub.f32 %v1109, %v1134
    %v1160 = vsub.f32 %v1110, %v1135
    %v1161 = vsub.f32 %v1111, %v1136
    %v1162 = vsub.f32 %v1112, %v1137
    %v1163 = vsub.f32 %v1113, %v1138
    %v1164 = vsub.f32 %v1114, %v1139
    %v1165 = vsub.f32 %v1115, %v1140
    %v1166 = vsub.f32 %v1116, %v1141
    %v1167 = vsub.f32 %v1117, %v1142
    %v1168 = vsub.f32 %v1118, %v1143
    %v1169 = vadd.f32 %v1144, 1e-05
    %v1170 = vadd.f32 %v1145, 1e-05
    %v1171 = vadd.f32 %v1146, 1e-05
    %v1172 = vadd.f32 %v1147, 1e-05
    %v1173 = vadd.f32 %v1148, 1e-05
    %v1174 = vadd.f32 %v1149, 1e-05
    %v1175 = vadd.f32 %v1150, 1e-05
    %v1176 = vadd.f32 %v1151, 1e-05
    %v1177 = vadd.f32 %v1152, 1e-05
    %v1178 = vadd.f32 %v1153, 1e-05
    %v1179 = vadd.f32 %v1154, 1e-05
    %v1180 = vadd.f32 %v1155, 1e-05
    %v1181 = vadd.f32 %v1156, 1e-05
    %v1182 = vadd.f32 %v1157, 1e-05
    %v1183 = vadd.f32 %v1158, 1e-05
    %v1184 = vadd.f32 %v1159, 1e-05
    %v1185 = vadd.f32 %v1160, 1e-05
    %v1186 = vadd.f32 %v1161, 1e-05
    %v1187 = vadd.f32 %v1162, 1e-05
    %v1188 = vadd.f32 %v1163, 1e-05
    %v1189 = vadd.f32 %v1164, 1e-05
    %v1190 = vadd.f32 %v1165, 1e-05
    %v1191 = vadd.f32 %v1166, 1e-05
    %v1192 = vadd.f32 %v1167, 1e-05
    %v1193 = vadd.f32 %v1168, 1e-05
    %v1194 = vrsqrt.pop %v1169
    %v1195 = vrsqrt.pop %v1170
    %v1196 = vrsqrt.pop %v1171
    %v1197 = vrsqrt.pop %v1172
    %v1198 = vrsqrt.pop %v1173
    %v1199 = vrsqrt.pop %v1174
    %v1200 = vrsqrt.pop %v1175
    %v1201 = vrsqrt.pop %v1176
    %v1202 = vrsqrt.pop %v1177
    %v1203 = vrsqrt.pop %v1178
    %v1204 = vrsqrt.pop %v1179
    %v1205 = vrsqrt.pop %v1180
    %v1206 = vrsqrt.pop %v1181
    %v1207 = vrsqrt.pop %v1182
    %v1208 = vrsqrt.pop %v1183
    %v1209 = vrsqrt.pop %v1184
    %v1210 = vrsqrt.pop %v1185
    %v1211 = vrsqrt.pop %v1186
    %v1212 = vrsqrt.pop %v1187
    %v1213 = vrsqrt.pop %v1188
    %v1214 = vrsqrt.pop %v1189
    %v1215 = vrsqrt.pop %v1190
    %v1216 = vrsqrt.pop %v1191
    %v1217 = vrsqrt.pop %v1192
    %v1218 = vrsqrt.pop %v1193
    %v1219 = vsub.f32 %v843, %v994
    %v1220 = vsub.f32 %v846, %v995
    %v1221 = vsub.f32 %v851, %v996
    %v1222 = vsub.f32 %v854, %v997
    %v1223 = vsub.f32 %v859, %v998
    %v1224 = vsub.f32 %v862, %v999
    %v1225 = vsub.f32 %v867, %v1000
    %v1226 = vsub.f32 %v870, %v1001
    %v1227 = vsub.f32 %v875, %v1002
    %v1228 = vsub.f32 %v878, %v1003
    %v1229 = vsub.f32 %v883, %v1004
    %v1230 = vsub.f32 %v886, %v1005
    %v1231 = vsub.f32 %v891, %v1006
    %v1232 = vsub.f32 %v894, %v1007
    %v1233 = vsub.f32 %v899, %v1008
    %v1234 = vsub.f32 %v902, %v1009
    %v1235 = vsub.f32 %v907, %v1010
    %v1236 = vsub.f32 %v910, %v1011
    %v1237 = vsub.f32 %v915, %v1012
    %v1238 = vsub.f32 %v918, %v1013
    %v1239 = vsub.f32 %v923, %v1014
    %v1240 = vsub.f32 %v926, %v1015
    %v1241 = vsub.f32 %v931, %v1016
    %v1242 = vsub.f32 %v934, %v1017
    %v1243 = vsub.f32 %v939, %v1018
    %v1244 = vmul.f32 %v1219, %v1194
    %v1245 = vmul.f32 %v1220, %v1195
    %v1246 = vmul.f32 %v1221, %v1196
    %v1247 = vmul.f32 %v1222, %v1197
    %v1248 = vmul.f32 %v1223, %v1198
    %v1249 = vmul.f32 %v1224, %v1199
    %v1250 = vmul.f32 %v1225, %v1200
    %v1251 = vmul.f32 %v1226, %v1201
    %v1252 = vmul.f32 %v1227, %v1202
    %v1253 = vmul.f32 %v1228, %v1203
    %v1254 = vmul.f32 %v1229, %v1204
    %v1255 = vmul.f32 %v1230, %v1205
    %v1256 = vmul.f32 %v1231, %v1206
    %v1257 = vmul.f32 %v1232, %v1207
    %v1258 = vmul.f32 %v1233, %v1208
    %v1259 = vmul.f32 %v1234, %v1209
    %v1260 = vmul.f32 %v1235, %v1210
    %v1261 = vmul.f32 %v1236, %v1211
    %v1262 = vmul.f32 %v1237, %v1212
    %v1263 = vmul.f32 %v1238, %v1213
    %v1264 = vmul.f32 %v1239, %v1214
    %v1265 = vmul.f32 %v1240, %v1215
    %v1266 = vmul.f32 %v1241, %v1216
    %v1267 = vmul.f32 %v1242, %v1217
    %v1268 = vmul.f32 %v1243, %v1218
    %v1269 = vlaneseq
    %v1270 = vshrl.u32 %v1269, 7
    %v1271 = vsub.s32 1, %v1270
    %v1272 = vrot.slane %v755, %v1271
    %v1273 = vmul.f32 %v1244, %v1272
    %v1274 = vmul.f32 %v1245, %v1272
    %v1275 = vmul.f32 %v1246, %v1272
    %v1276 = vmul.f32 %v1247, %v1272
    %v1277 = vmul.f32 %v1248, %v1272
    %v1278 = vmul.f32 %v1249, %v1272
    %v1279 = vmul.f32 %v1250, %v1272
    %v1280 = vmul.f32 %v1251, %v1272
    %v1281 = vmul.f32 %v1252, %v1272
    %v1282 = vmul.f32 %v1253, %v1272
    %v1283 = vmul.f32 %v1254, %v1272
    %v1284 = vmul.f32 %v1255, %v1272
    %v1285 = vmul.f32 %v1256, %v1272
    %v1286 = vmul.f32 %v1257, %v1272
    %v1287 = vmul.f32 %v1258, %v1272
    %v1288 = vmul.f32 %v1259, %v1272
    %v1289 = vmul.f32 %v1260, %v1272
    %v1290 = vmul.f32 %v1261, %v1272
    %v1291 = vmul.f32 %v1262, %v1272
    %v1292 = vmul.f32 %v1263, %v1272
    %v1293 = vmul.f32 %v1264, %v1272
    %v1294 = vmul.f32 %v1265, %v1272
    %v1295 = vmul.f32 %v1266, %v1272
    %v1296 = vmul.f32 %v1267, %v1272
    %v1297 = vmul.f32 %v1268, %v1272
    %v1298 = vlaneseq
    %v1299 = vshrl.u32 %v1298, 7
    %v1300 = vsub.s32 2, %v1299
    %v1301 = vrot.slane %v755, %v1300
    %v1302 = vadd.f32 %v1273, %v1301
    %v1303 = vadd.f32 %v1274, %v1301
    %v1304 = vadd.f32 %v1275, %v1301
    %v1305 = vadd.f32 %v1276, %v1301
    %v1306 = vadd.f32 %v1277, %v1301
    %v1307 = vadd.f32 %v1278, %v1301
    %v1308 = vadd.f32 %v1279, %v1301
    %v1309 = vadd.f32 %v1280, %v1301
    %v1310 = vadd.f32 %v1281, %v1301
    %v1311 = vadd.f32 %v1282, %v1301
    %v1312 = vadd.f32 %v1283, %v1301
    %v1313 = vadd.f32 %v1284, %v1301
    %v1314 = vadd.f32 %v1285, %v1301
    %v1315 = vadd.f32 %v1286, %v1301
    %v1316 = vadd.f32 %v1287, %v1301
    %v1317 = vadd.f32 %v1288, %v1301
    %v1318 = vadd.f32 %v1289, %v1301
    %v1319 = vadd.f32 %v1290, %v1301
    %v1320 = vadd.f32 %v1291, %v1301
    %v1321 = vadd.f32 %v1292, %v1301
    %v1322 = vadd.f32 %v1293, %v1301
    %v1323 = vadd.f32 %v1294, %v1301
    %v1324 = vadd.f32 %v1295, %v1301
    %v1325 = vadd.f32 %v1296, %v1301
    %v1326 = vadd.f32 %v1297, %v1301
    %v1327 = vadd.f32 %v75, %v1302
    %v1328 = vadd.f32 %v76, %v1303
    %v1329 = vadd.f32 %v77, %v1304
    %v1330 = vadd.f32 %v78, %v1305
    %v1331 = vadd.f32 %v79, %v1306
    %v1332 = vadd.f32 %v80, %v1307
    %v1333 = vadd.f32 %v81, %v1308
    %v1334 = vadd.f32 %v82, %v1309
    %v1335 = vadd.f32 %v83, %v1310
    %v1336 = vadd.f32 %v84, %v1311
    %v1337 = vadd.f32 %v85, %v1312
    %v1338 = vadd.f32 %v86, %v1313
    %v1339 = vadd.f32 %v87, %v1314
    %v1340 = vadd.f32 %v88, %v1315
    %v1341 = vadd.f32 %v89, %v1316
    %v1342 = vadd.f32 %v90, %v1317
    %v1343 = vadd.f32 %v91, %v1318
    %v1344 = vadd.f32 %v92, %v1319
    %v1345 = vadd.f32 %v93, %v1320
    %v1346 = vadd.f32 %v94, %v1321
    %v1347 = vadd.f32 %v95, %v1322
    %v1348 = vadd.f32 %v96, %v1323
    %v1349 = vadd.f32 %v97, %v1324
    %v1350 = vadd.f32 %v98, %v1325
    %v1351 = vadd.f32 %v99, %v1326
    %1352 = vst [vmem:[#allocation10] sm:$0xff] %v1327
    %1353 = vst [vmem:[#allocation10 + $0x8] sm:$0xff] %v1328
    %1354 = vst [vmem:[#allocation10 + $0x10] sm:$0xff] %v1329
    %1355 = vst [vmem:[#allocation10 + $0x18] sm:$0xff] %v1330
    %1356 = vst [vmem:[#allocation10 + $0x20] sm:$0xff] %v1331
    %1357 = vst [vmem:[#allocation10 + $0x28] sm:$0xff] %v1332
    %1358 = vst [vmem:[#allocation10 + $0x30] sm:$0xff] %v1333
    %1359 = vst [vmem:[#allocation10 + $0x38] sm:$0xff] %v1334
    %1360 = vst [vmem:[#allocation10 + $0x40] sm:$0xff] %v1335
    %1361 = vst [vmem:[#allocation10 + $0x48] sm:$0xff] %v1336
    %1362 = vst [vmem:[#allocation10 + $0x50] sm:$0xff] %v1337
    %1363 = vst [vmem:[#allocation10 + $0x58] sm:$0xff] %v1338
    %1364 = vst [vmem:[#allocation10 + $0x60] sm:$0xff] %v1339
    %1365 = vst [vmem:[#allocation10 + $0x68] sm:$0xff] %v1340
    %1366 = vst [vmem:[#allocation10 + $0x70] sm:$0xff] %v1341
    %1367 = vst [vmem:[#allocation10 + $0x78] sm:$0xff] %v1342
    %1368 = vst [vmem:[#allocation10 + $0x80] sm:$0xff] %v1343
    %1369 = vst [vmem:[#allocation10 + $0x88] sm:$0xff] %v1344
    %1370 = vst [vmem:[#allocation10 + $0x90] sm:$0xff] %v1345
    %1371 = vst [vmem:[#allocation10 + $0x98] sm:$0xff] %v1346
    %1372 = vst [vmem:[#allocation10 + $0xa0] sm:$0xff] %v1347
    %1373 = vst [vmem:[#allocation10 + $0xa8] sm:$0xff] %v1348
    %1374 = vst [vmem:[#allocation10 + $0xb0] sm:$0xff] %v1349
    %1375 = vst [vmem:[#allocation10 + $0xb8] sm:$0xff] %v1350
    %1376 = vst [vmem:[#allocation10 + $0xc0] sm:$0xff] %v1351
    // Predicated region
    $region38: #{tpu_custom_call.1} parent=1 // pred_check
      _
    $region39: #{tpu_custom_call.1} parent=1 // pred_check_branch
      %1378 = sbr.rel (0) target = $region41
    $region40: #{tpu_custom_call.1} parent=1 // pred_region
      %s1380 = ssub.s32 3200, 3200
      %1381 = vsyncadd [#allocation4], %s1380
      %s1382 = sshll.u32 [#allocation10], 4
      %s1383 = int_to_ptr.vmem [resolvable:$true] %s1382
      %1388 = dma.vmem_to_hbm [thread:$0]  %s1383, 3200, %s5, [#allocation4], 128, 128, 8
    $region41: #{tpu_custom_call.1} parent=1 // pred_fallthru
      _
    // Predicated region
    $region42: #{tpu_custom_call.1} parent=1 // pred_check
      _
    $region43: #{tpu_custom_call.1} parent=1 // pred_check_branch
      %1390 = sbr.rel (0) target = $region45
    $region44: #{tpu_custom_call.1} parent=1 // pred_region
      %1391 = dma.done [#allocation4], 3200
    $region45: #{tpu_custom_call.1} parent=1 // pred_fallthru
      _
    %1392 = vsyncpa [#allocation3], 1
    %1393 = vsyncpa [#allocation6], 1
    %1394 = vsyncpa [#allocation9], 1
    %1395 = vsyncpa [#allocation4], 1

</llo_original>
